<compile_context>
chip_gen: v7x
topology: tpu7x:2x2x1
jax: 0.10.0
libtpu: 0.0.40
codegen_flags: <defaults>
</compile_context>

<pallas_src>
import functools

import numpy as np
import jax
import jax.numpy as jnp
from jax.experimental import pallas as pl
from jax.experimental.pallas import tpu as pltpu

# ---- static network geometry (ViewEmbedder2) --------------------------------
H0, W0, C0 = 20, 20, 3
LAYERS = [            # (Cin, Cout, H_in, W_in) for conv1..conv4 (3x3, valid)
    (3, 8, 20, 20),   # -> (18, 18)
    (8, 8, 18, 18),   # -> (16, 16)
    (8, 16, 16, 16),  # -> (14, 14)
    (16, 8, 14, 14),  # -> (12, 12)
]
FC1_IN = 8 * 12 * 12
FC1_OUT = 128


def _round_up(x, m):
    return ((x + m - 1) // m) * m


# ------------------------------ fused kernel ---------------------------------
def _fused_forward_kernel(x_ref,
                          w1_ref, b1_ref, w2_ref, b2_ref,
                          w3_ref, b3_ref, w4_ref, b4_ref,
                          wf1_ref, bf1_ref, wf2_ref, bf2_ref,
                          o_ref,
                          a1_ref, a2_ref, a3_ref, a4_ref):
    """One image per grid step; weights + activations stay in VMEM."""

    def row_conv(load_rows, w_ref, b_ref, out_ref, relu):
        # out = sum_i rows(i) @ w[i]  (+ pre-tiled bias row, optional ReLU)
        acc = jnp.dot(load_rows(0), w_ref[0], preferred_element_type=jnp.float32)
        acc += jnp.dot(load_rows(1), w_ref[1], preferred_element_type=jnp.float32)
        acc += jnp.dot(load_rows(2), w_ref[2], preferred_element_type=jnp.float32)
        acc = acc + b_ref[...]
        if relu:
            acc = jnp.maximum(acc, 0.0)
        out_ref[...] = acc

    # conv1 (no activation): (20, 60) -> (18, 144)
    row_conv(lambda i: x_ref[0, i:i + 18, :], w1_ref, b1_ref, a1_ref, relu=False)
    # relu(conv2): (18, 144) -> (16, 128)
    row_conv(lambda i: a1_ref[i:i + 16, :], w2_ref, b2_ref, a2_ref, relu=True)
    # relu(conv3): (16, 128) -> (14, 224)
    row_conv(lambda i: a2_ref[i:i + 14, :], w3_ref, b3_ref, a3_ref, relu=True)
    # relu(conv4): (14, 224) -> (12, 96)
    row_conv(lambda i: a3_ref[i:i + 12, :], w4_ref, b4_ref, a4_ref, relu=True)

    # relu(fcn1): contract the (12, 96) activation against the permuted,
    # row-grouped fcn1 weights (12, 96, 128) as 12 accumulating (1,96)@(96,128).
    h = jnp.dot(a4_ref[0:1, :], wf1_ref[0], preferred_element_type=jnp.float32)
    for r in range(1, 12):
        h += jnp.dot(a4_ref[r:r + 1, :], wf1_ref[r],
                     preferred_element_type=jnp.float32)
    h = jnp.maximum(h + bf1_ref[...], 0.0)                      # (1, 128)

    # fcn2 (no activation): (1, 128) @ (128, OUT_PAD) -> lane-dense output slab
    y = jnp.dot(h, wf2_ref[...], preferred_element_type=jnp.float32) + bf2_ref[...]
    o_ref[0] = y


# ------------------------------ forward wrapper ------------------------------
@functools.partial(jax.jit, static_argnames=("output_dim",))
def view_embedder2_forward(packed, x, *, output_dim):
    x = x.reshape(-1, C0, H0, W0).astype(jnp.float32)
    n = x.shape[0]
    # One tiny layout fixup on the 4.8 KB input: NCHW -> (N, H, W*C) rows.
    x_rows = jnp.transpose(x, (0, 2, 3, 1)).reshape(n, H0, W0 * C0)

    out_pad = packed["wf2"].shape[1]

    def resident(arr):  # full-array block, same block every grid step
        nd = arr.ndim
        return pl.BlockSpec(tuple(arr.shape), lambda i, _nd=nd: (0,) * _nd)

    weight_args = (packed["w1"], packed["b1"], packed["w2"], packed["b2"],
                   packed["w3"], packed["b3"], packed["w4"], packed["b4"],
                   packed["wf1"], packed["bf1"], packed["wf2"], packed["bf2"])

    out = pl.pallas_call(
        _fused_forward_kernel,
        out_shape=jax.ShapeDtypeStruct((n, 1, out_pad), jnp.float32),
        grid=(n,),
        in_specs=[pl.BlockSpec((1, H0, W0 * C0), lambda i: (i, 0, 0))]
                 + [resident(w) for w in weight_args],
        out_specs=pl.BlockSpec((1, 1, out_pad), lambda i: (i, 0, 0)),
        scratch_shapes=[
            pltpu.VMEM((18, 144), jnp.float32),   # conv1 out
            pltpu.VMEM((16, 128), jnp.float32),   # conv2 out
            pltpu.VMEM((14, 224), jnp.float32),   # conv3 out
            pltpu.VMEM((12, 96), jnp.float32),    # conv4 out
        ],
        compiler_params=pltpu.CompilerParams(
            dimension_semantics=("parallel",)),
    )(x_rows, *weight_args)

    return out[:, 0, :output_dim]


# ------------------------------ params & packing -----------------------------
def init_params(key, output_dim):
    """Raw parameters in PyTorch layouts (Conv2d OIHW, Linear (out, in))."""
    def uniform(k, shape, fan_in):
        bound = 1.0 / np.sqrt(float(fan_in))
        return jax.random.uniform(k, shape, jnp.float32, -bound, bound)

    ks = jax.random.split(key, 12)
    p = {}
    p["conv1_w"] = uniform(ks[0], (8, 3, 3, 3), 3 * 9)
    p["conv1_b"] = uniform(ks[1], (8,), 3 * 9)
    p["conv2_w"] = uniform(ks[2], (8, 8, 3, 3), 8 * 9)
    p["conv2_b"] = uniform(ks[3], (8,), 8 * 9)
    p["conv3_w"] = uniform(ks[4], (16, 8, 3, 3), 8 * 9)
    p["conv3_b"] = uniform(ks[5], (16,), 8 * 9)
    p["conv4_w"] = uniform(ks[6], (8, 16, 3, 3), 16 * 9)
    p["conv4_b"] = uniform(ks[7], (8,), 16 * 9)
    p["fcn1_w"] = uniform(ks[8], (FC1_OUT, FC1_IN), FC1_IN)
    p["fcn1_b"] = uniform(ks[9], (FC1_OUT,), FC1_IN)
    p["fcn2_w"] = uniform(ks[10], (output_dim, FC1_OUT), FC1_OUT)
    p["fcn2_b"] = uniform(ks[11], (output_dim,), FC1_OUT)
    return p


def _pack_row_conv(w, b, w_in):
    """Build 3 row-tap matrices (3, W_in*Cin, Wo*Cout) + tiled bias row."""
    w = np.asarray(w, np.float32)                 # (Cout, Cin, 3, 3)
    b = np.asarray(b, np.float32)
    cout, cin, kh, kw = w.shape
    wo = w_in - kw + 1
    taps = np.zeros((kh, w_in * cin, wo * cout), np.float32)
    for i in range(kh):
        for j in range(kw):
            blk = w[:, :, i, j].T                 # (Cin, Cout)
            for o in range(wo):
                taps[i, (o + j) * cin:(o + j + 1) * cin,
                     o * cout:(o + 1) * cout] = blk
    bias_row = np.tile(b, wo)[None, :]            # (1, Wo*Cout)
    return jnp.asarray(taps), jnp.asarray(bias_row)


def pack_params(params, output_dim):
    """One-time host-side packing (row-conv taps, fcn1 NCHW permute, fcn2 pad)."""
    packed = {}
    names = ("conv1", "conv2", "conv3", "conv4")
    for li, (name, (_, _, _, w_in)) in enumerate(zip(names, LAYERS), start=1):
        taps, brow = _pack_row_conv(params[f"{name}_w"], params[f"{name}_b"], w_in)
        packed[f"w{li}"] = taps
        packed[f"b{li}"] = brow

    # fcn1: fold PyTorch's NCHW flatten of the (8,12,12) conv4 output into the
    # weights; group by image row h -> (12, 12*8, 128) matching (h, w*8+c).
    wf1 = np.asarray(params["fcn1_w"], np.float32)                 # (128, 1152)
    wf1 = wf1.reshape(FC1_OUT, 8, 12, 12).transpose(2, 3, 1, 0)     # (h, w, c, o)
    packed["wf1"] = jnp.asarray(np.ascontiguousarray(wf1.reshape(12, 12 * 8, FC1_OUT)))
    packed["bf1"] = jnp.asarray(np.asarray(params["fcn1_b"], np.float32)[None, :])

    out_pad = _round_up(max(output_dim, 1), 128)
    wf2 = np.zeros((FC1_OUT, out_pad), np.float32)
    wf2[:, :output_dim] = np.asarray(params["fcn2_w"], np.float32).T
    bf2 = np.zeros((1, out_pad), np.float32)
    bf2[0, :output_dim] = np.asarray(params["fcn2_b"], np.float32)
    packed["wf2"] = jnp.asarray(wf2)
    packed["bf2"] = jnp.asarray(bf2)
    return packed


# ------------------------------ pure-JAX reference ---------------------------
def _reference_forward(params, x, output_dim):
    hi = jax.lax.Precision.HIGHEST
    x = x.reshape(-1, C0, H0, W0)

    def conv(v, w, b):
        y = jax.lax.conv_general_dilated(
            v, w, window_strides=(1, 1), padding="VALID",
            dimension_numbers=("NCHW", "OIHW", "NCHW"), precision=hi)
        return y + b[None, :, None, None]

    y = conv(x, params["conv1_w"], params["conv1_b"])
    y = jax.nn.relu(conv(y, params["conv2_w"], params["conv2_b"]))
    y = jax.nn.relu(conv(y, params["conv3_w"], params["conv3_b"]))
    y = jax.nn.relu(conv(y, params["conv4_w"], params["conv4_b"]))
    y = y.reshape(-1, FC1_IN)
    y = jax.nn.relu(jnp.dot(y, params["fcn1_w"].T, precision=hi) + params["fcn1_b"])
    y = jnp.dot(y, params["fcn2_w"].T, precision=hi) + params["fcn2_b"]
    return y.reshape(-1, output_dim)


if __name__ == "__main__":
    output_dim = 32
    batch = 2

    key = jax.random.PRNGKey(0)
    pkey, xkey = jax.random.split(key)
    params = init_params(pkey, output_dim)
    packed = pack_params(params, output_dim)            # once, outside jit
    x = jax.random.normal(xkey, (batch, 3, 20, 20), jnp.float32)

    out = view_embedder2_forward(packed, x, output_dim=output_dim)
    out = jax.block_until_ready(out)

    assert out.shape == (batch, output_dim), out.shape
    assert out.dtype == jnp.float32

    ref = _reference_forward(params, x, output_dim)
    np.testing.assert_allclose(np.asarray(out), np.asarray(ref), rtol=1e-2, atol=1e-2)
    print("KERNEL_OK")
</pallas_src>

<mosaic_0001>
module attributes {stable_mosaic.version = 11 : i64} {
  func.func @_fused_forward_kernel(%arg0: i32, %arg1: memref<1x20x60xf32, #tpu.memory_space<vmem>>, %arg2: memref<3x60x144xf32, #tpu.memory_space<vmem>>, %arg3: memref<1x144xf32, #tpu.memory_space<vmem>>, %arg4: memref<3x144x128xf32, #tpu.memory_space<vmem>>, %arg5: memref<1x128xf32, #tpu.memory_space<vmem>>, %arg6: memref<3x128x224xf32, #tpu.memory_space<vmem>>, %arg7: memref<1x224xf32, #tpu.memory_space<vmem>>, %arg8: memref<3x224x96xf32, #tpu.memory_space<vmem>>, %arg9: memref<1x96xf32, #tpu.memory_space<vmem>>, %arg10: memref<12x96x128xf32, #tpu.memory_space<vmem>>, %arg11: memref<1x128xf32, #tpu.memory_space<vmem>>, %arg12: memref<128x128xf32, #tpu.memory_space<vmem>>, %arg13: memref<1x128xf32, #tpu.memory_space<vmem>>, %arg14: memref<1x1x128xf32, #tpu.memory_space<vmem>>, %arg15: memref<18x144xf32, #tpu.memory_space<vmem>>, %arg16: memref<16x128xf32, #tpu.memory_space<vmem>>, %arg17: memref<14x224xf32, #tpu.memory_space<vmem>>, %arg18: memref<12x96xf32, #tpu.memory_space<vmem>>) attributes {dimension_semantics = [#tpu.dimension_semantics<parallel>], iteration_bounds = array<i64: 2>, scalar_prefetch = 0 : i64, scratch_operands = 4 : i64, tpu.core_type = #tpu.core_type<tc>, window_params = [{transform_indices = @transform_0, window_bounds = array<i64: 1, 20, 60>}, {pipeline_mode = #tpu.pipeline_mode<synchronous>, transform_indices = @transform_1, window_bounds = array<i64: 3, 60, 144>}, {pipeline_mode = #tpu.pipeline_mode<synchronous>, transform_indices = @transform_2, window_bounds = array<i64: 1, 144>}, {pipeline_mode = #tpu.pipeline_mode<synchronous>, transform_indices = @transform_3, window_bounds = array<i64: 3, 144, 128>}, {pipeline_mode = #tpu.pipeline_mode<synchronous>, transform_indices = @transform_4, window_bounds = array<i64: 1, 128>}, {pipeline_mode = #tpu.pipeline_mode<synchronous>, transform_indices = @transform_5, window_bounds = array<i64: 3, 128, 224>}, {pipeline_mode = #tpu.pipeline_mode<synchronous>, transform_indices = @transform_6, window_bounds = array<i64: 1, 224>}, {pipeline_mode = #tpu.pipeline_mode<synchronous>, transform_indices = @transform_7, window_bounds = array<i64: 3, 224, 96>}, {pipeline_mode = #tpu.pipeline_mode<synchronous>, transform_indices = @transform_8, window_bounds = array<i64: 1, 96>}, {pipeline_mode = #tpu.pipeline_mode<synchronous>, transform_indices = @transform_9, window_bounds = array<i64: 12, 96, 128>}, {pipeline_mode = #tpu.pipeline_mode<synchronous>, transform_indices = @transform_10, window_bounds = array<i64: 1, 128>}, {pipeline_mode = #tpu.pipeline_mode<synchronous>, transform_indices = @transform_11, window_bounds = array<i64: 128, 128>}, {pipeline_mode = #tpu.pipeline_mode<synchronous>, transform_indices = @transform_12, window_bounds = array<i64: 1, 128>}, {transform_indices = @transform_13, window_bounds = array<i64: 1, 1, 128>}]} {
    %c0 = arith.constant 0 : index
    %c0_0 = arith.constant 0 : index
    %c0_1 = arith.constant 0 : index
    %0 = vector.load %arg1[%c0, %c0_0, %c0_1] : memref<1x20x60xf32, #tpu.memory_space<vmem>>, vector<1x18x60xf32>
    %1 = vector.shape_cast %0 : vector<1x18x60xf32> to vector<18x60xf32>
    %c0_2 = arith.constant 0 : index
    %c0_3 = arith.constant 0 : index
    %c0_4 = arith.constant 0 : index
    %2 = vector.load %arg2[%c0_2, %c0_3, %c0_4] : memref<3x60x144xf32, #tpu.memory_space<vmem>>, vector<1x60x144xf32>
    %3 = vector.shape_cast %2 : vector<1x60x144xf32> to vector<60x144xf32>
    %cst = arith.constant dense<0.000000e+00> : vector<18x144xf32>
    %4 = tpu.matmul %1, %3, %cst {dimension_numbers = #tpu.dot_dimension_numbers<[1], [0], [0], [1], [0, 0, 1, 1], [], []>} : vector<18x60xf32>, vector<60x144xf32>, vector<18x144xf32> -> vector<18x144xf32>
    %c0_5 = arith.constant 0 : index
    %c1 = arith.constant 1 : index
    %c0_6 = arith.constant 0 : index
    %5 = vector.load %arg1[%c0_5, %c1, %c0_6] : memref<1x20x60xf32, #tpu.memory_space<vmem>>, vector<1x18x60xf32>
    %6 = vector.shape_cast %5 : vector<1x18x60xf32> to vector<18x60xf32>
    %c1_7 = arith.constant 1 : index
    %c0_8 = arith.constant 0 : index
    %c0_9 = arith.constant 0 : index
    %7 = vector.load %arg2[%c1_7, %c0_8, %c0_9] : memref<3x60x144xf32, #tpu.memory_space<vmem>>, vector<1x60x144xf32>
    %8 = vector.shape_cast %7 : vector<1x60x144xf32> to vector<60x144xf32>
    %cst_10 = arith.constant dense<0.000000e+00> : vector<18x144xf32>
    %9 = tpu.matmul %6, %8, %cst_10 {dimension_numbers = #tpu.dot_dimension_numbers<[1], [0], [0], [1], [0, 0, 1, 1], [], []>} : vector<18x60xf32>, vector<60x144xf32>, vector<18x144xf32> -> vector<18x144xf32>
    %10 = arith.addf %4, %9 : vector<18x144xf32>
    %c0_11 = arith.constant 0 : index
    %c2 = arith.constant 2 : index
    %c0_12 = arith.constant 0 : index
    %11 = vector.load %arg1[%c0_11, %c2, %c0_12] : memref<1x20x60xf32, #tpu.memory_space<vmem>>, vector<1x18x60xf32>
    %12 = vector.shape_cast %11 : vector<1x18x60xf32> to vector<18x60xf32>
    %c2_13 = arith.constant 2 : index
    %c0_14 = arith.constant 0 : index
    %c0_15 = arith.constant 0 : index
    %13 = vector.load %arg2[%c2_13, %c0_14, %c0_15] : memref<3x60x144xf32, #tpu.memory_space<vmem>>, vector<1x60x144xf32>
    %14 = vector.shape_cast %13 : vector<1x60x144xf32> to vector<60x144xf32>
    %cst_16 = arith.constant dense<0.000000e+00> : vector<18x144xf32>
    %15 = tpu.matmul %12, %14, %cst_16 {dimension_numbers = #tpu.dot_dimension_numbers<[1], [0], [0], [1], [0, 0, 1, 1], [], []>} : vector<18x60xf32>, vector<60x144xf32>, vector<18x144xf32> -> vector<18x144xf32>
    %16 = arith.addf %10, %15 : vector<18x144xf32>
    %c0_17 = arith.constant 0 : index
    %c0_18 = arith.constant 0 : index
    %17 = vector.load %arg3[%c0_17, %c0_18] : memref<1x144xf32, #tpu.memory_space<vmem>>, vector<1x144xf32>
    %18 = vector.broadcast %17 : vector<1x144xf32> to vector<18x144xf32>
    %19 = arith.addf %16, %18 : vector<18x144xf32>
    %c0_19 = arith.constant 0 : index
    %c0_20 = arith.constant 0 : index
    %20 = vector.load %arg15[%c0_19, %c0_20] : memref<18x144xf32, #tpu.memory_space<vmem>>, vector<18x144xf32>
    tpu.vector_store %arg15[%c0_19, %c0_20], %19 {strides = array<i32>} : memref<18x144xf32, #tpu.memory_space<vmem>>, vector<18x144xf32>,
    %c0_21 = arith.constant 0 : index
    %c0_22 = arith.constant 0 : index
    %21 = vector.load %arg15[%c0_21, %c0_22] : memref<18x144xf32, #tpu.memory_space<vmem>>, vector<16x144xf32>
    %c0_23 = arith.constant 0 : index
    %c0_24 = arith.constant 0 : index
    %c0_25 = arith.constant 0 : index
    %22 = vector.load %arg4[%c0_23, %c0_24, %c0_25] : memref<3x144x128xf32, #tpu.memory_space<vmem>>, vector<1x144x128xf32>
    %23 = vector.shape_cast %22 : vector<1x144x128xf32> to vector<144x128xf32>
    %cst_26 = arith.constant dense<0.000000e+00> : vector<16x128xf32>
    %24 = tpu.matmul %21, %23, %cst_26 {dimension_numbers = #tpu.dot_dimension_numbers<[1], [0], [0], [1], [0, 0, 1, 1], [], []>} : vector<16x144xf32>, vector<144x128xf32>, vector<16x128xf32> -> vector<16x128xf32>
    %c1_27 = arith.constant 1 : index
    %c0_28 = arith.constant 0 : index
    %25 = vector.load %arg15[%c1_27, %c0_28] : memref<18x144xf32, #tpu.memory_space<vmem>>, vector<16x144xf32>
    %c1_29 = arith.constant 1 : index
    %c0_30 = arith.constant 0 : index
    %c0_31 = arith.constant 0 : index
    %26 = vector.load %arg4[%c1_29, %c0_30, %c0_31] : memref<3x144x128xf32, #tpu.memory_space<vmem>>, vector<1x144x128xf32>
    %27 = vector.shape_cast %26 : vector<1x144x128xf32> to vector<144x128xf32>
    %cst_32 = arith.constant dense<0.000000e+00> : vector<16x128xf32>
    %28 = tpu.matmul %25, %27, %cst_32 {dimension_numbers = #tpu.dot_dimension_numbers<[1], [0], [0], [1], [0, 0, 1, 1], [], []>} : vector<16x144xf32>, vector<144x128xf32>, vector<16x128xf32> -> vector<16x128xf32>
    %29 = arith.addf %24, %28 : vector<16x128xf32>
    %c2_33 = arith.constant 2 : index
    %c0_34 = arith.constant 0 : index
    %30 = vector.load %arg15[%c2_33, %c0_34] : memref<18x144xf32, #tpu.memory_space<vmem>>, vector<16x144xf32>
    %c2_35 = arith.constant 2 : index
    %c0_36 = arith.constant 0 : index
    %c0_37 = arith.constant 0 : index
    %31 = vector.load %arg4[%c2_35, %c0_36, %c0_37] : memref<3x144x128xf32, #tpu.memory_space<vmem>>, vector<1x144x128xf32>
    %32 = vector.shape_cast %31 : vector<1x144x128xf32> to vector<144x128xf32>
    %cst_38 = arith.constant dense<0.000000e+00> : vector<16x128xf32>
    %33 = tpu.matmul %30, %32, %cst_38 {dimension_numbers = #tpu.dot_dimension_numbers<[1], [0], [0], [1], [0, 0, 1, 1], [], []>} : vector<16x144xf32>, vector<144x128xf32>, vector<16x128xf32> -> vector<16x128xf32>
    %34 = arith.addf %29, %33 : vector<16x128xf32>
    %c0_39 = arith.constant 0 : index
    %c0_40 = arith.constant 0 : index
    %35 = vector.load %arg5[%c0_39, %c0_40] : memref<1x128xf32, #tpu.memory_space<vmem>>, vector<1x128xf32>
    %36 = vector.broadcast %35 : vector<1x128xf32> to vector<16x128xf32>
    %37 = arith.addf %34, %36 : vector<16x128xf32>
    %cst_41 = arith.constant 0.000000e+00 : f32
    %38 = vector.broadcast %cst_41 : f32 to vector<16x128xf32>
    %39 = arith.maximumf %37, %38 : vector<16x128xf32>
    %c0_42 = arith.constant 0 : index
    %c0_43 = arith.constant 0 : index
    %40 = vector.load %arg16[%c0_42, %c0_43] : memref<16x128xf32, #tpu.memory_space<vmem>>, vector<16x128xf32>
    tpu.vector_store %arg16[%c0_42, %c0_43], %39 {strides = array<i32>} : memref<16x128xf32, #tpu.memory_space<vmem>>, vector<16x128xf32>,
    %c0_44 = arith.constant 0 : index
    %c0_45 = arith.constant 0 : index
    %41 = vector.load %arg16[%c0_44, %c0_45] : memref<16x128xf32, #tpu.memory_space<vmem>>, vector<14x128xf32>
    %c0_46 = arith.constant 0 : index
    %c0_47 = arith.constant 0 : index
    %c0_48 = arith.constant 0 : index
    %42 = vector.load %arg6[%c0_46, %c0_47, %c0_48] : memref<3x128x224xf32, #tpu.memory_space<vmem>>, vector<1x128x224xf32>
    %43 = vector.shape_cast %42 : vector<1x128x224xf32> to vector<128x224xf32>
    %cst_49 = arith.constant dense<0.000000e+00> : vector<14x224xf32>
    %44 = tpu.matmul %41, %43, %cst_49 {dimension_numbers = #tpu.dot_dimension_numbers<[1], [0], [0], [1], [0, 0, 1, 1], [], []>} : vector<14x128xf32>, vector<128x224xf32>, vector<14x224xf32> -> vector<14x224xf32>
    %c1_50 = arith.constant 1 : index
    %c0_51 = arith.constant 0 : index
    %45 = vector.load %arg16[%c1_50, %c0_51] : memref<16x128xf32, #tpu.memory_space<vmem>>, vector<14x128xf32>
    %c1_52 = arith.constant 1 : index
    %c0_53 = arith.constant 0 : index
    %c0_54 = arith.constant 0 : index
    %46 = vector.load %arg6[%c1_52, %c0_53, %c0_54] : memref<3x128x224xf32, #tpu.memory_space<vmem>>, vector<1x128x224xf32>
    %47 = vector.shape_cast %46 : vector<1x128x224xf32> to vector<128x224xf32>
    %cst_55 = arith.constant dense<0.000000e+00> : vector<14x224xf32>
    %48 = tpu.matmul %45, %47, %cst_55 {dimension_numbers = #tpu.dot_dimension_numbers<[1], [0], [0], [1], [0, 0, 1, 1], [], []>} : vector<14x128xf32>, vector<128x224xf32>, vector<14x224xf32> -> vector<14x224xf32>
    %49 = arith.addf %44, %48 : vector<14x224xf32>
    %c2_56 = arith.constant 2 : index
    %c0_57 = arith.constant 0 : index
    %50 = vector.load %arg16[%c2_56, %c0_57] : memref<16x128xf32, #tpu.memory_space<vmem>>, vector<14x128xf32>
    %c2_58 = arith.constant 2 : index
    %c0_59 = arith.constant 0 : index
    %c0_60 = arith.constant 0 : index
    %51 = vector.load %arg6[%c2_58, %c0_59, %c0_60] : memref<3x128x224xf32, #tpu.memory_space<vmem>>, vector<1x128x224xf32>
    %52 = vector.shape_cast %51 : vector<1x128x224xf32> to vector<128x224xf32>
    %cst_61 = arith.constant dense<0.000000e+00> : vector<14x224xf32>
    %53 = tpu.matmul %50, %52, %cst_61 {dimension_numbers = #tpu.dot_dimension_numbers<[1], [0], [0], [1], [0, 0, 1, 1], [], []>} : vector<14x128xf32>, vector<128x224xf32>, vector<14x224xf32> -> vector<14x224xf32>
    %54 = arith.addf %49, %53 : vector<14x224xf32>
    %c0_62 = arith.constant 0 : index
    %c0_63 = arith.constant 0 : index
    %55 = vector.load %arg7[%c0_62, %c0_63] : memref<1x224xf32, #tpu.memory_space<vmem>>, vector<1x224xf32>
    %56 = vector.broadcast %55 : vector<1x224xf32> to vector<14x224xf32>
    %57 = arith.addf %54, %56 : vector<14x224xf32>
    %cst_64 = arith.constant 0.000000e+00 : f32
    %58 = vector.broadcast %cst_64 : f32 to vector<14x224xf32>
    %59 = arith.maximumf %57, %58 : vector<14x224xf32>
    %c0_65 = arith.constant 0 : index
    %c0_66 = arith.constant 0 : index
    %60 = vector.load %arg17[%c0_65, %c0_66] : memref<14x224xf32, #tpu.memory_space<vmem>>, vector<14x224xf32>
    tpu.vector_store %arg17[%c0_65, %c0_66], %59 {strides = array<i32>} : memref<14x224xf32, #tpu.memory_space<vmem>>, vector<14x224xf32>,
    %c0_67 = arith.constant 0 : index
    %c0_68 = arith.constant 0 : index
    %61 = vector.load %arg17[%c0_67, %c0_68] : memref<14x224xf32, #tpu.memory_space<vmem>>, vector<12x224xf32>
    %c0_69 = arith.constant 0 : index
    %c0_70 = arith.constant 0 : index
    %c0_71 = arith.constant 0 : index
    %62 = vector.load %arg8[%c0_69, %c0_70, %c0_71] : memref<3x224x96xf32, #tpu.memory_space<vmem>>, vector<1x224x96xf32>
    %63 = vector.shape_cast %62 : vector<1x224x96xf32> to vector<224x96xf32>
    %cst_72 = arith.constant dense<0.000000e+00> : vector<12x96xf32>
    %64 = tpu.matmul %61, %63, %cst_72 {dimension_numbers = #tpu.dot_dimension_numbers<[1], [0], [0], [1], [0, 0, 1, 1], [], []>} : vector<12x224xf32>, vector<224x96xf32>, vector<12x96xf32> -> vector<12x96xf32>
    %c1_73 = arith.constant 1 : index
    %c0_74 = arith.constant 0 : index
    %65 = vector.load %arg17[%c1_73, %c0_74] : memref<14x224xf32, #tpu.memory_space<vmem>>, vector<12x224xf32>
    %c1_75 = arith.constant 1 : index
    %c0_76 = arith.constant 0 : index
    %c0_77 = arith.constant 0 : index
    %66 = vector.load %arg8[%c1_75, %c0_76, %c0_77] : memref<3x224x96xf32, #tpu.memory_space<vmem>>, vector<1x224x96xf32>
    %67 = vector.shape_cast %66 : vector<1x224x96xf32> to vector<224x96xf32>
    %cst_78 = arith.constant dense<0.000000e+00> : vector<12x96xf32>
    %68 = tpu.matmul %65, %67, %cst_78 {dimension_numbers = #tpu.dot_dimension_numbers<[1], [0], [0], [1], [0, 0, 1, 1], [], []>} : vector<12x224xf32>, vector<224x96xf32>, vector<12x96xf32> -> vector<12x96xf32>
    %69 = arith.addf %64, %68 : vector<12x96xf32>
    %c2_79 = arith.constant 2 : index
    %c0_80 = arith.constant 0 : index
    %70 = vector.load %arg17[%c2_79, %c0_80] : memref<14x224xf32, #tpu.memory_space<vmem>>, vector<12x224xf32>
    %c2_81 = arith.constant 2 : index
    %c0_82 = arith.constant 0 : index
    %c0_83 = arith.constant 0 : index
    %71 = vector.load %arg8[%c2_81, %c0_82, %c0_83] : memref<3x224x96xf32, #tpu.memory_space<vmem>>, vector<1x224x96xf32>
    %72 = vector.shape_cast %71 : vector<1x224x96xf32> to vector<224x96xf32>
    %cst_84 = arith.constant dense<0.000000e+00> : vector<12x96xf32>
    %73 = tpu.matmul %70, %72, %cst_84 {dimension_numbers = #tpu.dot_dimension_numbers<[1], [0], [0], [1], [0, 0, 1, 1], [], []>} : vector<12x224xf32>, vector<224x96xf32>, vector<12x96xf32> -> vector<12x96xf32>
    %74 = arith.addf %69, %73 : vector<12x96xf32>
    %c0_85 = arith.constant 0 : index
    %c0_86 = arith.constant 0 : index
    %75 = vector.load %arg9[%c0_85, %c0_86] : memref<1x96xf32, #tpu.memory_space<vmem>>, vector<1x96xf32>
    %76 = vector.broadcast %75 : vector<1x96xf32> to vector<12x96xf32>
    %77 = arith.addf %74, %76 : vector<12x96xf32>
    %cst_87 = arith.constant 0.000000e+00 : f32
    %78 = vector.broadcast %cst_87 : f32 to vector<12x96xf32>
    %79 = arith.maximumf %77, %78 : vector<12x96xf32>
    %c0_88 = arith.constant 0 : index
    %c0_89 = arith.constant 0 : index
    %80 = vector.load %arg18[%c0_88, %c0_89] : memref<12x96xf32, #tpu.memory_space<vmem>>, vector<12x96xf32>
    tpu.vector_store %arg18[%c0_88, %c0_89], %79 {strides = array<i32>} : memref<12x96xf32, #tpu.memory_space<vmem>>, vector<12x96xf32>,
    %c0_90 = arith.constant 0 : index
    %c0_91 = arith.constant 0 : index
    %81 = vector.load %arg18[%c0_90, %c0_91] : memref<12x96xf32, #tpu.memory_space<vmem>>, vector<1x96xf32>
    %c0_92 = arith.constant 0 : index
    %c0_93 = arith.constant 0 : index
    %c0_94 = arith.constant 0 : index
    %82 = vector.load %arg10[%c0_92, %c0_93, %c0_94] : memref<12x96x128xf32, #tpu.memory_space<vmem>>, vector<1x96x128xf32>
    %83 = vector.shape_cast %82 : vector<1x96x128xf32> to vector<96x128xf32>
    %cst_95 = arith.constant dense<0.000000e+00> : vector<1x128xf32>
    %84 = tpu.matmul %81, %83, %cst_95 {dimension_numbers = #tpu.dot_dimension_numbers<[1], [0], [0], [1], [0, 0, 1, 1], [], []>} : vector<1x96xf32>, vector<96x128xf32>, vector<1x128xf32> -> vector<1x128xf32>
    %c1_96 = arith.constant 1 : index
    %c0_97 = arith.constant 0 : index
    %85 = vector.load %arg18[%c1_96, %c0_97] : memref<12x96xf32, #tpu.memory_space<vmem>>, vector<1x96xf32>
    %c1_98 = arith.constant 1 : index
    %c0_99 = arith.constant 0 : index
    %c0_100 = arith.constant 0 : index
    %86 = vector.load %arg10[%c1_98, %c0_99, %c0_100] : memref<12x96x128xf32, #tpu.memory_space<vmem>>, vector<1x96x128xf32>
    %87 = vector.shape_cast %86 : vector<1x96x128xf32> to vector<96x128xf32>
    %cst_101 = arith.constant dense<0.000000e+00> : vector<1x128xf32>
    %88 = tpu.matmul %85, %87, %cst_101 {dimension_numbers = #tpu.dot_dimension_numbers<[1], [0], [0], [1], [0, 0, 1, 1], [], []>} : vector<1x96xf32>, vector<96x128xf32>, vector<1x128xf32> -> vector<1x128xf32>
    %89 = arith.addf %84, %88 : vector<1x128xf32>
    %c2_102 = arith.constant 2 : index
    %c0_103 = arith.constant 0 : index
    %90 = vector.load %arg18[%c2_102, %c0_103] : memref<12x96xf32, #tpu.memory_space<vmem>>, vector<1x96xf32>
    %c2_104 = arith.constant 2 : index
    %c0_105 = arith.constant 0 : index
    %c0_106 = arith.constant 0 : index
    %91 = vector.load %arg10[%c2_104, %c0_105, %c0_106] : memref<12x96x128xf32, #tpu.memory_space<vmem>>, vector<1x96x128xf32>
    %92 = vector.shape_cast %91 : vector<1x96x128xf32> to vector<96x128xf32>
    %cst_107 = arith.constant dense<0.000000e+00> : vector<1x128xf32>
    %93 = tpu.matmul %90, %92, %cst_107 {dimension_numbers = #tpu.dot_dimension_numbers<[1], [0], [0], [1], [0, 0, 1, 1], [], []>} : vector<1x96xf32>, vector<96x128xf32>, vector<1x128xf32> -> vector<1x128xf32>
    %94 = arith.addf %89, %93 : vector<1x128xf32>
    %c3 = arith.constant 3 : index
    %c0_108 = arith.constant 0 : index
    %95 = vector.load %arg18[%c3, %c0_108] : memref<12x96xf32, #tpu.memory_space<vmem>>, vector<1x96xf32>
    %c3_109 = arith.constant 3 : index
    %c0_110 = arith.constant 0 : index
    %c0_111 = arith.constant 0 : index
    %96 = vector.load %arg10[%c3_109, %c0_110, %c0_111] : memref<12x96x128xf32, #tpu.memory_space<vmem>>, vector<1x96x128xf32>
    %97 = vector.shape_cast %96 : vector<1x96x128xf32> to vector<96x128xf32>
    %cst_112 = arith.constant dense<0.000000e+00> : vector<1x128xf32>
    %98 = tpu.matmul %95, %97, %cst_112 {dimension_numbers = #tpu.dot_dimension_numbers<[1], [0], [0], [1], [0, 0, 1, 1], [], []>} : vector<1x96xf32>, vector<96x128xf32>, vector<1x128xf32> -> vector<1x128xf32>
    %99 = arith.addf %94, %98 : vector<1x128xf32>
    %c4 = arith.constant 4 : index
    %c0_113 = arith.constant 0 : index
    %100 = vector.load %arg18[%c4, %c0_113] : memref<12x96xf32, #tpu.memory_space<vmem>>, vector<1x96xf32>
    %c4_114 = arith.constant 4 : index
    %c0_115 = arith.constant 0 : index
    %c0_116 = arith.constant 0 : index
    %101 = vector.load %arg10[%c4_114, %c0_115, %c0_116] : memref<12x96x128xf32, #tpu.memory_space<vmem>>, vector<1x96x128xf32>
    %102 = vector.shape_cast %101 : vector<1x96x128xf32> to vector<96x128xf32>
    %cst_117 = arith.constant dense<0.000000e+00> : vector<1x128xf32>
    %103 = tpu.matmul %100, %102, %cst_117 {dimension_numbers = #tpu.dot_dimension_numbers<[1], [0], [0], [1], [0, 0, 1, 1], [], []>} : vector<1x96xf32>, vector<96x128xf32>, vector<1x128xf32> -> vector<1x128xf32>
    %104 = arith.addf %99, %103 : vector<1x128xf32>
    %c5 = arith.constant 5 : index
    %c0_118 = arith.constant 0 : index
    %105 = vector.load %arg18[%c5, %c0_118] : memref<12x96xf32, #tpu.memory_space<vmem>>, vector<1x96xf32>
    %c5_119 = arith.constant 5 : index
    %c0_120 = arith.constant 0 : index
    %c0_121 = arith.constant 0 : index
    %106 = vector.load %arg10[%c5_119, %c0_120, %c0_121] : memref<12x96x128xf32, #tpu.memory_space<vmem>>, vector<1x96x128xf32>
    %107 = vector.shape_cast %106 : vector<1x96x128xf32> to vector<96x128xf32>
    %cst_122 = arith.constant dense<0.000000e+00> : vector<1x128xf32>
    %108 = tpu.matmul %105, %107, %cst_122 {dimension_numbers = #tpu.dot_dimension_numbers<[1], [0], [0], [1], [0, 0, 1, 1], [], []>} : vector<1x96xf32>, vector<96x128xf32>, vector<1x128xf32> -> vector<1x128xf32>
    %109 = arith.addf %104, %108 : vector<1x128xf32>
    %c6 = arith.constant 6 : index
    %c0_123 = arith.constant 0 : index
    %110 = vector.load %arg18[%c6, %c0_123] : memref<12x96xf32, #tpu.memory_space<vmem>>, vector<1x96xf32>
    %c6_124 = arith.constant 6 : index
    %c0_125 = arith.constant 0 : index
    %c0_126 = arith.constant 0 : index
    %111 = vector.load %arg10[%c6_124, %c0_125, %c0_126] : memref<12x96x128xf32, #tpu.memory_space<vmem>>, vector<1x96x128xf32>
    %112 = vector.shape_cast %111 : vector<1x96x128xf32> to vector<96x128xf32>
    %cst_127 = arith.constant dense<0.000000e+00> : vector<1x128xf32>
    %113 = tpu.matmul %110, %112, %cst_127 {dimension_numbers = #tpu.dot_dimension_numbers<[1], [0], [0], [1], [0, 0, 1, 1], [], []>} : vector<1x96xf32>, vector<96x128xf32>, vector<1x128xf32> -> vector<1x128xf32>
    %114 = arith.addf %109, %113 : vector<1x128xf32>
    %c7 = arith.constant 7 : index
    %c0_128 = arith.constant 0 : index
    %115 = vector.load %arg18[%c7, %c0_128] : memref<12x96xf32, #tpu.memory_space<vmem>>, vector<1x96xf32>
    %c7_129 = arith.constant 7 : index
    %c0_130 = arith.constant 0 : index
    %c0_131 = arith.constant 0 : index
    %116 = vector.load %arg10[%c7_129, %c0_130, %c0_131] : memref<12x96x128xf32, #tpu.memory_space<vmem>>, vector<1x96x128xf32>
    %117 = vector.shape_cast %116 : vector<1x96x128xf32> to vector<96x128xf32>
    %cst_132 = arith.constant dense<0.000000e+00> : vector<1x128xf32>
    %118 = tpu.matmul %115, %117, %cst_132 {dimension_numbers = #tpu.dot_dimension_numbers<[1], [0], [0], [1], [0, 0, 1, 1], [], []>} : vector<1x96xf32>, vector<96x128xf32>, vector<1x128xf32> -> vector<1x128xf32>
    %119 = arith.addf %114, %118 : vector<1x128xf32>
    %c8 = arith.constant 8 : index
    %c0_133 = arith.constant 0 : index
    %120 = vector.load %arg18[%c8, %c0_133] : memref<12x96xf32, #tpu.memory_space<vmem>>, vector<1x96xf32>
    %c8_134 = arith.constant 8 : index
    %c0_135 = arith.constant 0 : index
    %c0_136 = arith.constant 0 : index
    %121 = vector.load %arg10[%c8_134, %c0_135, %c0_136] : memref<12x96x128xf32, #tpu.memory_space<vmem>>, vector<1x96x128xf32>
    %122 = vector.shape_cast %121 : vector<1x96x128xf32> to vector<96x128xf32>
    %cst_137 = arith.constant dense<0.000000e+00> : vector<1x128xf32>
    %123 = tpu.matmul %120, %122, %cst_137 {dimension_numbers = #tpu.dot_dimension_numbers<[1], [0], [0], [1], [0, 0, 1, 1], [], []>} : vector<1x96xf32>, vector<96x128xf32>, vector<1x128xf32> -> vector<1x128xf32>
    %124 = arith.addf %119, %123 : vector<1x128xf32>
    %c9 = arith.constant 9 : index
    %c0_138 = arith.constant 0 : index
    %125 = vector.load %arg18[%c9, %c0_138] : memref<12x96xf32, #tpu.memory_space<vmem>>, vector<1x96xf32>
    %c9_139 = arith.constant 9 : index
    %c0_140 = arith.constant 0 : index
    %c0_141 = arith.constant 0 : index
    %126 = vector.load %arg10[%c9_139, %c0_140, %c0_141] : memref<12x96x128xf32, #tpu.memory_space<vmem>>, vector<1x96x128xf32>
    %127 = vector.shape_cast %126 : vector<1x96x128xf32> to vector<96x128xf32>
    %cst_142 = arith.constant dense<0.000000e+00> : vector<1x128xf32>
    %128 = tpu.matmul %125, %127, %cst_142 {dimension_numbers = #tpu.dot_dimension_numbers<[1], [0], [0], [1], [0, 0, 1, 1], [], []>} : vector<1x96xf32>, vector<96x128xf32>, vector<1x128xf32> -> vector<1x128xf32>
    %129 = arith.addf %124, %128 : vector<1x128xf32>
    %c10 = arith.constant 10 : index
    %c0_143 = arith.constant 0 : index
    %130 = vector.load %arg18[%c10, %c0_143] : memref<12x96xf32, #tpu.memory_space<vmem>>, vector<1x96xf32>
    %c10_144 = arith.constant 10 : index
    %c0_145 = arith.constant 0 : index
    %c0_146 = arith.constant 0 : index
    %131 = vector.load %arg10[%c10_144, %c0_145, %c0_146] : memref<12x96x128xf32, #tpu.memory_space<vmem>>, vector<1x96x128xf32>
    %132 = vector.shape_cast %131 : vector<1x96x128xf32> to vector<96x128xf32>
    %cst_147 = arith.constant dense<0.000000e+00> : vector<1x128xf32>
    %133 = tpu.matmul %130, %132, %cst_147 {dimension_numbers = #tpu.dot_dimension_numbers<[1], [0], [0], [1], [0, 0, 1, 1], [], []>} : vector<1x96xf32>, vector<96x128xf32>, vector<1x128xf32> -> vector<1x128xf32>
    %134 = arith.addf %129, %133 : vector<1x128xf32>
    %c11 = arith.constant 11 : index
    %c0_148 = arith.constant 0 : index
    %135 = vector.load %arg18[%c11, %c0_148] : memref<12x96xf32, #tpu.memory_space<vmem>>, vector<1x96xf32>
    %c11_149 = arith.constant 11 : index
    %c0_150 = arith.constant 0 : index
    %c0_151 = arith.constant 0 : index
    %136 = vector.load %arg10[%c11_149, %c0_150, %c0_151] : memref<12x96x128xf32, #tpu.memory_space<vmem>>, vector<1x96x128xf32>
    %137 = vector.shape_cast %136 : vector<1x96x128xf32> to vector<96x128xf32>
    %cst_152 = arith.constant dense<0.000000e+00> : vector<1x128xf32>
    %138 = tpu.matmul %135, %137, %cst_152 {dimension_numbers = #tpu.dot_dimension_numbers<[1], [0], [0], [1], [0, 0, 1, 1], [], []>} : vector<1x96xf32>, vector<96x128xf32>, vector<1x128xf32> -> vector<1x128xf32>
    %139 = arith.addf %134, %138 : vector<1x128xf32>
    %c0_153 = arith.constant 0 : index
    %c0_154 = arith.constant 0 : index
    %140 = vector.load %arg11[%c0_153, %c0_154] : memref<1x128xf32, #tpu.memory_space<vmem>>, vector<1x128xf32>
    %141 = arith.addf %139, %140 : vector<1x128xf32>
    %cst_155 = arith.constant 0.000000e+00 : f32
    %142 = vector.broadcast %cst_155 : f32 to vector<1x128xf32>
    %143 = arith.maximumf %141, %142 : vector<1x128xf32>
    %c0_156 = arith.constant 0 : index
    %c0_157 = arith.constant 0 : index
    %144 = vector.load %arg12[%c0_156, %c0_157] : memref<128x128xf32, #tpu.memory_space<vmem>>, vector<128x128xf32>
    %cst_158 = arith.constant dense<0.000000e+00> : vector<1x128xf32>
    %145 = tpu.matmul %143, %144, %cst_158 {dimension_numbers = #tpu.dot_dimension_numbers<[1], [0], [0], [1], [0, 0, 1, 1], [], []>} : vector<1x128xf32>, vector<128x128xf32>, vector<1x128xf32> -> vector<1x128xf32>
    %c0_159 = arith.constant 0 : index
    %c0_160 = arith.constant 0 : index
    %146 = vector.load %arg13[%c0_159, %c0_160] : memref<1x128xf32, #tpu.memory_space<vmem>>, vector<1x128xf32>
    %147 = arith.addf %145, %146 : vector<1x128xf32>
    %c0_161 = arith.constant 0 : index
    %c0_162 = arith.constant 0 : index
    %c0_163 = arith.constant 0 : index
    %148 = vector.load %arg14[%c0_161, %c0_162, %c0_163] : memref<1x1x128xf32, #tpu.memory_space<vmem>>, vector<1x1x128xf32>
    %149 = vector.shape_cast %148 : vector<1x1x128xf32> to vector<1x128xf32>
    %150 = vector.shape_cast %147 : vector<1x128xf32> to vector<1x1x128xf32>
    tpu.vector_store %arg14[%c0_161, %c0_162, %c0_163], %150 {strides = array<i32>} : memref<1x1x128xf32, #tpu.memory_space<vmem>>, vector<1x1x128xf32>,
    return
  }
  func.func @transform_0(%arg0: i32) -> (i32, i32, i32) {
    %c0_i32 = arith.constant 0 : i32
    %c0_i32_0 = arith.constant 0 : i32
    %c0_i32_1 = arith.constant 0 : i32
    return %arg0, %c0_i32, %c0_i32_0 : i32, i32, i32
  }
  func.func @transform_1(%arg0: i32) -> (i32, i32, i32) {
    %c0_i32 = arith.constant 0 : i32
    %c0_i32_0 = arith.constant 0 : i32
    %c0_i32_1 = arith.constant 0 : i32
    %c0_i32_2 = arith.constant 0 : i32
    return %c0_i32, %c0_i32_0, %c0_i32_1 : i32, i32, i32
  }
  func.func @transform_2(%arg0: i32) -> (i32, i32) {
    %c0_i32 = arith.constant 0 : i32
    %c0_i32_0 = arith.constant 0 : i32
    %c0_i32_1 = arith.constant 0 : i32
    return %c0_i32, %c0_i32_0 : i32, i32
  }
  func.func @transform_3(%arg0: i32) -> (i32, i32, i32) {
    %c0_i32 = arith.constant 0 : i32
    %c0_i32_0 = arith.constant 0 : i32
    %c0_i32_1 = arith.constant 0 : i32
    %c0_i32_2 = arith.constant 0 : i32
    return %c0_i32, %c0_i32_0, %c0_i32_1 : i32, i32, i32
  }
  func.func @transform_4(%arg0: i32) -> (i32, i32) {
    %c0_i32 = arith.constant 0 : i32
    %c0_i32_0 = arith.constant 0 : i32
    %c0_i32_1 = arith.constant 0 : i32
    return %c0_i32, %c0_i32_0 : i32, i32
  }
  func.func @transform_5(%arg0: i32) -> (i32, i32, i32) {
    %c0_i32 = arith.constant 0 : i32
    %c0_i32_0 = arith.constant 0 : i32
    %c0_i32_1 = arith.constant 0 : i32
    %c0_i32_2 = arith.constant 0 : i32
    return %c0_i32, %c0_i32_0, %c0_i32_1 : i32, i32, i32
  }
  func.func @transform_6(%arg0: i32) -> (i32, i32) {
    %c0_i32 = arith.constant 0 : i32
    %c0_i32_0 = arith.constant 0 : i32
    %c0_i32_1 = arith.constant 0 : i32
    return %c0_i32, %c0_i32_0 : i32, i32
  }
  func.func @transform_7(%arg0: i32) -> (i32, i32, i32) {
    %c0_i32 = arith.constant 0 : i32
    %c0_i32_0 = arith.constant 0 : i32
    %c0_i32_1 = arith.constant 0 : i32
    %c0_i32_2 = arith.constant 0 : i32
    return %c0_i32, %c0_i32_0, %c0_i32_1 : i32, i32, i32
  }
  func.func @transform_8(%arg0: i32) -> (i32, i32) {
    %c0_i32 = arith.constant 0 : i32
    %c0_i32_0 = arith.constant 0 : i32
    %c0_i32_1 = arith.constant 0 : i32
    return %c0_i32, %c0_i32_0 : i32, i32
  }
  func.func @transform_9(%arg0: i32) -> (i32, i32, i32) {
    %c0_i32 = arith.constant 0 : i32
    %c0_i32_0 = arith.constant 0 : i32
    %c0_i32_1 = arith.constant 0 : i32
    %c0_i32_2 = arith.constant 0 : i32
    return %c0_i32, %c0_i32_0, %c0_i32_1 : i32, i32, i32
  }
  func.func @transform_10(%arg0: i32) -> (i32, i32) {
    %c0_i32 = arith.constant 0 : i32
    %c0_i32_0 = arith.constant 0 : i32
    %c0_i32_1 = arith.constant 0 : i32
    return %c0_i32, %c0_i32_0 : i32, i32
  }
  func.func @transform_11(%arg0: i32) -> (i32, i32) {
    %c0_i32 = arith.constant 0 : i32
    %c0_i32_0 = arith.constant 0 : i32
    %c0_i32_1 = arith.constant 0 : i32
    return %c0_i32, %c0_i32_0 : i32, i32
  }
  func.func @transform_12(%arg0: i32) -> (i32, i32) {
    %c0_i32 = arith.constant 0 : i32
    %c0_i32_0 = arith.constant 0 : i32
    %c0_i32_1 = arith.constant 0 : i32
    return %c0_i32, %c0_i32_0 : i32, i32
  }
  func.func @transform_13(%arg0: i32) -> (i32, i32, i32) {
    %c0_i32 = arith.constant 0 : i32
    %c0_i32_0 = arith.constant 0 : i32
    %c0_i32_1 = arith.constant 0 : i32
    return %arg0, %c0_i32, %c0_i32_0 : i32, i32, i32
  }
}

</mosaic_0001>

<llo_original>
// kernel: view_embedder2_forward.1
$region0: #{view_embedder2_forward.1}
  #allocation0 [shape = 'u32[]', space=smem, size = 0x4, offset = 0x4, fixed_abs, tag = 'smem constant byte address 0x4 - core index']
  #allocation1 [shape = 'u32[144,128]{1,0:T(1,128)}', space=vmem, size = 0x12000, scoped, tag = 'internal scratch']
  #allocation2 [shape = 'f32[18,144]{1,0:T(8,128)}', space=vmem, size = 0x6000, scoped, tag = 'scratch operand']
  #allocation3 [shape = 'f32[16,128]{1,0:T(8,128)}', space=vmem, size = 0x2000, scoped, tag = 'scratch operand']
  #allocation4 [shape = 'f32[14,224]{1,0:T(8,128)}', space=vmem, size = 0x4000, scoped, tag = 'scratch operand']
  #allocation5 [shape = 'f32[12,96]{1,0:T(8,128)}', space=vmem, size = 0x2000, scoped, tag = 'scratch operand']
  %s0 = inlined_call_operand.vmem [shape: f32[2,20,60], index: 0, kind: input, shape index: {}]
  %s1 = inlined_call_operand.vmem [shape: f32[3,60,144], index: 1, kind: input, shape index: {}]
  %s2 = inlined_call_operand.vmem [shape: f32[1,144], index: 2, kind: input, shape index: {}]
  %s3 = inlined_call_operand.vmem [shape: f32[3,144,128], index: 3, kind: input, shape index: {}]
  %s4 = inlined_call_operand.vmem [shape: f32[1,128], index: 4, kind: input, shape index: {}]
  %s5 = inlined_call_operand.vmem [shape: f32[3,128,224], index: 5, kind: input, shape index: {}]
  %s6 = inlined_call_operand.vmem [shape: f32[1,224], index: 6, kind: input, shape index: {}]
  %s7 = inlined_call_operand.vmem [shape: f32[3,224,96], index: 7, kind: input, shape index: {}]
  %s8 = inlined_call_operand.vmem [shape: f32[1,96], index: 8, kind: input, shape index: {}]
  %s9 = inlined_call_operand.vmem [shape: f32[12,96,128], index: 9, kind: input, shape index: {}]
  %s10 = inlined_call_operand.vmem [shape: f32[1,128], index: 10, kind: input, shape index: {}]
  %s11 = inlined_call_operand.vmem [shape: f32[128,128], index: 11, kind: input, shape index: {}]
  %s12 = inlined_call_operand.vmem [shape: f32[1,128], index: 12, kind: input, shape index: {}]
  %s13 = inlined_call_operand.hbm [shape: f32[2,1,128], index: 13, kind: output, shape index: {}]
  %s14 = sld [smem:[#allocation0]]
  $region85: #{view_embedder2_forward.1} parent=0
    _
  %s16 = ssub.s32 1, %s14
  %s17 = scalar_select 0, %s16, %s14
  $region1: #{view_embedder2_forward.1} parent=0
    #allocation6 [shape = 'u8[1024]{0}', space=vmem, size = 0x400, scoped, tag = 'output window, operand 0']
    #allocation7 [shape = 's32[2]{0}', space=sflag, size = 0x8, scoped, tag = 'scoped memory for view_embedder2_forward.1']
    %18 = vsyncpa [#allocation7], 0
    %s19 = scalar_lea.sflag [#allocation7], 1
    %20 = vsyncpa %s19, 0
    loop: start=0, step=1, limit=4
    $region2: #{view_embedder2_forward.1} parent=1 // loop_pre_header
      _
    $region3: #{view_embedder2_forward.1} parent=1 // loop_header
      %s22 = sphi 0, %s26
      %p23 = scmp.ge.s32.totalorder %s22, 4
      %s32 = sphi 0, %s34
      %s35 = sphi 0, %s32
      %s36 = sphi 0, %s35
      %s52 = sphi 0, %s36
      %s56 = sphi 0, %s56
      %s58 = sphi 0, %s56
      %s59 = sphi 0, %s58
      %s73 = sphi 0, %s59
      %s77 = sphi 0, %s77
      %s79 = sphi 0, %s77
      %s80 = sphi 0, %s79
      %s94 = sphi 0, %s80
      %s98 = sphi 0, %s98
      %s100 = sphi 0, %s98
      %s101 = sphi 0, %s100
      %s115 = sphi 0, %s101
      %s119 = sphi 0, %s119
      %s121 = sphi 0, %s119
      %s122 = sphi 0, %s121
      %s136 = sphi 0, %s122
      %s140 = sphi 0, %s140
      %s142 = sphi 0, %s140
      %s143 = sphi 0, %s142
      %s157 = sphi 0, %s143
      %s161 = sphi 0, %s161
      %s163 = sphi 0, %s161
      %s164 = sphi 0, %s163
      %s178 = sphi 0, %s164
      %s182 = sphi 0, %s182
      %s184 = sphi 0, %s182
      %s185 = sphi 0, %s184
      %s199 = sphi 0, %s185
      %s203 = sphi 0, %s203
      %s205 = sphi 0, %s203
      %s206 = sphi 0, %s205
      %s220 = sphi 0, %s206
      %s224 = sphi 0, %s224
      %s226 = sphi 0, %s224
      %s227 = sphi 0, %s226
      %s241 = sphi 0, %s227
      %s245 = sphi 0, %s245
      %s247 = sphi 0, %s245
      %s248 = sphi 0, %s247
      %s262 = sphi 0, %s248
      %s266 = sphi 0, %s266
      %s268 = sphi 0, %s266
      %s269 = sphi 0, %s268
      %s283 = sphi 0, %s269
      %s287 = sphi 0, %s287
      %s289 = sphi 0, %s287
      %s290 = sphi 0, %s289
      %s304 = sphi 0, %s290
      %s310 = sphi 0, %s312
      %s313 = sphi 0, %s310
      %s314 = sphi 0, %s313
      %s330 = sphi 0, %s314
    $region4: #{view_embedder2_forward.1} parent=1 // loop_header_branch
      %25 = sbr.rel (%p23) target = $region8
    $region5: #{view_embedder2_forward.1} parent=1 // loop_body
      %s27 = ssub.s32 %s22, 1
      %s28 = ssub.s32 %s22, 2
      %s29 = sadd.s32 %s22, 1
      %s30 = ssub.s32 %s22, %s29
      %p31 = scmp.eq.s32.totalorder %s30, 0
      %s33 = sadd.s32 %s32, 1
      %s34 = scalar_select %p31, %s32, %s33
      %p37 = pneg %p31
      %p38 = scmp.eq.s32.totalorder %s22, 1
      %p39 = por %p37, %p38
      %p40 = scmp.ne.s32.totalorder %s32, %s35
      %p41 = scmp.eq.s32.totalorder %s22, 0
      %p42 = por %p40, %p41
      %p43 = scmp.ne.s32.totalorder %s32, %s35
      %p44 = scmp.eq.s32.totalorder %s27, 1
      %p45 = por %p43, %p44
      %p46 = scmp.ne.s32.totalorder %s35, %s36
      %p47 = scmp.eq.s32.totalorder %s27, 0
      %p48 = por %p46, %p47
      %p49 = scmp.ne.s32.totalorder %s35, %s36
      %p50 = scmp.eq.s32.totalorder %s28, 1
      %p51 = por %p49, %p50
      %p53 = scmp.ne.s32.totalorder %s36, %s52
      %p54 = scmp.eq.s32.totalorder %s28, 0
      %p55 = por %p53, %p54
      %s57 = sadd.s32 %s56, 1
      %p60 = scmp.eq.s32.totalorder %s22, 1
      %p61 = scmp.ne.s32.totalorder %s56, %s58
      %p62 = scmp.eq.s32.totalorder %s22, 0
      %p63 = por %p61, %p62
      %p64 = scmp.ne.s32.totalorder %s56, %s58
      %p65 = scmp.eq.s32.totalorder %s27, 1
      %p66 = por %p64, %p65
      %p67 = scmp.ne.s32.totalorder %s58, %s59
      %p68 = scmp.eq.s32.totalorder %s27, 0
      %p69 = por %p67, %p68
      %p70 = scmp.ne.s32.totalorder %s58, %s59
      %p71 = scmp.eq.s32.totalorder %s28, 1
      %p72 = por %p70, %p71
      %p74 = scmp.ne.s32.totalorder %s59, %s73
      %p75 = scmp.eq.s32.totalorder %s28, 0
      %p76 = por %p74, %p75
      %s78 = sadd.s32 %s77, 1
      %p81 = scmp.eq.s32.totalorder %s22, 1
      %p82 = scmp.ne.s32.totalorder %s77, %s79
      %p83 = scmp.eq.s32.totalorder %s22, 0
      %p84 = por %p82, %p83
      %p85 = scmp.ne.s32.totalorder %s77, %s79
      %p86 = scmp.eq.s32.totalorder %s27, 1
      %p87 = por %p85, %p86
      %p88 = scmp.ne.s32.totalorder %s79, %s80
      %p89 = scmp.eq.s32.totalorder %s27, 0
      %p90 = por %p88, %p89
      %p91 = scmp.ne.s32.totalorder %s79, %s80
      %p92 = scmp.eq.s32.totalorder %s28, 1
      %p93 = por %p91, %p92
      %p95 = scmp.ne.s32.totalorder %s80, %s94
      %p96 = scmp.eq.s32.totalorder %s28, 0
      %p97 = por %p95, %p96
      %s99 = sadd.s32 %s98, 1
      %p102 = scmp.eq.s32.totalorder %s22, 1
      %p103 = scmp.ne.s32.totalorder %s98, %s100
      %p104 = scmp.eq.s32.totalorder %s22, 0
      %p105 = por %p103, %p104
      %p106 = scmp.ne.s32.totalorder %s98, %s100
      %p107 = scmp.eq.s32.totalorder %s27, 1
      %p108 = por %p106, %p107
      %p109 = scmp.ne.s32.totalorder %s100, %s101
      %p110 = scmp.eq.s32.totalorder %s27, 0
      %p111 = por %p109, %p110
      %p112 = scmp.ne.s32.totalorder %s100, %s101
      %p113 = scmp.eq.s32.totalorder %s28, 1
      %p114 = por %p112, %p113
      %p116 = scmp.ne.s32.totalorder %s101, %s115
      %p117 = scmp.eq.s32.totalorder %s28, 0
      %p118 = por %p116, %p117
      %s120 = sadd.s32 %s119, 1
      %p123 = scmp.eq.s32.totalorder %s22, 1
      %p124 = scmp.ne.s32.totalorder %s119, %s121
      %p125 = scmp.eq.s32.totalorder %s22, 0
      %p126 = por %p124, %p125
      %p127 = scmp.ne.s32.totalorder %s119, %s121
      %p128 = scmp.eq.s32.totalorder %s27, 1
      %p129 = por %p127, %p128
      %p130 = scmp.ne.s32.totalorder %s121, %s122
      %p131 = scmp.eq.s32.totalorder %s27, 0
      %p132 = por %p130, %p131
      %p133 = scmp.ne.s32.totalorder %s121, %s122
      %p134 = scmp.eq.s32.totalorder %s28, 1
      %p135 = por %p133, %p134
      %p137 = scmp.ne.s32.totalorder %s122, %s136
      %p138 = scmp.eq.s32.totalorder %s28, 0
      %p139 = por %p137, %p138
      %s141 = sadd.s32 %s140, 1
      %p144 = scmp.eq.s32.totalorder %s22, 1
      %p145 = scmp.ne.s32.totalorder %s140, %s142
      %p146 = scmp.eq.s32.totalorder %s22, 0
      %p147 = por %p145, %p146
      %p148 = scmp.ne.s32.totalorder %s140, %s142
      %p149 = scmp.eq.s32.totalorder %s27, 1
      %p150 = por %p148, %p149
      %p151 = scmp.ne.s32.totalorder %s142, %s143
      %p152 = scmp.eq.s32.totalorder %s27, 0
      %p153 = por %p151, %p152
      %p154 = scmp.ne.s32.totalorder %s142, %s143
      %p155 = scmp.eq.s32.totalorder %s28, 1
      %p156 = por %p154, %p155
      %p158 = scmp.ne.s32.totalorder %s143, %s157
      %p159 = scmp.eq.s32.totalorder %s28, 0
      %p160 = por %p158, %p159
      %s162 = sadd.s32 %s161, 1
      %p165 = scmp.eq.s32.totalorder %s22, 1
      %p166 = scmp.ne.s32.totalorder %s161, %s163
      %p167 = scmp.eq.s32.totalorder %s22, 0
      %p168 = por %p166, %p167
      %p169 = scmp.ne.s32.totalorder %s161, %s163
      %p170 = scmp.eq.s32.totalorder %s27, 1
      %p171 = por %p169, %p170
      %p172 = scmp.ne.s32.totalorder %s163, %s164
      %p173 = scmp.eq.s32.totalorder %s27, 0
      %p174 = por %p172, %p173
      %p175 = scmp.ne.s32.totalorder %s163, %s164
      %p176 = scmp.eq.s32.totalorder %s28, 1
      %p177 = por %p175, %p176
      %p179 = scmp.ne.s32.totalorder %s164, %s178
      %p180 = scmp.eq.s32.totalorder %s28, 0
      %p181 = por %p179, %p180
      %s183 = sadd.s32 %s182, 1
      %p186 = scmp.eq.s32.totalorder %s22, 1
      %p187 = scmp.ne.s32.totalorder %s182, %s184
      %p188 = scmp.eq.s32.totalorder %s22, 0
      %p189 = por %p187, %p188
      %p190 = scmp.ne.s32.totalorder %s182, %s184
      %p191 = scmp.eq.s32.totalorder %s27, 1
      %p192 = por %p190, %p191
      %p193 = scmp.ne.s32.totalorder %s184, %s185
      %p194 = scmp.eq.s32.totalorder %s27, 0
      %p195 = por %p193, %p194
      %p196 = scmp.ne.s32.totalorder %s184, %s185
      %p197 = scmp.eq.s32.totalorder %s28, 1
      %p198 = por %p196, %p197
      %p200 = scmp.ne.s32.totalorder %s185, %s199
      %p201 = scmp.eq.s32.totalorder %s28, 0
      %p202 = por %p200, %p201
      %s204 = sadd.s32 %s203, 1
      %p207 = scmp.eq.s32.totalorder %s22, 1
      %p208 = scmp.ne.s32.totalorder %s203, %s205
      %p209 = scmp.eq.s32.totalorder %s22, 0
      %p210 = por %p208, %p209
      %p211 = scmp.ne.s32.totalorder %s203, %s205
      %p212 = scmp.eq.s32.totalorder %s27, 1
      %p213 = por %p211, %p212
      %p214 = scmp.ne.s32.totalorder %s205, %s206
      %p215 = scmp.eq.s32.totalorder %s27, 0
      %p216 = por %p214, %p215
      %p217 = scmp.ne.s32.totalorder %s205, %s206
      %p218 = scmp.eq.s32.totalorder %s28, 1
      %p219 = por %p217, %p218
      %p221 = scmp.ne.s32.totalorder %s206, %s220
      %p222 = scmp.eq.s32.totalorder %s28, 0
      %p223 = por %p221, %p222
      %s225 = sadd.s32 %s224, 1
      %p228 = scmp.eq.s32.totalorder %s22, 1
      %p229 = scmp.ne.s32.totalorder %s224, %s226
      %p230 = scmp.eq.s32.totalorder %s22, 0
      %p231 = por %p229, %p230
      %p232 = scmp.ne.s32.totalorder %s224, %s226
      %p233 = scmp.eq.s32.totalorder %s27, 1
      %p234 = por %p232, %p233
      %p235 = scmp.ne.s32.totalorder %s226, %s227
      %p236 = scmp.eq.s32.totalorder %s27, 0
      %p237 = por %p235, %p236
      %p238 = scmp.ne.s32.totalorder %s226, %s227
      %p239 = scmp.eq.s32.totalorder %s28, 1
      %p240 = por %p238, %p239
      %p242 = scmp.ne.s32.totalorder %s227, %s241
      %p243 = scmp.eq.s32.totalorder %s28, 0
      %p244 = por %p242, %p243
      %s246 = sadd.s32 %s245, 1
      %p249 = scmp.eq.s32.totalorder %s22, 1
      %p250 = scmp.ne.s32.totalorder %s245, %s247
      %p251 = scmp.eq.s32.totalorder %s22, 0
      %p252 = por %p250, %p251
      %p253 = scmp.ne.s32.totalorder %s245, %s247
      %p254 = scmp.eq.s32.totalorder %s27, 1
      %p255 = por %p253, %p254
      %p256 = scmp.ne.s32.totalorder %s247, %s248
      %p257 = scmp.eq.s32.totalorder %s27, 0
      %p258 = por %p256, %p257
      %p259 = scmp.ne.s32.totalorder %s247, %s248
      %p260 = scmp.eq.s32.totalorder %s28, 1
      %p261 = por %p259, %p260
      %p263 = scmp.ne.s32.totalorder %s248, %s262
      %p264 = scmp.eq.s32.totalorder %s28, 0
      %p265 = por %p263, %p264
      %s267 = sadd.s32 %s266, 1
      %p270 = scmp.eq.s32.totalorder %s22, 1
      %p271 = scmp.ne.s32.totalorder %s266, %s268
      %p272 = scmp.eq.s32.totalorder %s22, 0
      %p273 = por %p271, %p272
      %p274 = scmp.ne.s32.totalorder %s266, %s268
      %p275 = scmp.eq.s32.totalorder %s27, 1
      %p276 = por %p274, %p275
      %p277 = scmp.ne.s32.totalorder %s268, %s269
      %p278 = scmp.eq.s32.totalorder %s27, 0
      %p279 = por %p277, %p278
      %p280 = scmp.ne.s32.totalorder %s268, %s269
      %p281 = scmp.eq.s32.totalorder %s28, 1
      %p282 = por %p280, %p281
      %p284 = scmp.ne.s32.totalorder %s269, %s283
      %p285 = scmp.eq.s32.totalorder %s28, 0
      %p286 = por %p284, %p285
      %s288 = sadd.s32 %s287, 1
      %p291 = scmp.eq.s32.totalorder %s22, 1
      %p292 = scmp.ne.s32.totalorder %s287, %s289
      %p293 = scmp.eq.s32.totalorder %s22, 0
      %p294 = por %p292, %p293
      %p295 = scmp.ne.s32.totalorder %s287, %s289
      %p296 = scmp.eq.s32.totalorder %s27, 1
      %p297 = por %p295, %p296
      %p298 = scmp.ne.s32.totalorder %s289, %s290
      %p299 = scmp.eq.s32.totalorder %s27, 0
      %p300 = por %p298, %p299
      %p301 = scmp.ne.s32.totalorder %s289, %s290
      %p302 = scmp.eq.s32.totalorder %s28, 1
      %p303 = por %p301, %p302
      %p305 = scmp.ne.s32.totalorder %s290, %s304
      %p306 = scmp.eq.s32.totalorder %s28, 0
      %p307 = por %p305, %p306
      %s308 = ssub.s32 %s22, %s29
      %p309 = scmp.eq.s32.totalorder %s308, 0
      %s311 = sadd.s32 %s310, 1
      %s312 = scalar_select %p309, %s310, %s311
      %p315 = pneg %p309
      %p316 = scmp.eq.s32.totalorder %s22, 1
      %p317 = por %p315, %p316
      %p318 = scmp.ne.s32.totalorder %s310, %s313
      %p319 = scmp.eq.s32.totalorder %s22, 0
      %p320 = por %p318, %p319
      %p321 = scmp.ne.s32.totalorder %s310, %s313
      %p322 = scmp.eq.s32.totalorder %s27, 1
      %p323 = por %p321, %p322
      %p324 = scmp.ne.s32.totalorder %s313, %s314
      %p325 = scmp.eq.s32.totalorder %s27, 0
      %p326 = por %p324, %p325
      %p327 = scmp.ne.s32.totalorder %s313, %s314
      %p328 = scmp.eq.s32.totalorder %s28, 1
      %p329 = por %p327, %p328
      %p331 = scmp.ne.s32.totalorder %s314, %s330
      %p332 = scmp.eq.s32.totalorder %s28, 0
      %p333 = por %p331, %p332
      %p334 = scmp.le.s32.totalorder 1, %s22
      %p335 = scmp.lt.s32.totalorder %s22, 3
      %p336 = pnand %p334, %p335
      %p337 = pneg %p336
      // Predicated region
      $region9: #{view_embedder2_forward.1} parent=5 // pred_check
        _
      $region10: #{view_embedder2_forward.1} parent=5 // pred_check_branch
        %339 = sbr.rel (%p336) target = $region12
      $region11: #{view_embedder2_forward.1} parent=5 // pred_region
        %s340 = ssub.s32 %s22, 1
        // Predicated region
        $region13: #{view_embedder2_forward.1} parent=11 // pred_check
          %p341 = pneg %p69
        $region14: #{view_embedder2_forward.1} parent=11 // pred_check_branch
          %343 = sbr.rel (%p341) target = $region16
        $region15: #{view_embedder2_forward.1} parent=11 // pred_region
          _
        $region16: #{view_embedder2_forward.1} parent=11 // pred_fallthru
          _
        // Predicated region
        $region17: #{view_embedder2_forward.1} parent=11 // pred_check
          %p344 = pneg %p90
        $region18: #{view_embedder2_forward.1} parent=11 // pred_check_branch
          %346 = sbr.rel (%p344) target = $region20
        $region19: #{view_embedder2_forward.1} parent=11 // pred_region
          _
        $region20: #{view_embedder2_forward.1} parent=11 // pred_fallthru
          _
        // Predicated region
        $region21: #{view_embedder2_forward.1} parent=11 // pred_check
          %p347 = pneg %p111
        $region22: #{view_embedder2_forward.1} parent=11 // pred_check_branch
          %349 = sbr.rel (%p347) target = $region24
        $region23: #{view_embedder2_forward.1} parent=11 // pred_region
          _
        $region24: #{view_embedder2_forward.1} parent=11 // pred_fallthru
          _
        // Predicated region
        $region25: #{view_embedder2_forward.1} parent=11 // pred_check
          %p350 = pneg %p132
        $region26: #{view_embedder2_forward.1} parent=11 // pred_check_branch
          %352 = sbr.rel (%p350) target = $region28
        $region27: #{view_embedder2_forward.1} parent=11 // pred_region
          _
        $region28: #{view_embedder2_forward.1} parent=11 // pred_fallthru
          _
        // Predicated region
        $region29: #{view_embedder2_forward.1} parent=11 // pred_check
          %p353 = pneg %p153
        $region30: #{view_embedder2_forward.1} parent=11 // pred_check_branch
          %355 = sbr.rel (%p353) target = $region32
        $region31: #{view_embedder2_forward.1} parent=11 // pred_region
          _
        $region32: #{view_embedder2_forward.1} parent=11 // pred_fallthru
          _
        // Predicated region
        $region33: #{view_embedder2_forward.1} parent=11 // pred_check
          %p356 = pneg %p174
        $region34: #{view_embedder2_forward.1} parent=11 // pred_check_branch
          %358 = sbr.rel (%p356) target = $region36
        $region35: #{view_embedder2_forward.1} parent=11 // pred_region
          _
        $region36: #{view_embedder2_forward.1} parent=11 // pred_fallthru
          _
        // Predicated region
        $region37: #{view_embedder2_forward.1} parent=11 // pred_check
          %p359 = pneg %p195
        $region38: #{view_embedder2_forward.1} parent=11 // pred_check_branch
          %361 = sbr.rel (%p359) target = $region40
        $region39: #{view_embedder2_forward.1} parent=11 // pred_region
          _
        $region40: #{view_embedder2_forward.1} parent=11 // pred_fallthru
          _
        // Predicated region
        $region41: #{view_embedder2_forward.1} parent=11 // pred_check
          %p362 = pneg %p216
        $region42: #{view_embedder2_forward.1} parent=11 // pred_check_branch
          %364 = sbr.rel (%p362) target = $region44
        $region43: #{view_embedder2_forward.1} parent=11 // pred_region
          _
        $region44: #{view_embedder2_forward.1} parent=11 // pred_fallthru
          _
        // Predicated region
        $region45: #{view_embedder2_forward.1} parent=11 // pred_check
          %p365 = pneg %p237
        $region46: #{view_embedder2_forward.1} parent=11 // pred_check_branch
          %367 = sbr.rel (%p365) target = $region48
        $region47: #{view_embedder2_forward.1} parent=11 // pred_region
          _
        $region48: #{view_embedder2_forward.1} parent=11 // pred_fallthru
          _
        // Predicated region
        $region49: #{view_embedder2_forward.1} parent=11 // pred_check
          %p368 = pneg %p258
        $region50: #{view_embedder2_forward.1} parent=11 // pred_check_branch
          %370 = sbr.rel (%p368) target = $region52
        $region51: #{view_embedder2_forward.1} parent=11 // pred_region
          _
        $region52: #{view_embedder2_forward.1} parent=11 // pred_fallthru
          _
        // Predicated region
        $region53: #{view_embedder2_forward.1} parent=11 // pred_check
          %p371 = pneg %p279
        $region54: #{view_embedder2_forward.1} parent=11 // pred_check_branch
          %373 = sbr.rel (%p371) target = $region56
        $region55: #{view_embedder2_forward.1} parent=11 // pred_region
          _
        $region56: #{view_embedder2_forward.1} parent=11 // pred_fallthru
          _
        // Predicated region
        $region57: #{view_embedder2_forward.1} parent=11 // pred_check
          %p374 = pneg %p300
        $region58: #{view_embedder2_forward.1} parent=11 // pred_check_branch
          %376 = sbr.rel (%p374) target = $region60
        $region59: #{view_embedder2_forward.1} parent=11 // pred_region
          _
        $region60: #{view_embedder2_forward.1} parent=11 // pred_fallthru
          _
      $region12: #{view_embedder2_forward.1} parent=5 // pred_fallthru
        _
      %p377 = scmp.lt.s32.totalorder %s22, 2
      // Predicated region
      $region61: #{view_embedder2_forward.1} parent=5 // pred_check
        %p378 = pneg %p377
      $region62: #{view_embedder2_forward.1} parent=5 // pred_check_branch
        %380 = sbr.rel (%p378) target = $region64
      $region63: #{view_embedder2_forward.1} parent=5 // pred_region
        // Predicated region
        $region65: #{view_embedder2_forward.1} parent=63 // pred_check
          %p381 = pneg %p42
        $region66: #{view_embedder2_forward.1} parent=63 // pred_check_branch
          %383 = sbr.rel (%p381) target = $region68
        $region67: #{view_embedder2_forward.1} parent=63 // pred_region
          %p384 = scmp.lt.s32.totalorder %s22, 1
          %s385 = scalar_select %p384, %s22, 1
          %s386 = smul.addr %s385, 3
          %s387 = smul.addr %s386, 8
          %s388 = scalar_lea.vmem %s0, %s387
        $region68: #{view_embedder2_forward.1} parent=63 // pred_fallthru
          _
      $region64: #{view_embedder2_forward.1} parent=5 // pred_fallthru
        _
      %p389 = scmp.le.s32.totalorder 1, %s22
      %p390 = scmp.lt.s32.totalorder %s22, 3
      %p391 = pnand %p389, %p390
      %p392 = pneg %p391
      // Predicated region
      $region69: #{view_embedder2_forward.1} parent=5 // pred_check
        _
      $region70: #{view_embedder2_forward.1} parent=5 // pred_check_branch
        %394 = sbr.rel (%p391) target = $region72
      $region71: #{view_embedder2_forward.1} parent=5 // pred_region
        %s395 = ssub.s32 %s22, 1
        %p396 = scmp.lt.s32.totalorder %s27, 1
        %s397 = scalar_select %p396, %s27, 1
        %s398 = smul.addr %s397, 3
        %s399 = smul.addr %s398, 8
        %s400 = scalar_lea.vmem %s0, %s399
        %p401 = pneg %p48
        %p402 = pneg %p45
        %p403 = pneg %p69
        %p404 = pneg %p66
        %p405 = pneg %p90
        %p406 = pneg %p87
        %p407 = pneg %p111
        %p408 = pneg %p108
        %p409 = pneg %p132
        %p410 = pneg %p129
        %p411 = pneg %p153
        %p412 = pneg %p150
        %p413 = pneg %p174
        %p414 = pneg %p171
        %p415 = pneg %p195
        %p416 = pneg %p192
        %p417 = pneg %p216
        %p418 = pneg %p213
        %p419 = pneg %p237
        %p420 = pneg %p234
        %p421 = pneg %p258
        %p422 = pneg %p255
        %p423 = pneg %p279
        %p424 = pneg %p276
        %p425 = pneg %p300
        %p426 = pneg %p297
        %p427 = pneg %p326
        %p428 = pneg %p323
        %s429 = sand.u32 %s313, 1
        %s430 = scalar_lea.sflag [#allocation7], %s429
        %s431 = sand.u32 %s313, 1
        %s432 = scalar_lea.vmem [#allocation6], %s431
        %p433 = scmp.lt.s32.totalorder %s27, 1
        %s434 = scalar_select %p433, %s27, 1
        %s435 = smul.addr %s434, 3
        %s436 = smul.addr %s435, 8
        %s437 = scalar_lea.vmem %s0, %s436
        %v438 = vld [vmem:[%s437] sm:$0xff]
        %v439 = vld [vmem:[%s437 + $0x8] sm:$0xff]
        %v440 = vld [vmem:[%s437 + $0x10] sm:$0x3]
        %v441 = vld [vmem:[%s1] sm:$0xff]
        %v442 = vld [vmem:[%s1 + $0x8] sm:$0xff]
        %v443 = vld [vmem:[%s1 + $0x10] sm:$0xff]
        %v444 = vld [vmem:[%s1 + $0x18] sm:$0xff]
        %v445 = vld [vmem:[%s1 + $0x20] sm:$0xff]
        %v446 = vld [vmem:[%s1 + $0x28] sm:$0xff]
        %v447 = vld [vmem:[%s1 + $0x30] sm:$0xff]
        %v448 = vld [vmem:[%s1 + $0x38] sm:$0xff]
        %v449 = vld [vmem:[%s1 + $0x40] sm:$0xff]
        %v450 = vld [vmem:[%s1 + $0x48] sm:$0xff]
        %v451 = vld [vmem:[%s1 + $0x50] sm:$0xff]
        %v452 = vld [vmem:[%s1 + $0x58] sm:$0xff]
        %v453 = vld [vmem:[%s1 + $0x60] sm:$0xff]
        %v454 = vld [vmem:[%s1 + $0x68] sm:$0xff]
        %v455 = vld [vmem:[%s1 + $0x70] sm:$0xf]
        %v456 = vld [vmem:[%s1 + $0x78] sm:$0xf]
        %v457 = vld [vmem:[%s437 + $0x1] sm:$0xff]
        %v458 = vld [vmem:[%s437 + $0x9] sm:$0xff]
        %v459 = vld [vmem:[%s437 + $0x11] sm:$0x3]
        %s460 = scalar_lea.vmem %s1, 128
        %v461 = vld [vmem:[%s460] sm:$0xff]
        %v462 = vld [vmem:[%s460 + $0x8] sm:$0xff]
        %v463 = vld [vmem:[%s460 + $0x10] sm:$0xff]
        %v464 = vld [vmem:[%s460 + $0x18] sm:$0xff]
        %v465 = vld [vmem:[%s460 + $0x20] sm:$0xff]
        %v466 = vld [vmem:[%s460 + $0x28] sm:$0xff]
        %v467 = vld [vmem:[%s460 + $0x30] sm:$0xff]
        %v468 = vld [vmem:[%s460 + $0x38] sm:$0xff]
        %v469 = vld [vmem:[%s460 + $0x40] sm:$0xff]
        %v470 = vld [vmem:[%s460 + $0x48] sm:$0xff]
        %v471 = vld [vmem:[%s460 + $0x50] sm:$0xff]
        %v472 = vld [vmem:[%s460 + $0x58] sm:$0xff]
        %v473 = vld [vmem:[%s460 + $0x60] sm:$0xff]
        %v474 = vld [vmem:[%s460 + $0x68] sm:$0xff]
        %v475 = vld [vmem:[%s460 + $0x70] sm:$0xf]
        %v476 = vld [vmem:[%s460 + $0x78] sm:$0xf]
        %vm477 = vcmask 490496
        %v479 = vsel %vm477, %v457, 0
        %v482 = vsel %vm477, %v458, 0
        %v485 = vsel %vm477, %v459, 0
        %vm487 = vcmask 1043456
        %v489 = vsel %vm487, %v475, 0
        %v492 = vsel %vm487, %v476, 0
        %494 = vmatprep.subr.mxu0 %v462
        %495 = vmatpush1.msra.mxu0 %v461
        %496 = vmatprep.subr.mxu0 %v464
        %497 = vmatpush1.msra.mxu0 %v463
        %498 = vmatprep.subr.mxu0 %v466
        %499 = vmatpush1.msra.mxu0 %v465
        %500 = vmatprep.subr.mxu0 %v468
        %501 = vmatpush1.msra.mxu0 %v467
        %502 = vmatprep.subr.mxu0 %v470
        %503 = vmatpush1.msra.mxu0 %v469
        %504 = vmatprep.subr.mxu0 %v472
        %505 = vmatpush1.msra.mxu0 %v471
        %506 = vmatprep.subr.mxu0 %v474
        %507 = vmatpush1.msra.mxu0 %v473
        %508 = vmatprep.subr.mxu0 %v492
        %509 = vmatpush1.msra.mxu0 %v489
        %510 = vmatprep.subr.mxu0 0.0
        %511 = vmatpush1.msra.mxu0 0.0
        %512 = vmatprep.subr.mxu0 0.0
        %513 = vmatpush1.msra.mxu0 0.0
        %514 = vmatprep.subr.mxu0 0.0
        %515 = vmatpush1.msra.mxu0 0.0
        %516 = vmatprep.subr.mxu0 0.0
        %517 = vmatpush1.msra.mxu0 0.0
        %518 = vmatprep.subr.mxu0 0.0
        %519 = vmatpush1.msra.mxu0 0.0
        %520 = vmatprep.subr.mxu0 0.0
        %521 = vmatpush1.msra.mxu0 0.0
        %522 = vmatprep.subr.mxu0 0.0
        %523 = vmatpush1.msra.mxu0 0.0
        %524 = vmatprep.subr.mxu0 0.0
        %525 = vmatpush1.msra.mxu0 0.0
        %526 = vmatprep.subr.mxu0 0.0
        %527 = vmatpush1.msra.mxu0 0.0
        %528 = vmatprep.subr.mxu0 0.0
        %529 = vmatpush1.msra.mxu0 0.0
        %530 = vmatprep.subr.mxu0 0.0
        %531 = vmatpush1.msra.mxu0 0.0
        %532 = vmatprep.subr.mxu0 0.0
        %533 = vmatpush1.msra.mxu0 0.0
        %534 = vmatprep.subr.mxu0 0.0
        %535 = vmatpush1.msra.mxu0 0.0
        %536 = vmatprep.subr.mxu0 0.0
        %537 = vmatpush1.msra.mxu0 0.0
        %538 = vmatprep.subr.mxu0 0.0
        %539 = vmatpush1.msra.mxu0 0.0
        %540 = vmatprep.subr.mxu0 0.0
        %541 = vmatpush1.msra.mxu0 0.0
        %542 = vmatprep.subr.mxu0 0.0
        %543 = vmatpush1.msra.mxu0 0.0
        %544 = vmatprep.subr.mxu0 0.0
        %545 = vmatpush1.msra.mxu0 0.0
        %546 = vmatprep.subr.mxu0 0.0
        %547 = vmatpush1.msra.mxu0 0.0
        %548 = vmatprep.subr.mxu0 0.0
        %549 = vmatpush1.msra.mxu0 0.0
        %550 = vmatprep.subr.mxu0 0.0
        %551 = vmatpush1.msra.mxu0 0.0
        %552 = vmatprep.subr.mxu0 0.0
        %553 = vmatpush1.msra.mxu0 0.0
        %554 = vmatprep.subr.mxu0 0.0
        %555 = vmatpush1.msra.mxu0 0.0
        %556 = vmatprep.subr.mxu0 0.0
        %557 = vmatpush1.msra.mxu0 0.0
        %558 = vmatprep.mubr.f32.mxu0 0.0
        %559 = vmatmul.mubr.f32.gmra.mrb[0].mxu0 %v479
        %v560 = vpop.f32.mrb[0].mxu0
        %v561 = vadd.f32 0.0, %v560
        %v562 = vpop.f32.mrb[0].mxu0
        %v563 = vadd.f32 0.0, %v562
        %564 = vmatprep.mubr.f32.mxu0 0.0
        %565 = vmatmul.mubr.f32.gmra.mrb[0].mxu0 %v482
        %v566 = vpop.f32.mrb[0].mxu0
        %v567 = vadd.f32 0.0, %v566
        %v568 = vpop.f32.mrb[0].mxu0
        %v569 = vadd.f32 0.0, %v568
        %570 = vmatprep.mubr.f32.mxu0 0.0
        %571 = vmatmul.mubr.f32.gmra.mrb[0].mxu0 %v485
        %v572 = vpop.f32.mrb[0].mxu0
        %v573 = vadd.f32 0.0, %v572
        %v574 = vpop.f32.mrb[0].mxu0
        %v575 = vadd.f32 0.0, %v574
        %576 = vdwg.mxu0
        %v578 = vsel %vm477, %v438, 0
        %v581 = vsel %vm477, %v439, 0
        %v584 = vsel %vm477, %v440, 0
        %v587 = vsel %vm487, %v455, 0
        %v590 = vsel %vm487, %v456, 0
        %592 = vmatprep.subr.mxu0 %v442
        %593 = vmatpush1.msra.mxu0 %v441
        %594 = vmatprep.subr.mxu0 %v444
        %595 = vmatpush1.msra.mxu0 %v443
        %596 = vmatprep.subr.mxu0 %v446
        %597 = vmatpush1.msra.mxu0 %v445
        %598 = vmatprep.subr.mxu0 %v448
        %599 = vmatpush1.msra.mxu0 %v447
        %600 = vmatprep.subr.mxu0 %v450
        %601 = vmatpush1.msra.mxu0 %v449
        %602 = vmatprep.subr.mxu0 %v452
        %603 = vmatpush1.msra.mxu0 %v451
        %604 = vmatprep.subr.mxu0 %v454
        %605 = vmatpush1.msra.mxu0 %v453
        %606 = vmatprep.subr.mxu0 %v590
        %607 = vmatpush1.msra.mxu0 %v587
        %608 = vmatprep.subr.mxu0 0.0
        %609 = vmatpush1.msra.mxu0 0.0
        %610 = vmatprep.subr.mxu0 0.0
        %611 = vmatpush1.msra.mxu0 0.0
        %612 = vmatprep.subr.mxu0 0.0
        %613 = vmatpush1.msra.mxu0 0.0
        %614 = vmatprep.subr.mxu0 0.0
        %615 = vmatpush1.msra.mxu0 0.0
        %616 = vmatprep.subr.mxu0 0.0
        %617 = vmatpush1.msra.mxu0 0.0
        %618 = vmatprep.subr.mxu0 0.0
        %619 = vmatpush1.msra.mxu0 0.0
        %620 = vmatprep.subr.mxu0 0.0
        %621 = vmatpush1.msra.mxu0 0.0
        %622 = vmatprep.subr.mxu0 0.0
        %623 = vmatpush1.msra.mxu0 0.0
        %624 = vmatprep.subr.mxu0 0.0
        %625 = vmatpush1.msra.mxu0 0.0
        %626 = vmatprep.subr.mxu0 0.0
        %627 = vmatpush1.msra.mxu0 0.0
        %628 = vmatprep.subr.mxu0 0.0
        %629 = vmatpush1.msra.mxu0 0.0
        %630 = vmatprep.subr.mxu0 0.0
        %631 = vmatpush1.msra.mxu0 0.0
        %632 = vmatprep.subr.mxu0 0.0
        %633 = vmatpush1.msra.mxu0 0.0
        %634 = vmatprep.subr.mxu0 0.0
        %635 = vmatpush1.msra.mxu0 0.0
        %636 = vmatprep.subr.mxu0 0.0
        %637 = vmatpush1.msra.mxu0 0.0
        %638 = vmatprep.subr.mxu0 0.0
        %639 = vmatpush1.msra.mxu0 0.0
        %640 = vmatprep.subr.mxu0 0.0
        %641 = vmatpush1.msra.mxu0 0.0
        %642 = vmatprep.subr.mxu0 0.0
        %643 = vmatpush1.msra.mxu0 0.0
        %644 = vmatprep.subr.mxu0 0.0
        %645 = vmatpush1.msra.mxu0 0.0
        %646 = vmatprep.subr.mxu0 0.0
        %647 = vmatpush1.msra.mxu0 0.0
        %648 = vmatprep.subr.mxu0 0.0
        %649 = vmatpush1.msra.mxu0 0.0
        %650 = vmatprep.subr.mxu0 0.0
        %651 = vmatpush1.msra.mxu0 0.0
        %652 = vmatprep.subr.mxu0 0.0
        %653 = vmatpush1.msra.mxu0 0.0
        %654 = vmatprep.subr.mxu0 0.0
        %655 = vmatpush1.msra.mxu0 0.0
        %656 = vmatprep.mubr.f32.mxu0 0.0
        %657 = vmatmul.mubr.f32.gmra.mrb[0].mxu0 %v578
        %v658 = vpop.f32.mrb[0].mxu0
        %v659 = vadd.f32 %v561, %v658
        %v660 = vpop.f32.mrb[0].mxu0
        %v661 = vadd.f32 %v563, %v660
        %662 = vmatprep.mubr.f32.mxu0 0.0
        %663 = vmatmul.mubr.f32.gmra.mrb[0].mxu0 %v581
        %v664 = vpop.f32.mrb[0].mxu0
        %v665 = vadd.f32 %v567, %v664
        %v666 = vpop.f32.mrb[0].mxu0
        %v667 = vadd.f32 %v569, %v666
        %668 = vmatprep.mubr.f32.mxu0 0.0
        %669 = vmatmul.mubr.f32.gmra.mrb[0].mxu0 %v584
        %v670 = vpop.f32.mrb[0].mxu0
        %v671 = vadd.f32 %v573, %v670
        %v672 = vpop.f32.mrb[0].mxu0
        %v673 = vadd.f32 %v575, %v672
        %674 = vdwg.mxu0
        %v675 = vld [vmem:[%s437 + $0x2] sm:$0xff]
        %v676 = vld [vmem:[%s437 + $0xa] sm:$0xff]
        %v677 = vld [vmem:[%s437 + $0x12] sm:$0x3]
        %s678 = scalar_lea.vmem %s1, 256
        %v679 = vld [vmem:[%s678] sm:$0xff]
        %v680 = vld [vmem:[%s678 + $0x8] sm:$0xff]
        %v681 = vld [vmem:[%s678 + $0x10] sm:$0xff]
        %v682 = vld [vmem:[%s678 + $0x18] sm:$0xff]
        %v683 = vld [vmem:[%s678 + $0x20] sm:$0xff]
        %v684 = vld [vmem:[%s678 + $0x28] sm:$0xff]
        %v685 = vld [vmem:[%s678 + $0x30] sm:$0xff]
        %v686 = vld [vmem:[%s678 + $0x38] sm:$0xff]
        %v687 = vld [vmem:[%s678 + $0x40] sm:$0xff]
        %v688 = vld [vmem:[%s678 + $0x48] sm:$0xff]
        %v689 = vld [vmem:[%s678 + $0x50] sm:$0xff]
        %v690 = vld [vmem:[%s678 + $0x58] sm:$0xff]
        %v691 = vld [vmem:[%s678 + $0x60] sm:$0xff]
        %v692 = vld [vmem:[%s678 + $0x68] sm:$0xff]
        %v693 = vld [vmem:[%s678 + $0x70] sm:$0xf]
        %v694 = vld [vmem:[%s678 + $0x78] sm:$0xf]
        %v696 = vsel %vm477, %v675, 0
        %v699 = vsel %vm477, %v676, 0
        %v702 = vsel %vm477, %v677, 0
        %v705 = vsel %vm487, %v693, 0
        %v708 = vsel %vm487, %v694, 0
        %710 = vmatprep.subr.mxu0 %v680
        %711 = vmatpush1.msra.mxu0 %v679
        %712 = vmatprep.subr.mxu0 %v682
        %713 = vmatpush1.msra.mxu0 %v681
        %714 = vmatprep.subr.mxu0 %v684
        %715 = vmatpush1.msra.mxu0 %v683
        %716 = vmatprep.subr.mxu0 %v686
        %717 = vmatpush1.msra.mxu0 %v685
        %718 = vmatprep.subr.mxu0 %v688
        %719 = vmatpush1.msra.mxu0 %v687
        %720 = vmatprep.subr.mxu0 %v690
        %721 = vmatpush1.msra.mxu0 %v689
        %722 = vmatprep.subr.mxu0 %v692
        %723 = vmatpush1.msra.mxu0 %v691
        %724 = vmatprep.subr.mxu0 %v708
        %725 = vmatpush1.msra.mxu0 %v705
        %726 = vmatprep.subr.mxu0 0.0
        %727 = vmatpush1.msra.mxu0 0.0
        %728 = vmatprep.subr.mxu0 0.0
        %729 = vmatpush1.msra.mxu0 0.0
        %730 = vmatprep.subr.mxu0 0.0
        %731 = vmatpush1.msra.mxu0 0.0
        %732 = vmatprep.subr.mxu0 0.0
        %733 = vmatpush1.msra.mxu0 0.0
        %734 = vmatprep.subr.mxu0 0.0
        %735 = vmatpush1.msra.mxu0 0.0
        %736 = vmatprep.subr.mxu0 0.0
        %737 = vmatpush1.msra.mxu0 0.0
        %738 = vmatprep.subr.mxu0 0.0
        %739 = vmatpush1.msra.mxu0 0.0
        %740 = vmatprep.subr.mxu0 0.0
        %741 = vmatpush1.msra.mxu0 0.0
        %742 = vmatprep.subr.mxu0 0.0
        %743 = vmatpush1.msra.mxu0 0.0
        %744 = vmatprep.subr.mxu0 0.0
        %745 = vmatpush1.msra.mxu0 0.0
        %746 = vmatprep.subr.mxu0 0.0
        %747 = vmatpush1.msra.mxu0 0.0
        %748 = vmatprep.subr.mxu0 0.0
        %749 = vmatpush1.msra.mxu0 0.0
        %750 = vmatprep.subr.mxu0 0.0
        %751 = vmatpush1.msra.mxu0 0.0
        %752 = vmatprep.subr.mxu0 0.0
        %753 = vmatpush1.msra.mxu0 0.0
        %754 = vmatprep.subr.mxu0 0.0
        %755 = vmatpush1.msra.mxu0 0.0
        %756 = vmatprep.subr.mxu0 0.0
        %757 = vmatpush1.msra.mxu0 0.0
        %758 = vmatprep.subr.mxu0 0.0
        %759 = vmatpush1.msra.mxu0 0.0
        %760 = vmatprep.subr.mxu0 0.0
        %761 = vmatpush1.msra.mxu0 0.0
        %762 = vmatprep.subr.mxu0 0.0
        %763 = vmatpush1.msra.mxu0 0.0
        %764 = vmatprep.subr.mxu0 0.0
        %765 = vmatpush1.msra.mxu0 0.0
        %766 = vmatprep.subr.mxu0 0.0
        %767 = vmatpush1.msra.mxu0 0.0
        %768 = vmatprep.subr.mxu0 0.0
        %769 = vmatpush1.msra.mxu0 0.0
        %770 = vmatprep.subr.mxu0 0.0
        %771 = vmatpush1.msra.mxu0 0.0
        %772 = vmatprep.subr.mxu0 0.0
        %773 = vmatpush1.msra.mxu0 0.0
        %774 = vmatprep.mubr.f32.mxu0 0.0
        %775 = vmatmul.mubr.f32.gmra.mrb[0].mxu0 %v696
        %v776 = vpop.f32.mrb[0].mxu0
        %v777 = vadd.f32 0.0, %v776
        %v778 = vpop.f32.mrb[0].mxu0
        %v779 = vadd.f32 0.0, %v778
        %780 = vmatprep.mubr.f32.mxu0 0.0
        %781 = vmatmul.mubr.f32.gmra.mrb[0].mxu0 %v699
        %v782 = vpop.f32.mrb[0].mxu0
        %v783 = vadd.f32 0.0, %v782
        %v784 = vpop.f32.mrb[0].mxu0
        %v785 = vadd.f32 0.0, %v784
        %786 = vmatprep.mubr.f32.mxu0 0.0
        %787 = vmatmul.mubr.f32.gmra.mrb[0].mxu0 %v702
        %v788 = vpop.f32.mrb[0].mxu0
        %v789 = vadd.f32 0.0, %v788
        %v790 = vpop.f32.mrb[0].mxu0
        %v791 = vadd.f32 0.0, %v790
        %792 = vdwg.mxu0
        %v793 = vadd.f32 %v659, %v777
        %v794 = vadd.f32 %v661, %v779
        %v795 = vadd.f32 %v665, %v783
        %v796 = vadd.f32 %v667, %v785
        %v797 = vadd.f32 %v671, %v789
        %v798 = vadd.f32 %v673, %v791
        %v799 = vld [vmem:[%s2] sm:$0x3]
        %v801 = vlaneseq
        %v802 = vshrl.u32 %v801, 7
        %v803 = vsub.s32 0, %v802
        %v804 = vrot.slane %v799, %v803
        %v805 = vlaneseq
        %v806 = vshrl.u32 %v805, 7
        %v807 = vsub.s32 1, %v806
        %v808 = vrot.slane %v799, %v807
        %v811 = vadd.f32 %v793, %v804
        %v812 = vadd.f32 %v794, %v808
        %v813 = vadd.f32 %v795, %v804
        %v814 = vadd.f32 %v796, %v808
        %v815 = vadd.f32 %v797, %v804
        %v816 = vadd.f32 %v798, %v808
        %817 = vst [vmem:[#allocation2] sm:$0xff] %v811
        %vm818 = vcmask 130048
        %819 = vst.msk [vmem:[#allocation2 + $0x8] sm:$0xff] %vm818, %v812
        %820 = vst [vmem:[#allocation2 + $0x10] sm:$0xff] %v813
        %821 = vst.msk [vmem:[#allocation2 + $0x18] sm:$0xff] %vm818, %v814
        %822 = vst [vmem:[#allocation2 + $0x20] sm:$0x3] %v815
        %vm823 = vcmask 123904
        %824 = vst.msk [vmem:[#allocation2 + $0x28] sm:$0x3] %vm823, %v816
        %v825 = vld [vmem:[#allocation2] sm:$0xff]
        %v826 = vld [vmem:[#allocation2 + $0x8] sm:$0xff]
        %v827 = vld [vmem:[#allocation2 + $0x10] sm:$0xff]
        %v828 = vld [vmem:[#allocation2 + $0x18] sm:$0xff]
        %v829 = vld [vmem:[%s3] sm:$0xff]
        %v830 = vld [vmem:[%s3 + $0x8] sm:$0xff]
        %v831 = vld [vmem:[%s3 + $0x10] sm:$0xff]
        %v832 = vld [vmem:[%s3 + $0x18] sm:$0xff]
        %v833 = vld [vmem:[%s3 + $0x20] sm:$0xff]
        %v834 = vld [vmem:[%s3 + $0x28] sm:$0xff]
        %v835 = vld [vmem:[%s3 + $0x30] sm:$0xff]
        %v836 = vld [vmem:[%s3 + $0x38] sm:$0xff]
        %v837 = vld [vmem:[%s3 + $0x40] sm:$0xff]
        %v838 = vld [vmem:[%s3 + $0x48] sm:$0xff]
        %v839 = vld [vmem:[%s3 + $0x50] sm:$0xff]
        %v840 = vld [vmem:[%s3 + $0x58] sm:$0xff]
        %v841 = vld [vmem:[%s3 + $0x60] sm:$0xff]
        %v842 = vld [vmem:[%s3 + $0x68] sm:$0xff]
        %v843 = vld [vmem:[%s3 + $0x70] sm:$0xff]
        %v844 = vld [vmem:[%s3 + $0x78] sm:$0xff]
        %v845 = vld [vmem:[%s3 + $0x80] sm:$0xff]
        %v846 = vld [vmem:[%s3 + $0x88] sm:$0xff]
        %v847 = vld [vmem:[#allocation2] sm:$0xfe]
        %v848 = vld [vmem:[#allocation2 + $0x8] sm:$0xfe]
        %v849 = vld [vmem:[#allocation2 + $0x20] sm:$0x1]
        %v850 = vld [vmem:[#allocation2 + $0x28] sm:$0x1]
        %s851 = scalar_lea.vmem %s3, 144
        %v852 = vld [vmem:[%s851] sm:$0xff]
        %v853 = vld [vmem:[%s851 + $0x8] sm:$0xff]
        %v854 = vld [vmem:[%s851 + $0x10] sm:$0xff]
        %v855 = vld [vmem:[%s851 + $0x18] sm:$0xff]
        %v856 = vld [vmem:[%s851 + $0x20] sm:$0xff]
        %v857 = vld [vmem:[%s851 + $0x28] sm:$0xff]
        %v858 = vld [vmem:[%s851 + $0x30] sm:$0xff]
        %v859 = vld [vmem:[%s851 + $0x38] sm:$0xff]
        %v860 = vld [vmem:[%s851 + $0x40] sm:$0xff]
        %v861 = vld [vmem:[%s851 + $0x48] sm:$0xff]
        %v862 = vld [vmem:[%s851 + $0x50] sm:$0xff]
        %v863 = vld [vmem:[%s851 + $0x58] sm:$0xff]
        %v864 = vld [vmem:[%s851 + $0x60] sm:$0xff]
        %v865 = vld [vmem:[%s851 + $0x68] sm:$0xff]
        %v866 = vld [vmem:[%s851 + $0x70] sm:$0xff]
        %v867 = vld [vmem:[%s851 + $0x78] sm:$0xff]
        %v868 = vld [vmem:[%s851 + $0x80] sm:$0xff]
        %v869 = vld [vmem:[%s851 + $0x88] sm:$0xff]
        %vm876 = vcmask 1046528
        %v877 = vrot.slane %v847, 1
        %v878 = vrot.slane %v827, 1
        %v879 = vsel %vm876, %v877, %v878
        %v880 = vrot.slane %v848, 1
        %v881 = vrot.slane %v828, 1
        %v882 = vsel %vm876, %v880, %v881
        %v883 = vrot.slane %v849, 1
        %v884 = vsel %vm876, %v878, %v883
        %v885 = vrot.slane %v850, 1
        %v886 = vsel %vm876, %v881, %v885
        %v889 = vsel %vm818, %v882, 0
        %v891 = vsel %vm818, %v886, 0
        %893 = vmatprep.subr.mxu0 0.0
        %894 = vmatpush1.msra.mxu0 %v852
        %895 = vmatprep.subr.mxu0 0.0
        %896 = vmatpush1.msra.mxu0 %v853
        %897 = vmatprep.subr.mxu0 0.0
        %898 = vmatpush1.msra.mxu0 %v854
        %899 = vmatprep.subr.mxu0 0.0
        %900 = vmatpush1.msra.mxu0 %v855
        %901 = vmatprep.subr.mxu0 0.0
        %902 = vmatpush1.msra.mxu0 %v856
        %903 = vmatprep.subr.mxu0 0.0
        %904 = vmatpush1.msra.mxu0 %v857
        %905 = vmatprep.subr.mxu0 0.0
        %906 = vmatpush1.msra.mxu0 %v858
        %907 = vmatprep.subr.mxu0 0.0
        %908 = vmatpush1.msra.mxu0 %v859
        %909 = vmatprep.subr.mxu0 0.0
        %910 = vmatpush1.msra.mxu0 %v860
        %911 = vmatprep.subr.mxu0 0.0
        %912 = vmatpush1.msra.mxu0 %v861
        %913 = vmatprep.subr.mxu0 0.0
        %914 = vmatpush1.msra.mxu0 %v862
        %915 = vmatprep.subr.mxu0 0.0
        %916 = vmatpush1.msra.mxu0 %v863
        %917 = vmatprep.subr.mxu0 0.0
        %918 = vmatpush1.msra.mxu0 %v864
        %919 = vmatprep.subr.mxu0 0.0
        %920 = vmatpush1.msra.mxu0 %v865
        %921 = vmatprep.subr.mxu0 0.0
        %922 = vmatpush1.msra.mxu0 %v866
        %923 = vmatprep.subr.mxu0 0.0
        %924 = vmatpush1.msra.mxu0 %v867
        %925 = vmatprep.subr.mxu0 0.0
        %926 = vmatpush1.msra.mxu0 %v868
        %927 = vmatprep.subr.mxu0 0.0
        %928 = vmatpush1.msra.mxu0 %v869
        %929 = vmatprep.subr.mxu0 0.0
        %930 = vmatpush1.msra.mxu0 0.0
        %931 = vmatprep.subr.mxu0 0.0
        %932 = vmatpush1.msra.mxu0 0.0
        %933 = vmatprep.subr.mxu0 0.0
        %934 = vmatpush1.msra.mxu0 0.0
        %935 = vmatprep.subr.mxu0 0.0
        %936 = vmatpush1.msra.mxu0 0.0
        %937 = vmatprep.subr.mxu0 0.0
        %938 = vmatpush1.msra.mxu0 0.0
        %939 = vmatprep.subr.mxu0 0.0
        %940 = vmatpush1.msra.mxu0 0.0
        %941 = vmatprep.subr.mxu0 0.0
        %942 = vmatpush1.msra.mxu0 0.0
        %943 = vmatprep.subr.mxu0 0.0
        %944 = vmatpush1.msra.mxu0 0.0
        %945 = vmatprep.subr.mxu0 0.0
        %946 = vmatpush1.msra.mxu0 0.0
        %947 = vmatprep.subr.mxu0 0.0
        %948 = vmatpush1.msra.mxu0 0.0
        %949 = vmatprep.subr.mxu0 0.0
        %950 = vmatpush1.msra.mxu0 0.0
        %951 = vmatprep.subr.mxu0 0.0
        %952 = vmatpush1.msra.mxu0 0.0
        %953 = vmatprep.subr.mxu0 0.0
        %954 = vmatpush1.msra.mxu0 0.0
        %955 = vmatprep.subr.mxu0 0.0
        %956 = vmatpush1.msra.mxu0 0.0
        %957 = vmatprep.mubr.f32.mxu0 %v889
        %958 = vmatmul.mubr.f32.gmra.mrb[0].mxu0 %v879
        %v959 = vpop.f32.mrb[0].mxu0
        %v960 = vadd.f32 0.0, %v959
        %v961 = vpop.f32.mrb[0].mxu0
        %962 = vmatprep.mubr.f32.mxu0 %v891
        %963 = vmatmul.mubr.f32.gmra.mrb[0].mxu0 %v884
        %v964 = vpop.f32.mrb[0].mxu0
        %v965 = vadd.f32 0.0, %v964
        %v966 = vpop.f32.mrb[0].mxu0
        %967 = vdwg.mxu0
        %v969 = vsel %vm818, %v826, 0
        %v971 = vsel %vm818, %v828, 0
        %973 = vmatprep.subr.mxu0 0.0
        %974 = vmatpush1.msra.mxu0 %v829
        %975 = vmatprep.subr.mxu0 0.0
        %976 = vmatpush1.msra.mxu0 %v830
        %977 = vmatprep.subr.mxu0 0.0
        %978 = vmatpush1.msra.mxu0 %v831
        %979 = vmatprep.subr.mxu0 0.0
        %980 = vmatpush1.msra.mxu0 %v832
        %981 = vmatprep.subr.mxu0 0.0
        %982 = vmatpush1.msra.mxu0 %v833
        %983 = vmatprep.subr.mxu0 0.0
        %984 = vmatpush1.msra.mxu0 %v834
        %985 = vmatprep.subr.mxu0 0.0
        %986 = vmatpush1.msra.mxu0 %v835
        %987 = vmatprep.subr.mxu0 0.0
        %988 = vmatpush1.msra.mxu0 %v836
        %989 = vmatprep.subr.mxu0 0.0
        %990 = vmatpush1.msra.mxu0 %v837
        %991 = vmatprep.subr.mxu0 0.0
        %992 = vmatpush1.msra.mxu0 %v838
        %993 = vmatprep.subr.mxu0 0.0
        %994 = vmatpush1.msra.mxu0 %v839
        %995 = vmatprep.subr.mxu0 0.0
        %996 = vmatpush1.msra.mxu0 %v840
        %997 = vmatprep.subr.mxu0 0.0
        %998 = vmatpush1.msra.mxu0 %v841
        %999 = vmatprep.subr.mxu0 0.0
        %1000 = vmatpush1.msra.mxu0 %v842
        %1001 = vmatprep.subr.mxu0 0.0
        %1002 = vmatpush1.msra.mxu0 %v843
        %1003 = vmatprep.subr.mxu0 0.0
        %1004 = vmatpush1.msra.mxu0 %v844
        %1005 = vmatprep.subr.mxu0 0.0
        %1006 = vmatpush1.msra.mxu0 %v845
        %1007 = vmatprep.subr.mxu0 0.0
        %1008 = vmatpush1.msra.mxu0 %v846
        %1009 = vmatprep.subr.mxu0 0.0
        %1010 = vmatpush1.msra.mxu0 0.0
        %1011 = vmatprep.subr.mxu0 0.0
        %1012 = vmatpush1.msra.mxu0 0.0
        %1013 = vmatprep.subr.mxu0 0.0
        %1014 = vmatpush1.msra.mxu0 0.0
        %1015 = vmatprep.subr.mxu0 0.0
        %1016 = vmatpush1.msra.mxu0 0.0
        %1017 = vmatprep.subr.mxu0 0.0
        %1018 = vmatpush1.msra.mxu0 0.0
        %1019 = vmatprep.subr.mxu0 0.0
        %1020 = vmatpush1.msra.mxu0 0.0
        %1021 = vmatprep.subr.mxu0 0.0
        %1022 = vmatpush1.msra.mxu0 0.0
        %1023 = vmatprep.subr.mxu0 0.0
        %1024 = vmatpush1.msra.mxu0 0.0
        %1025 = vmatprep.subr.mxu0 0.0
        %1026 = vmatpush1.msra.mxu0 0.0
        %1027 = vmatprep.subr.mxu0 0.0
        %1028 = vmatpush1.msra.mxu0 0.0
        %1029 = vmatprep.subr.mxu0 0.0
        %1030 = vmatpush1.msra.mxu0 0.0
        %1031 = vmatprep.subr.mxu0 0.0
        %1032 = vmatpush1.msra.mxu0 0.0
        %1033 = vmatprep.subr.mxu0 0.0
        %1034 = vmatpush1.msra.mxu0 0.0
        %1035 = vmatprep.subr.mxu0 0.0
        %1036 = vmatpush1.msra.mxu0 0.0
        %1037 = vmatprep.mubr.f32.mxu0 %v969
        %1038 = vmatmul.mubr.f32.gmra.mrb[0].mxu0 %v825
        %v1039 = vpop.f32.mrb[0].mxu0
        %v1040 = vadd.f32 %v960, %v1039
        %v1041 = vpop.f32.mrb[0].mxu0
        %1042 = vmatprep.mubr.f32.mxu0 %v971
        %1043 = vmatmul.mubr.f32.gmra.mrb[0].mxu0 %v827
        %v1044 = vpop.f32.mrb[0].mxu0
        %v1045 = vadd.f32 %v965, %v1044
        %v1046 = vpop.f32.mrb[0].mxu0
        %1047 = vdwg.mxu0
        %v1048 = vld [vmem:[#allocation2] sm:$0xfc]
        %v1049 = vld [vmem:[#allocation2 + $0x8] sm:$0xfc]
        %v1050 = vld [vmem:[#allocation2 + $0x20] sm:$0x3]
        %v1051 = vld [vmem:[#allocation2 + $0x28] sm:$0x3]
        %s1052 = scalar_lea.vmem %s3, 288
        %v1053 = vld [vmem:[%s1052] sm:$0xff]
        %v1054 = vld [vmem:[%s1052 + $0x8] sm:$0xff]
        %v1055 = vld [vmem:[%s1052 + $0x10] sm:$0xff]
        %v1056 = vld [vmem:[%s1052 + $0x18] sm:$0xff]
        %v1057 = vld [vmem:[%s1052 + $0x20] sm:$0xff]
        %v1058 = vld [vmem:[%s1052 + $0x28] sm:$0xff]
        %v1059 = vld [vmem:[%s1052 + $0x30] sm:$0xff]
        %v1060 = vld [vmem:[%s1052 + $0x38] sm:$0xff]
        %v1061 = vld [vmem:[%s1052 + $0x40] sm:$0xff]
        %v1062 = vld [vmem:[%s1052 + $0x48] sm:$0xff]
        %v1063 = vld [vmem:[%s1052 + $0x50] sm:$0xff]
        %v1064 = vld [vmem:[%s1052 + $0x58] sm:$0xff]
        %v1065 = vld [vmem:[%s1052 + $0x60] sm:$0xff]
        %v1066 = vld [vmem:[%s1052 + $0x68] sm:$0xff]
        %v1067 = vld [vmem:[%s1052 + $0x70] sm:$0xff]
        %v1068 = vld [vmem:[%s1052 + $0x78] sm:$0xff]
        %v1069 = vld [vmem:[%s1052 + $0x80] sm:$0xff]
        %v1070 = vld [vmem:[%s1052 + $0x88] sm:$0xff]
        %vm1075 = vcmask 1045504
        %v1076 = vrot.slane %v1048, 2
        %v1077 = vrot.slane %v827, 2
        %v1078 = vsel %vm1075, %v1076, %v1077
        %v1079 = vrot.slane %v1049, 2
        %v1080 = vrot.slane %v828, 2
        %v1081 = vsel %vm1075, %v1079, %v1080
        %v1082 = vrot.slane %v1050, 2
        %v1083 = vsel %vm1075, %v1077, %v1082
        %v1084 = vrot.slane %v1051, 2
        %v1085 = vsel %vm1075, %v1080, %v1084
        %v1088 = vsel %vm818, %v1081, 0
        %v1090 = vsel %vm818, %v1085, 0
        %1092 = vmatprep.subr.mxu0 0.0
        %1093 = vmatpush1.msra.mxu0 %v1053
        %1094 = vmatprep.subr.mxu0 0.0
        %1095 = vmatpush1.msra.mxu0 %v1054
        %1096 = vmatprep.subr.mxu0 0.0
        %1097 = vmatpush1.msra.mxu0 %v1055
        %1098 = vmatprep.subr.mxu0 0.0
        %1099 = vmatpush1.msra.mxu0 %v1056
        %1100 = vmatprep.subr.mxu0 0.0
        %1101 = vmatpush1.msra.mxu0 %v1057
        %1102 = vmatprep.subr.mxu0 0.0
        %1103 = vmatpush1.msra.mxu0 %v1058
        %1104 = vmatprep.subr.mxu0 0.0
        %1105 = vmatpush1.msra.mxu0 %v1059
        %1106 = vmatprep.subr.mxu0 0.0
        %1107 = vmatpush1.msra.mxu0 %v1060
        %1108 = vmatprep.subr.mxu0 0.0
        %1109 = vmatpush1.msra.mxu0 %v1061
        %1110 = vmatprep.subr.mxu0 0.0
        %1111 = vmatpush1.msra.mxu0 %v1062
        %1112 = vmatprep.subr.mxu0 0.0
        %1113 = vmatpush1.msra.mxu0 %v1063
        %1114 = vmatprep.subr.mxu0 0.0
        %1115 = vmatpush1.msra.mxu0 %v1064
        %1116 = vmatprep.subr.mxu0 0.0
        %1117 = vmatpush1.msra.mxu0 %v1065
        %1118 = vmatprep.subr.mxu0 0.0
        %1119 = vmatpush1.msra.mxu0 %v1066
        %1120 = vmatprep.subr.mxu0 0.0
        %1121 = vmatpush1.msra.mxu0 %v1067
        %1122 = vmatprep.subr.mxu0 0.0
        %1123 = vmatpush1.msra.mxu0 %v1068
        %1124 = vmatprep.subr.mxu0 0.0
        %1125 = vmatpush1.msra.mxu0 %v1069
        %1126 = vmatprep.subr.mxu0 0.0
        %1127 = vmatpush1.msra.mxu0 %v1070
        %1128 = vmatprep.subr.mxu0 0.0
        %1129 = vmatpush1.msra.mxu0 0.0
        %1130 = vmatprep.subr.mxu0 0.0
        %1131 = vmatpush1.msra.mxu0 0.0
        %1132 = vmatprep.subr.mxu0 0.0
        %1133 = vmatpush1.msra.mxu0 0.0
        %1134 = vmatprep.subr.mxu0 0.0
        %1135 = vmatpush1.msra.mxu0 0.0
        %1136 = vmatprep.subr.mxu0 0.0
        %1137 = vmatpush1.msra.mxu0 0.0
        %1138 = vmatprep.subr.mxu0 0.0
        %1139 = vmatpush1.msra.mxu0 0.0
        %1140 = vmatprep.subr.mxu0 0.0
        %1141 = vmatpush1.msra.mxu0 0.0
        %1142 = vmatprep.subr.mxu0 0.0
        %1143 = vmatpush1.msra.mxu0 0.0
        %1144 = vmatprep.subr.mxu0 0.0
        %1145 = vmatpush1.msra.mxu0 0.0
        %1146 = vmatprep.subr.mxu0 0.0
        %1147 = vmatpush1.msra.mxu0 0.0
        %1148 = vmatprep.subr.mxu0 0.0
        %1149 = vmatpush1.msra.mxu0 0.0
        %1150 = vmatprep.subr.mxu0 0.0
        %1151 = vmatpush1.msra.mxu0 0.0
        %1152 = vmatprep.subr.mxu0 0.0
        %1153 = vmatpush1.msra.mxu0 0.0
        %1154 = vmatprep.subr.mxu0 0.0
        %1155 = vmatpush1.msra.mxu0 0.0
        %1156 = vmatprep.mubr.f32.mxu0 %v1088
        %1157 = vmatmul.mubr.f32.gmra.mrb[0].mxu0 %v1078
        %v1158 = vpop.f32.mrb[0].mxu0
        %v1159 = vadd.f32 0.0, %v1158
        %v1160 = vpop.f32.mrb[0].mxu0
        %1161 = vmatprep.mubr.f32.mxu0 %v1090
        %1162 = vmatmul.mubr.f32.gmra.mrb[0].mxu0 %v1083
        %v1163 = vpop.f32.mrb[0].mxu0
        %v1164 = vadd.f32 0.0, %v1163
        %v1165 = vpop.f32.mrb[0].mxu0
        %1166 = vdwg.mxu0
        %v1167 = vadd.f32 %v1040, %v1159
        %v1168 = vadd.f32 %v1045, %v1164
        %v1169 = vld [vmem:[%s4] sm:$0x1]
        %v1171 = vlaneseq
        %v1172 = vshrl.u32 %v1171, 7
        %v1173 = vsub.s32 0, %v1172
        %v1174 = vrot.slane %v1169, %v1173
        %v1176 = vadd.f32 %v1167, %v1174
        %v1177 = vadd.f32 %v1168, %v1174
        %v1178 = vmax.f32 %v1176, 0.0
        %v1179 = vmax.f32 %v1177, 0.0
        %1180 = vst [vmem:[#allocation3] sm:$0xff] %v1178
        %1181 = vst [vmem:[#allocation3 + $0x8] sm:$0xff] %v1179
        %v1182 = vld [vmem:[#allocation3] sm:$0xff]
        %v1183 = vld [vmem:[#allocation3 + $0x8] sm:$0x3f]
        %v1184 = vld [vmem:[%s5] sm:$0xff]
        %v1185 = vld [vmem:[%s5 + $0x8] sm:$0xff]
        %v1186 = vld [vmem:[%s5 + $0x10] sm:$0xff]
        %v1187 = vld [vmem:[%s5 + $0x18] sm:$0xff]
        %v1188 = vld [vmem:[%s5 + $0x20] sm:$0xff]
        %v1189 = vld [vmem:[%s5 + $0x28] sm:$0xff]
        %v1190 = vld [vmem:[%s5 + $0x30] sm:$0xff]
        %v1191 = vld [vmem:[%s5 + $0x38] sm:$0xff]
        %v1192 = vld [vmem:[%s5 + $0x40] sm:$0xff]
        %v1193 = vld [vmem:[%s5 + $0x48] sm:$0xff]
        %v1194 = vld [vmem:[%s5 + $0x50] sm:$0xff]
        %v1195 = vld [vmem:[%s5 + $0x58] sm:$0xff]
        %v1196 = vld [vmem:[%s5 + $0x60] sm:$0xff]
        %v1197 = vld [vmem:[%s5 + $0x68] sm:$0xff]
        %v1198 = vld [vmem:[%s5 + $0x70] sm:$0xff]
        %v1199 = vld [vmem:[%s5 + $0x78] sm:$0xff]
        %v1200 = vld [vmem:[%s5 + $0x80] sm:$0xff]
        %v1201 = vld [vmem:[%s5 + $0x88] sm:$0xff]
        %v1202 = vld [vmem:[%s5 + $0x90] sm:$0xff]
        %v1203 = vld [vmem:[%s5 + $0x98] sm:$0xff]
        %v1204 = vld [vmem:[%s5 + $0xa0] sm:$0xff]
        %v1205 = vld [vmem:[%s5 + $0xa8] sm:$0xff]
        %v1206 = vld [vmem:[%s5 + $0xb0] sm:$0xff]
        %v1207 = vld [vmem:[%s5 + $0xb8] sm:$0xff]
        %v1208 = vld [vmem:[%s5 + $0xc0] sm:$0xff]
        %v1209 = vld [vmem:[%s5 + $0xc8] sm:$0xff]
        %v1210 = vld [vmem:[%s5 + $0xd0] sm:$0xff]
        %v1211 = vld [vmem:[%s5 + $0xd8] sm:$0xff]
        %v1212 = vld [vmem:[%s5 + $0xe0] sm:$0xff]
        %v1213 = vld [vmem:[%s5 + $0xe8] sm:$0xff]
        %v1214 = vld [vmem:[%s5 + $0xf0] sm:$0xff]
        %v1215 = vld [vmem:[%s5 + $0xf8] sm:$0xff]
        %v1216 = vld [vmem:[#allocation3 + $0x1] sm:$0xff]
        %v1217 = vld [vmem:[#allocation3 + $0x9] sm:$0x3f]
        %s1218 = scalar_lea.vmem %s5, 256
        %v1219 = vld [vmem:[%s1218] sm:$0xff]
        %v1220 = vld [vmem:[%s1218 + $0x8] sm:$0xff]
        %v1221 = vld [vmem:[%s1218 + $0x10] sm:$0xff]
        %v1222 = vld [vmem:[%s1218 + $0x18] sm:$0xff]
        %v1223 = vld [vmem:[%s1218 + $0x20] sm:$0xff]
        %v1224 = vld [vmem:[%s1218 + $0x28] sm:$0xff]
        %v1225 = vld [vmem:[%s1218 + $0x30] sm:$0xff]
        %v1226 = vld [vmem:[%s1218 + $0x38] sm:$0xff]
        %v1227 = vld [vmem:[%s1218 + $0x40] sm:$0xff]
        %v1228 = vld [vmem:[%s1218 + $0x48] sm:$0xff]
        %v1229 = vld [vmem:[%s1218 + $0x50] sm:$0xff]
        %v1230 = vld [vmem:[%s1218 + $0x58] sm:$0xff]
        %v1231 = vld [vmem:[%s1218 + $0x60] sm:$0xff]
        %v1232 = vld [vmem:[%s1218 + $0x68] sm:$0xff]
        %v1233 = vld [vmem:[%s1218 + $0x70] sm:$0xff]
        %v1234 = vld [vmem:[%s1218 + $0x78] sm:$0xff]
        %v1235 = vld [vmem:[%s1218 + $0x80] sm:$0xff]
        %v1236 = vld [vmem:[%s1218 + $0x88] sm:$0xff]
        %v1237 = vld [vmem:[%s1218 + $0x90] sm:$0xff]
        %v1238 = vld [vmem:[%s1218 + $0x98] sm:$0xff]
        %v1239 = vld [vmem:[%s1218 + $0xa0] sm:$0xff]
        %v1240 = vld [vmem:[%s1218 + $0xa8] sm:$0xff]
        %v1241 = vld [vmem:[%s1218 + $0xb0] sm:$0xff]
        %v1242 = vld [vmem:[%s1218 + $0xb8] sm:$0xff]
        %v1243 = vld [vmem:[%s1218 + $0xc0] sm:$0xff]
        %v1244 = vld [vmem:[%s1218 + $0xc8] sm:$0xff]
        %v1245 = vld [vmem:[%s1218 + $0xd0] sm:$0xff]
        %v1246 = vld [vmem:[%s1218 + $0xd8] sm:$0xff]
        %v1247 = vld [vmem:[%s1218 + $0xe0] sm:$0xff]
        %v1248 = vld [vmem:[%s1218 + $0xe8] sm:$0xff]
        %v1249 = vld [vmem:[%s1218 + $0xf0] sm:$0xff]
        %v1250 = vld [vmem:[%s1218 + $0xf8] sm:$0xff]
        %1251 = vmatprep.subr.mxu0 %v1220
        %1252 = vmatpush1.msra.mxu0 %v1219
        %1253 = vmatprep.subr.mxu0 %v1222
        %1254 = vmatpush1.msra.mxu0 %v1221
        %1255 = vmatprep.subr.mxu0 %v1224
        %1256 = vmatpush1.msra.mxu0 %v1223
        %1257 = vmatprep.subr.mxu0 %v1226
        %1258 = vmatpush1.msra.mxu0 %v1225
        %1259 = vmatprep.subr.mxu0 %v1228
        %1260 = vmatpush1.msra.mxu0 %v1227
        %1261 = vmatprep.subr.mxu0 %v1230
        %1262 = vmatpush1.msra.mxu0 %v1229
        %1263 = vmatprep.subr.mxu0 %v1232
        %1264 = vmatpush1.msra.mxu0 %v1231
        %1265 = vmatprep.subr.mxu0 %v1234
        %1266 = vmatpush1.msra.mxu0 %v1233
        %1267 = vmatprep.subr.mxu0 %v1236
        %1268 = vmatpush1.msra.mxu0 %v1235
        %1269 = vmatprep.subr.mxu0 %v1238
        %1270 = vmatpush1.msra.mxu0 %v1237
        %1271 = vmatprep.subr.mxu0 %v1240
        %1272 = vmatpush1.msra.mxu0 %v1239
        %1273 = vmatprep.subr.mxu0 %v1242
        %1274 = vmatpush1.msra.mxu0 %v1241
        %1275 = vmatprep.subr.mxu0 %v1244
        %1276 = vmatpush1.msra.mxu0 %v1243
        %1277 = vmatprep.subr.mxu0 %v1246
        %1278 = vmatpush1.msra.mxu0 %v1245
        %1279 = vmatprep.subr.mxu0 %v1248
        %1280 = vmatpush1.msra.mxu0 %v1247
        %1281 = vmatprep.subr.mxu0 %v1250
        %1282 = vmatpush1.msra.mxu0 %v1249
        %1283 = vmatprep.subr.mxu0 0.0
        %1284 = vmatpush1.msra.mxu0 0.0
        %1285 = vmatprep.subr.mxu0 0.0
        %1286 = vmatpush1.msra.mxu0 0.0
        %1287 = vmatprep.subr.mxu0 0.0
        %1288 = vmatpush1.msra.mxu0 0.0
        %1289 = vmatprep.subr.mxu0 0.0
        %1290 = vmatpush1.msra.mxu0 0.0
        %1291 = vmatprep.subr.mxu0 0.0
        %1292 = vmatpush1.msra.mxu0 0.0
        %1293 = vmatprep.subr.mxu0 0.0
        %1294 = vmatpush1.msra.mxu0 0.0
        %1295 = vmatprep.subr.mxu0 0.0
        %1296 = vmatpush1.msra.mxu0 0.0
        %1297 = vmatprep.subr.mxu0 0.0
        %1298 = vmatpush1.msra.mxu0 0.0
        %1299 = vmatprep.subr.mxu0 0.0
        %1300 = vmatpush1.msra.mxu0 0.0
        %1301 = vmatprep.subr.mxu0 0.0
        %1302 = vmatpush1.msra.mxu0 0.0
        %1303 = vmatprep.subr.mxu0 0.0
        %1304 = vmatpush1.msra.mxu0 0.0
        %1305 = vmatprep.subr.mxu0 0.0
        %1306 = vmatpush1.msra.mxu0 0.0
        %1307 = vmatprep.subr.mxu0 0.0
        %1308 = vmatpush1.msra.mxu0 0.0
        %1309 = vmatprep.subr.mxu0 0.0
        %1310 = vmatpush1.msra.mxu0 0.0
        %1311 = vmatprep.subr.mxu0 0.0
        %1312 = vmatpush1.msra.mxu0 0.0
        %1313 = vmatprep.subr.mxu0 0.0
        %1314 = vmatpush1.msra.mxu0 0.0
        %1315 = vmatprep.mubr.f32.mxu0 0.0
        %1316 = vmatmul.mubr.f32.gmra.mrb[0].mxu0 %v1216
        %v1317 = vpop.f32.mrb[0].mxu0
        %v1318 = vadd.f32 0.0, %v1317
        %v1319 = vpop.f32.mrb[0].mxu0
        %v1320 = vadd.f32 0.0, %v1319
        %1321 = vmatprep.mubr.f32.mxu0 0.0
        %1322 = vmatmul.mubr.f32.gmra.mrb[0].mxu0 %v1217
        %v1323 = vpop.f32.mrb[0].mxu0
        %v1324 = vadd.f32 0.0, %v1323
        %v1325 = vpop.f32.mrb[0].mxu0
        %v1326 = vadd.f32 0.0, %v1325
        %1327 = vdwg.mxu0
        %1328 = vmatprep.subr.mxu0 %v1185
        %1329 = vmatpush1.msra.mxu0 %v1184
        %1330 = vmatprep.subr.mxu0 %v1187
        %1331 = vmatpush1.msra.mxu0 %v1186
        %1332 = vmatprep.subr.mxu0 %v1189
        %1333 = vmatpush1.msra.mxu0 %v1188
        %1334 = vmatprep.subr.mxu0 %v1191
        %1335 = vmatpush1.msra.mxu0 %v1190
        %1336 = vmatprep.subr.mxu0 %v1193
        %1337 = vmatpush1.msra.mxu0 %v1192
        %1338 = vmatprep.subr.mxu0 %v1195
        %1339 = vmatpush1.msra.mxu0 %v1194
        %1340 = vmatprep.subr.mxu0 %v1197
        %1341 = vmatpush1.msra.mxu0 %v1196
        %1342 = vmatprep.subr.mxu0 %v1199
        %1343 = vmatpush1.msra.mxu0 %v1198
        %1344 = vmatprep.subr.mxu0 %v1201
        %1345 = vmatpush1.msra.mxu0 %v1200
        %1346 = vmatprep.subr.mxu0 %v1203
        %1347 = vmatpush1.msra.mxu0 %v1202
        %1348 = vmatprep.subr.mxu0 %v1205
        %1349 = vmatpush1.msra.mxu0 %v1204
        %1350 = vmatprep.subr.mxu0 %v1207
        %1351 = vmatpush1.msra.mxu0 %v1206
        %1352 = vmatprep.subr.mxu0 %v1209
        %1353 = vmatpush1.msra.mxu0 %v1208
        %1354 = vmatprep.subr.mxu0 %v1211
        %1355 = vmatpush1.msra.mxu0 %v1210
        %1356 = vmatprep.subr.mxu0 %v1213
        %1357 = vmatpush1.msra.mxu0 %v1212
        %1358 = vmatprep.subr.mxu0 %v1215
        %1359 = vmatpush1.msra.mxu0 %v1214
        %1360 = vmatprep.subr.mxu0 0.0
        %1361 = vmatpush1.msra.mxu0 0.0
        %1362 = vmatprep.subr.mxu0 0.0
        %1363 = vmatpush1.msra.mxu0 0.0
        %1364 = vmatprep.subr.mxu0 0.0
        %1365 = vmatpush1.msra.mxu0 0.0
        %1366 = vmatprep.subr.mxu0 0.0
        %1367 = vmatpush1.msra.mxu0 0.0
        %1368 = vmatprep.subr.mxu0 0.0
        %1369 = vmatpush1.msra.mxu0 0.0
        %1370 = vmatprep.subr.mxu0 0.0
        %1371 = vmatpush1.msra.mxu0 0.0
        %1372 = vmatprep.subr.mxu0 0.0
        %1373 = vmatpush1.msra.mxu0 0.0
        %1374 = vmatprep.subr.mxu0 0.0
        %1375 = vmatpush1.msra.mxu0 0.0
        %1376 = vmatprep.subr.mxu0 0.0
        %1377 = vmatpush1.msra.mxu0 0.0
        %1378 = vmatprep.subr.mxu0 0.0
        %1379 = vmatpush1.msra.mxu0 0.0
        %1380 = vmatprep.subr.mxu0 0.0
        %1381 = vmatpush1.msra.mxu0 0.0
        %1382 = vmatprep.subr.mxu0 0.0
        %1383 = vmatpush1.msra.mxu0 0.0
        %1384 = vmatprep.subr.mxu0 0.0
        %1385 = vmatpush1.msra.mxu0 0.0
        %1386 = vmatprep.subr.mxu0 0.0
        %1387 = vmatpush1.msra.mxu0 0.0
        %1388 = vmatprep.subr.mxu0 0.0
        %1389 = vmatpush1.msra.mxu0 0.0
        %1390 = vmatprep.subr.mxu0 0.0
        %1391 = vmatpush1.msra.mxu0 0.0
        %1392 = vmatprep.mubr.f32.mxu0 0.0
        %1393 = vmatmul.mubr.f32.gmra.mrb[0].mxu0 %v1182
        %v1394 = vpop.f32.mrb[0].mxu0
        %v1395 = vadd.f32 %v1318, %v1394
        %v1396 = vpop.f32.mrb[0].mxu0
        %v1397 = vadd.f32 %v1320, %v1396
        %1398 = vmatprep.mubr.f32.mxu0 0.0
        %1399 = vmatmul.mubr.f32.gmra.mrb[0].mxu0 %v1183
        %v1400 = vpop.f32.mrb[0].mxu0
        %v1401 = vadd.f32 %v1324, %v1400
        %v1402 = vpop.f32.mrb[0].mxu0
        %v1403 = vadd.f32 %v1326, %v1402
        %1404 = vdwg.mxu0
        %v1405 = vld [vmem:[#allocation3 + $0x2] sm:$0xff]
        %v1406 = vld [vmem:[#allocation3 + $0xa] sm:$0x3f]
        %s1407 = scalar_lea.vmem %s5, 512
        %v1408 = vld [vmem:[%s1407] sm:$0xff]
        %v1409 = vld [vmem:[%s1407 + $0x8] sm:$0xff]
        %v1410 = vld [vmem:[%s1407 + $0x10] sm:$0xff]
        %v1411 = vld [vmem:[%s1407 + $0x18] sm:$0xff]
        %v1412 = vld [vmem:[%s1407 + $0x20] sm:$0xff]
        %v1413 = vld [vmem:[%s1407 + $0x28] sm:$0xff]
        %v1414 = vld [vmem:[%s1407 + $0x30] sm:$0xff]
        %v1415 = vld [vmem:[%s1407 + $0x38] sm:$0xff]
        %v1416 = vld [vmem:[%s1407 + $0x40] sm:$0xff]
        %v1417 = vld [vmem:[%s1407 + $0x48] sm:$0xff]
        %v1418 = vld [vmem:[%s1407 + $0x50] sm:$0xff]
        %v1419 = vld [vmem:[%s1407 + $0x58] sm:$0xff]
        %v1420 = vld [vmem:[%s1407 + $0x60] sm:$0xff]
        %v1421 = vld [vmem:[%s1407 + $0x68] sm:$0xff]
        %v1422 = vld [vmem:[%s1407 + $0x70] sm:$0xff]
        %v1423 = vld [vmem:[%s1407 + $0x78] sm:$0xff]
        %v1424 = vld [vmem:[%s1407 + $0x80] sm:$0xff]
        %v1425 = vld [vmem:[%s1407 + $0x88] sm:$0xff]
        %v1426 = vld [vmem:[%s1407 + $0x90] sm:$0xff]
        %v1427 = vld [vmem:[%s1407 + $0x98] sm:$0xff]
        %v1428 = vld [vmem:[%s1407 + $0xa0] sm:$0xff]
        %v1429 = vld [vmem:[%s1407 + $0xa8] sm:$0xff]
        %v1430 = vld [vmem:[%s1407 + $0xb0] sm:$0xff]
        %v1431 = vld [vmem:[%s1407 + $0xb8] sm:$0xff]
        %v1432 = vld [vmem:[%s1407 + $0xc0] sm:$0xff]
        %v1433 = vld [vmem:[%s1407 + $0xc8] sm:$0xff]
        %v1434 = vld [vmem:[%s1407 + $0xd0] sm:$0xff]
        %v1435 = vld [vmem:[%s1407 + $0xd8] sm:$0xff]
        %v1436 = vld [vmem:[%s1407 + $0xe0] sm:$0xff]
        %v1437 = vld [vmem:[%s1407 + $0xe8] sm:$0xff]
        %v1438 = vld [vmem:[%s1407 + $0xf0] sm:$0xff]
        %v1439 = vld [vmem:[%s1407 + $0xf8] sm:$0xff]
        %1440 = vmatprep.subr.mxu0 %v1409
        %1441 = vmatpush1.msra.mxu0 %v1408
        %1442 = vmatprep.subr.mxu0 %v1411
        %1443 = vmatpush1.msra.mxu0 %v1410
        %1444 = vmatprep.subr.mxu0 %v1413
        %1445 = vmatpush1.msra.mxu0 %v1412
        %1446 = vmatprep.subr.mxu0 %v1415
        %1447 = vmatpush1.msra.mxu0 %v1414
        %1448 = vmatprep.subr.mxu0 %v1417
        %1449 = vmatpush1.msra.mxu0 %v1416
        %1450 = vmatprep.subr.mxu0 %v1419
        %1451 = vmatpush1.msra.mxu0 %v1418
        %1452 = vmatprep.subr.mxu0 %v1421
        %1453 = vmatpush1.msra.mxu0 %v1420
        %1454 = vmatprep.subr.mxu0 %v1423
        %1455 = vmatpush1.msra.mxu0 %v1422
        %1456 = vmatprep.subr.mxu0 %v1425
        %1457 = vmatpush1.msra.mxu0 %v1424
        %1458 = vmatprep.subr.mxu0 %v1427
        %1459 = vmatpush1.msra.mxu0 %v1426
        %1460 = vmatprep.subr.mxu0 %v1429
        %1461 = vmatpush1.msra.mxu0 %v1428
        %1462 = vmatprep.subr.mxu0 %v1431
        %1463 = vmatpush1.msra.mxu0 %v1430
        %1464 = vmatprep.subr.mxu0 %v1433
        %1465 = vmatpush1.msra.mxu0 %v1432
        %1466 = vmatprep.subr.mxu0 %v1435
        %1467 = vmatpush1.msra.mxu0 %v1434
        %1468 = vmatprep.subr.mxu0 %v1437
        %1469 = vmatpush1.msra.mxu0 %v1436
        %1470 = vmatprep.subr.mxu0 %v1439
        %1471 = vmatpush1.msra.mxu0 %v1438
        %1472 = vmatprep.subr.mxu0 0.0
        %1473 = vmatpush1.msra.mxu0 0.0
        %1474 = vmatprep.subr.mxu0 0.0
        %1475 = vmatpush1.msra.mxu0 0.0
        %1476 = vmatprep.subr.mxu0 0.0
        %1477 = vmatpush1.msra.mxu0 0.0
        %1478 = vmatprep.subr.mxu0 0.0
        %1479 = vmatpush1.msra.mxu0 0.0
        %1480 = vmatprep.subr.mxu0 0.0
        %1481 = vmatpush1.msra.mxu0 0.0
        %1482 = vmatprep.subr.mxu0 0.0
        %1483 = vmatpush1.msra.mxu0 0.0
        %1484 = vmatprep.subr.mxu0 0.0
        %1485 = vmatpush1.msra.mxu0 0.0
        %1486 = vmatprep.subr.mxu0 0.0
        %1487 = vmatpush1.msra.mxu0 0.0
        %1488 = vmatprep.subr.mxu0 0.0
        %1489 = vmatpush1.msra.mxu0 0.0
        %1490 = vmatprep.subr.mxu0 0.0
        %1491 = vmatpush1.msra.mxu0 0.0
        %1492 = vmatprep.subr.mxu0 0.0
        %1493 = vmatpush1.msra.mxu0 0.0
        %1494 = vmatprep.subr.mxu0 0.0
        %1495 = vmatpush1.msra.mxu0 0.0
        %1496 = vmatprep.subr.mxu0 0.0
        %1497 = vmatpush1.msra.mxu0 0.0
        %1498 = vmatprep.subr.mxu0 0.0
        %1499 = vmatpush1.msra.mxu0 0.0
        %1500 = vmatprep.subr.mxu0 0.0
        %1501 = vmatpush1.msra.mxu0 0.0
        %1502 = vmatprep.subr.mxu0 0.0
        %1503 = vmatpush1.msra.mxu0 0.0
        %1504 = vmatprep.mubr.f32.mxu0 0.0
        %1505 = vmatmul.mubr.f32.gmra.mrb[0].mxu0 %v1405
        %v1506 = vpop.f32.mrb[0].mxu0
        %v1507 = vadd.f32 0.0, %v1506
        %v1508 = vpop.f32.mrb[0].mxu0
        %v1509 = vadd.f32 0.0, %v1508
        %1510 = vmatprep.mubr.f32.mxu0 0.0
        %1511 = vmatmul.mubr.f32.gmra.mrb[0].mxu0 %v1406
        %v1512 = vpop.f32.mrb[0].mxu0
        %v1513 = vadd.f32 0.0, %v1512
        %v1514 = vpop.f32.mrb[0].mxu0
        %v1515 = vadd.f32 0.0, %v1514
        %1516 = vdwg.mxu0
        %v1517 = vadd.f32 %v1395, %v1507
        %v1518 = vadd.f32 %v1397, %v1509
        %v1519 = vadd.f32 %v1401, %v1513
        %v1520 = vadd.f32 %v1403, %v1515
        %v1521 = vld [vmem:[%s6] sm:$0x3]
        %v1523 = vlaneseq
        %v1524 = vshrl.u32 %v1523, 7
        %v1525 = vsub.s32 0, %v1524
        %v1526 = vrot.slane %v1521, %v1525
        %v1527 = vlaneseq
        %v1528 = vshrl.u32 %v1527, 7
        %v1529 = vsub.s32 1, %v1528
        %v1530 = vrot.slane %v1521, %v1529
        %v1533 = vadd.f32 %v1517, %v1526
        %v1534 = vadd.f32 %v1518, %v1530
        %v1535 = vadd.f32 %v1519, %v1526
        %v1536 = vadd.f32 %v1520, %v1530
        %v1537 = vmax.f32 %v1533, 0.0
        %v1538 = vmax.f32 %v1534, 0.0
        %v1539 = vmax.f32 %v1535, 0.0
        %v1540 = vmax.f32 %v1536, 0.0
        %1541 = vst [vmem:[#allocation4] sm:$0xff] %v1537
        %vm1542 = vcmask 785408
        %1543 = vst.msk [vmem:[#allocation4 + $0x8] sm:$0xff] %vm1542, %v1538
        %1544 = vst [vmem:[#allocation4 + $0x10] sm:$0x3f] %v1539
        %vm1545 = vcmask 783360
        %1546 = vst.msk [vmem:[#allocation4 + $0x18] sm:$0x3f] %vm1545, %v1540
        %v1547 = vld [vmem:[#allocation4] sm:$0xff]
        %v1548 = vld [vmem:[#allocation4 + $0x8] sm:$0xff]
        %v1549 = vld [vmem:[#allocation4 + $0x10] sm:$0xf]
        %v1550 = vld [vmem:[#allocation4 + $0x18] sm:$0xf]
        %v1551 = vld [vmem:[%s7] sm:$0xff]
        %v1552 = vld [vmem:[%s7 + $0x8] sm:$0xff]
        %v1553 = vld [vmem:[%s7 + $0x10] sm:$0xff]
        %v1554 = vld [vmem:[%s7 + $0x18] sm:$0xff]
        %v1555 = vld [vmem:[%s7 + $0x20] sm:$0xff]
        %v1556 = vld [vmem:[%s7 + $0x28] sm:$0xff]
        %v1557 = vld [vmem:[%s7 + $0x30] sm:$0xff]
        %v1558 = vld [vmem:[%s7 + $0x38] sm:$0xff]
        %v1559 = vld [vmem:[%s7 + $0x40] sm:$0xff]
        %v1560 = vld [vmem:[%s7 + $0x48] sm:$0xff]
        %v1561 = vld [vmem:[%s7 + $0x50] sm:$0xff]
        %v1562 = vld [vmem:[%s7 + $0x58] sm:$0xff]
        %v1563 = vld [vmem:[%s7 + $0x60] sm:$0xff]
        %v1564 = vld [vmem:[%s7 + $0x68] sm:$0xff]
        %v1565 = vld [vmem:[%s7 + $0x70] sm:$0xff]
        %v1566 = vld [vmem:[%s7 + $0x78] sm:$0xff]
        %v1567 = vld [vmem:[%s7 + $0x80] sm:$0xff]
        %v1568 = vld [vmem:[%s7 + $0x88] sm:$0xff]
        %v1569 = vld [vmem:[%s7 + $0x90] sm:$0xff]
        %v1570 = vld [vmem:[%s7 + $0x98] sm:$0xff]
        %v1571 = vld [vmem:[%s7 + $0xa0] sm:$0xff]
        %v1572 = vld [vmem:[%s7 + $0xa8] sm:$0xff]
        %v1573 = vld [vmem:[%s7 + $0xb0] sm:$0xff]
        %v1574 = vld [vmem:[%s7 + $0xb8] sm:$0xff]
        %v1575 = vld [vmem:[%s7 + $0xc0] sm:$0xff]
        %v1576 = vld [vmem:[%s7 + $0xc8] sm:$0xff]
        %v1577 = vld [vmem:[%s7 + $0xd0] sm:$0xff]
        %v1578 = vld [vmem:[%s7 + $0xd8] sm:$0xff]
        %v1579 = vld [vmem:[#allocation4] sm:$0xfe]
        %v1580 = vld [vmem:[#allocation4 + $0x8] sm:$0xfe]
        %v1581 = vld [vmem:[#allocation4 + $0x10] sm:$0x1f]
        %v1582 = vld [vmem:[#allocation4 + $0x18] sm:$0x1f]
        %s1583 = scalar_lea.vmem %s7, 224
        %v1584 = vld [vmem:[%s1583] sm:$0xff]
        %v1585 = vld [vmem:[%s1583 + $0x8] sm:$0xff]
        %v1586 = vld [vmem:[%s1583 + $0x10] sm:$0xff]
        %v1587 = vld [vmem:[%s1583 + $0x18] sm:$0xff]
        %v1588 = vld [vmem:[%s1583 + $0x20] sm:$0xff]
        %v1589 = vld [vmem:[%s1583 + $0x28] sm:$0xff]
        %v1590 = vld [vmem:[%s1583 + $0x30] sm:$0xff]
        %v1591 = vld [vmem:[%s1583 + $0x38] sm:$0xff]
        %v1592 = vld [vmem:[%s1583 + $0x40] sm:$0xff]
        %v1593 = vld [vmem:[%s1583 + $0x48] sm:$0xff]
        %v1594 = vld [vmem:[%s1583 + $0x50] sm:$0xff]
        %v1595 = vld [vmem:[%s1583 + $0x58] sm:$0xff]
        %v1596 = vld [vmem:[%s1583 + $0x60] sm:$0xff]
        %v1597 = vld [vmem:[%s1583 + $0x68] sm:$0xff]
        %v1598 = vld [vmem:[%s1583 + $0x70] sm:$0xff]
        %v1599 = vld [vmem:[%s1583 + $0x78] sm:$0xff]
        %v1600 = vld [vmem:[%s1583 + $0x80] sm:$0xff]
        %v1601 = vld [vmem:[%s1583 + $0x88] sm:$0xff]
        %v1602 = vld [vmem:[%s1583 + $0x90] sm:$0xff]
        %v1603 = vld [vmem:[%s1583 + $0x98] sm:$0xff]
        %v1604 = vld [vmem:[%s1583 + $0xa0] sm:$0xff]
        %v1605 = vld [vmem:[%s1583 + $0xa8] sm:$0xff]
        %v1606 = vld [vmem:[%s1583 + $0xb0] sm:$0xff]
        %v1607 = vld [vmem:[%s1583 + $0xb8] sm:$0xff]
        %v1608 = vld [vmem:[%s1583 + $0xc0] sm:$0xff]
        %v1609 = vld [vmem:[%s1583 + $0xc8] sm:$0xff]
        %v1610 = vld [vmem:[%s1583 + $0xd0] sm:$0xff]
        %v1611 = vld [vmem:[%s1583 + $0xd8] sm:$0xff]
        %v1616 = vrot.slane %v1579, 1
        %v1617 = vrot.slane %v1581, 1
        %v1618 = vsel %vm876, %v1616, %v1617
        %v1619 = vrot.slane %v1580, 1
        %v1620 = vrot.slane %v1582, 1
        %v1621 = vsel %vm876, %v1619, %v1620
        %v1624 = vsel %vm1542, %v1621, 0
        %v1626 = vsel %vm1542, %v1620, 0
        %1628 = vmatprep.subr.mxu0 0.0
        %1629 = vmatpush1.msra.mxu0 %v1584
        %1630 = vmatprep.subr.mxu0 0.0
        %1631 = vmatpush1.msra.mxu0 %v1585
        %1632 = vmatprep.subr.mxu0 0.0
        %1633 = vmatpush1.msra.mxu0 %v1586
        %1634 = vmatprep.subr.mxu0 0.0
        %1635 = vmatpush1.msra.mxu0 %v1587
        %1636 = vmatprep.subr.mxu0 0.0
        %1637 = vmatpush1.msra.mxu0 %v1588
        %1638 = vmatprep.subr.mxu0 0.0
        %1639 = vmatpush1.msra.mxu0 %v1589
        %1640 = vmatprep.subr.mxu0 0.0
        %1641 = vmatpush1.msra.mxu0 %v1590
        %1642 = vmatprep.subr.mxu0 0.0
        %1643 = vmatpush1.msra.mxu0 %v1591
        %1644 = vmatprep.subr.mxu0 0.0
        %1645 = vmatpush1.msra.mxu0 %v1592
        %1646 = vmatprep.subr.mxu0 0.0
        %1647 = vmatpush1.msra.mxu0 %v1593
        %1648 = vmatprep.subr.mxu0 0.0
        %1649 = vmatpush1.msra.mxu0 %v1594
        %1650 = vmatprep.subr.mxu0 0.0
        %1651 = vmatpush1.msra.mxu0 %v1595
        %1652 = vmatprep.subr.mxu0 0.0
        %1653 = vmatpush1.msra.mxu0 %v1596
        %1654 = vmatprep.subr.mxu0 0.0
        %1655 = vmatpush1.msra.mxu0 %v1597
        %1656 = vmatprep.subr.mxu0 0.0
        %1657 = vmatpush1.msra.mxu0 %v1598
        %1658 = vmatprep.subr.mxu0 0.0
        %1659 = vmatpush1.msra.mxu0 %v1599
        %1660 = vmatprep.subr.mxu0 0.0
        %1661 = vmatpush1.msra.mxu0 %v1600
        %1662 = vmatprep.subr.mxu0 0.0
        %1663 = vmatpush1.msra.mxu0 %v1601
        %1664 = vmatprep.subr.mxu0 0.0
        %1665 = vmatpush1.msra.mxu0 %v1602
        %1666 = vmatprep.subr.mxu0 0.0
        %1667 = vmatpush1.msra.mxu0 %v1603
        %1668 = vmatprep.subr.mxu0 0.0
        %1669 = vmatpush1.msra.mxu0 %v1604
        %1670 = vmatprep.subr.mxu0 0.0
        %1671 = vmatpush1.msra.mxu0 %v1605
        %1672 = vmatprep.subr.mxu0 0.0
        %1673 = vmatpush1.msra.mxu0 %v1606
        %1674 = vmatprep.subr.mxu0 0.0
        %1675 = vmatpush1.msra.mxu0 %v1607
        %1676 = vmatprep.subr.mxu0 0.0
        %1677 = vmatpush1.msra.mxu0 %v1608
        %1678 = vmatprep.subr.mxu0 0.0
        %1679 = vmatpush1.msra.mxu0 %v1609
        %1680 = vmatprep.subr.mxu0 0.0
        %1681 = vmatpush1.msra.mxu0 %v1610
        %1682 = vmatprep.subr.mxu0 0.0
        %1683 = vmatpush1.msra.mxu0 %v1611
        %1684 = vmatprep.subr.mxu0 0.0
        %1685 = vmatpush1.msra.mxu0 0.0
        %1686 = vmatprep.subr.mxu0 0.0
        %1687 = vmatpush1.msra.mxu0 0.0
        %1688 = vmatprep.subr.mxu0 0.0
        %1689 = vmatpush1.msra.mxu0 0.0
        %1690 = vmatprep.subr.mxu0 0.0
        %1691 = vmatpush1.msra.mxu0 0.0
        %1692 = vmatprep.mubr.f32.mxu0 %v1624
        %1693 = vmatmul.mubr.f32.gmra.mrb[0].mxu0 %v1618
        %v1694 = vpop.f32.mrb[0].mxu0
        %v1695 = vadd.f32 0.0, %v1694
        %v1696 = vpop.f32.mrb[0].mxu0
        %1697 = vmatprep.mubr.f32.mxu0 %v1626
        %1698 = vmatmul.mubr.f32.gmra.mrb[0].mxu0 %v1617
        %v1699 = vpop.f32.mrb[0].mxu0
        %v1700 = vadd.f32 0.0, %v1699
        %v1701 = vpop.f32.mrb[0].mxu0
        %1702 = vdwg.mxu0
        %v1704 = vsel %vm1542, %v1548, 0
        %v1707 = vsel %vm1542, %v1550, 0
        %1709 = vmatprep.subr.mxu0 0.0
        %1710 = vmatpush1.msra.mxu0 %v1551
        %1711 = vmatprep.subr.mxu0 0.0
        %1712 = vmatpush1.msra.mxu0 %v1552
        %1713 = vmatprep.subr.mxu0 0.0
        %1714 = vmatpush1.msra.mxu0 %v1553
        %1715 = vmatprep.subr.mxu0 0.0
        %1716 = vmatpush1.msra.mxu0 %v1554
        %1717 = vmatprep.subr.mxu0 0.0
        %1718 = vmatpush1.msra.mxu0 %v1555
        %1719 = vmatprep.subr.mxu0 0.0
        %1720 = vmatpush1.msra.mxu0 %v1556
        %1721 = vmatprep.subr.mxu0 0.0
        %1722 = vmatpush1.msra.mxu0 %v1557
        %1723 = vmatprep.subr.mxu0 0.0
        %1724 = vmatpush1.msra.mxu0 %v1558
        %1725 = vmatprep.subr.mxu0 0.0
        %1726 = vmatpush1.msra.mxu0 %v1559
        %1727 = vmatprep.subr.mxu0 0.0
        %1728 = vmatpush1.msra.mxu0 %v1560
        %1729 = vmatprep.subr.mxu0 0.0
        %1730 = vmatpush1.msra.mxu0 %v1561
        %1731 = vmatprep.subr.mxu0 0.0
        %1732 = vmatpush1.msra.mxu0 %v1562
        %1733 = vmatprep.subr.mxu0 0.0
        %1734 = vmatpush1.msra.mxu0 %v1563
        %1735 = vmatprep.subr.mxu0 0.0
        %1736 = vmatpush1.msra.mxu0 %v1564
        %1737 = vmatprep.subr.mxu0 0.0
        %1738 = vmatpush1.msra.mxu0 %v1565
        %1739 = vmatprep.subr.mxu0 0.0
        %1740 = vmatpush1.msra.mxu0 %v1566
        %1741 = vmatprep.subr.mxu0 0.0
        %1742 = vmatpush1.msra.mxu0 %v1567
        %1743 = vmatprep.subr.mxu0 0.0
        %1744 = vmatpush1.msra.mxu0 %v1568
        %1745 = vmatprep.subr.mxu0 0.0
        %1746 = vmatpush1.msra.mxu0 %v1569
        %1747 = vmatprep.subr.mxu0 0.0
        %1748 = vmatpush1.msra.mxu0 %v1570
        %1749 = vmatprep.subr.mxu0 0.0
        %1750 = vmatpush1.msra.mxu0 %v1571
        %1751 = vmatprep.subr.mxu0 0.0
        %1752 = vmatpush1.msra.mxu0 %v1572
        %1753 = vmatprep.subr.mxu0 0.0
        %1754 = vmatpush1.msra.mxu0 %v1573
        %1755 = vmatprep.subr.mxu0 0.0
        %1756 = vmatpush1.msra.mxu0 %v1574
        %1757 = vmatprep.subr.mxu0 0.0
        %1758 = vmatpush1.msra.mxu0 %v1575
        %1759 = vmatprep.subr.mxu0 0.0
        %1760 = vmatpush1.msra.mxu0 %v1576
        %1761 = vmatprep.subr.mxu0 0.0
        %1762 = vmatpush1.msra.mxu0 %v1577
        %1763 = vmatprep.subr.mxu0 0.0
        %1764 = vmatpush1.msra.mxu0 %v1578
        %1765 = vmatprep.subr.mxu0 0.0
        %1766 = vmatpush1.msra.mxu0 0.0
        %1767 = vmatprep.subr.mxu0 0.0
        %1768 = vmatpush1.msra.mxu0 0.0
        %1769 = vmatprep.subr.mxu0 0.0
        %1770 = vmatpush1.msra.mxu0 0.0
        %1771 = vmatprep.subr.mxu0 0.0
        %1772 = vmatpush1.msra.mxu0 0.0
        %1773 = vmatprep.mubr.f32.mxu0 %v1704
        %1774 = vmatmul.mubr.f32.gmra.mrb[0].mxu0 %v1547
        %v1775 = vpop.f32.mrb[0].mxu0
        %v1776 = vadd.f32 %v1695, %v1775
        %v1777 = vpop.f32.mrb[0].mxu0
        %1778 = vmatprep.mubr.f32.mxu0 %v1707
        %1779 = vmatmul.mubr.f32.gmra.mrb[0].mxu0 %v1549
        %v1780 = vpop.f32.mrb[0].mxu0
        %v1781 = vadd.f32 %v1700, %v1780
        %v1782 = vpop.f32.mrb[0].mxu0
        %1783 = vdwg.mxu0
        %v1784 = vld [vmem:[#allocation4] sm:$0xfc]
        %v1785 = vld [vmem:[#allocation4 + $0x8] sm:$0xfc]
        %v1786 = vld [vmem:[#allocation4 + $0x10] sm:$0x3f]
        %v1787 = vld [vmem:[#allocation4 + $0x18] sm:$0x3f]
        %s1788 = scalar_lea.vmem %s7, 448
        %v1789 = vld [vmem:[%s1788] sm:$0xff]
        %v1790 = vld [vmem:[%s1788 + $0x8] sm:$0xff]
        %v1791 = vld [vmem:[%s1788 + $0x10] sm:$0xff]
        %v1792 = vld [vmem:[%s1788 + $0x18] sm:$0xff]
        %v1793 = vld [vmem:[%s1788 + $0x20] sm:$0xff]
        %v1794 = vld [vmem:[%s1788 + $0x28] sm:$0xff]
        %v1795 = vld [vmem:[%s1788 + $0x30] sm:$0xff]
        %v1796 = vld [vmem:[%s1788 + $0x38] sm:$0xff]
        %v1797 = vld [vmem:[%s1788 + $0x40] sm:$0xff]
        %v1798 = vld [vmem:[%s1788 + $0x48] sm:$0xff]
        %v1799 = vld [vmem:[%s1788 + $0x50] sm:$0xff]
        %v1800 = vld [vmem:[%s1788 + $0x58] sm:$0xff]
        %v1801 = vld [vmem:[%s1788 + $0x60] sm:$0xff]
        %v1802 = vld [vmem:[%s1788 + $0x68] sm:$0xff]
        %v1803 = vld [vmem:[%s1788 + $0x70] sm:$0xff]
        %v1804 = vld [vmem:[%s1788 + $0x78] sm:$0xff]
        %v1805 = vld [vmem:[%s1788 + $0x80] sm:$0xff]
        %v1806 = vld [vmem:[%s1788 + $0x88] sm:$0xff]
        %v1807 = vld [vmem:[%s1788 + $0x90] sm:$0xff]
        %v1808 = vld [vmem:[%s1788 + $0x98] sm:$0xff]
        %v1809 = vld [vmem:[%s1788 + $0xa0] sm:$0xff]
        %v1810 = vld [vmem:[%s1788 + $0xa8] sm:$0xff]
        %v1811 = vld [vmem:[%s1788 + $0xb0] sm:$0xff]
        %v1812 = vld [vmem:[%s1788 + $0xb8] sm:$0xff]
        %v1813 = vld [vmem:[%s1788 + $0xc0] sm:$0xff]
        %v1814 = vld [vmem:[%s1788 + $0xc8] sm:$0xff]
        %v1815 = vld [vmem:[%s1788 + $0xd0] sm:$0xff]
        %v1816 = vld [vmem:[%s1788 + $0xd8] sm:$0xff]
        %v1821 = vrot.slane %v1784, 2
        %v1822 = vrot.slane %v1786, 2
        %v1823 = vsel %vm1075, %v1821, %v1822
        %v1824 = vrot.slane %v1785, 2
        %v1825 = vrot.slane %v1787, 2
        %v1826 = vsel %vm1075, %v1824, %v1825
        %v1829 = vsel %vm1542, %v1826, 0
        %v1831 = vsel %vm1542, %v1825, 0
        %1833 = vmatprep.subr.mxu0 0.0
        %1834 = vmatpush1.msra.mxu0 %v1789
        %1835 = vmatprep.subr.mxu0 0.0
        %1836 = vmatpush1.msra.mxu0 %v1790
        %1837 = vmatprep.subr.mxu0 0.0
        %1838 = vmatpush1.msra.mxu0 %v1791
        %1839 = vmatprep.subr.mxu0 0.0
        %1840 = vmatpush1.msra.mxu0 %v1792
        %1841 = vmatprep.subr.mxu0 0.0
        %1842 = vmatpush1.msra.mxu0 %v1793
        %1843 = vmatprep.subr.mxu0 0.0
        %1844 = vmatpush1.msra.mxu0 %v1794
        %1845 = vmatprep.subr.mxu0 0.0
        %1846 = vmatpush1.msra.mxu0 %v1795
        %1847 = vmatprep.subr.mxu0 0.0
        %1848 = vmatpush1.msra.mxu0 %v1796
        %1849 = vmatprep.subr.mxu0 0.0
        %1850 = vmatpush1.msra.mxu0 %v1797
        %1851 = vmatprep.subr.mxu0 0.0
        %1852 = vmatpush1.msra.mxu0 %v1798
        %1853 = vmatprep.subr.mxu0 0.0
        %1854 = vmatpush1.msra.mxu0 %v1799
        %1855 = vmatprep.subr.mxu0 0.0
        %1856 = vmatpush1.msra.mxu0 %v1800
        %1857 = vmatprep.subr.mxu0 0.0
        %1858 = vmatpush1.msra.mxu0 %v1801
        %1859 = vmatprep.subr.mxu0 0.0
        %1860 = vmatpush1.msra.mxu0 %v1802
        %1861 = vmatprep.subr.mxu0 0.0
        %1862 = vmatpush1.msra.mxu0 %v1803
        %1863 = vmatprep.subr.mxu0 0.0
        %1864 = vmatpush1.msra.mxu0 %v1804
        %1865 = vmatprep.subr.mxu0 0.0
        %1866 = vmatpush1.msra.mxu0 %v1805
        %1867 = vmatprep.subr.mxu0 0.0
        %1868 = vmatpush1.msra.mxu0 %v1806
        %1869 = vmatprep.subr.mxu0 0.0
        %1870 = vmatpush1.msra.mxu0 %v1807
        %1871 = vmatprep.subr.mxu0 0.0
        %1872 = vmatpush1.msra.mxu0 %v1808
        %1873 = vmatprep.subr.mxu0 0.0
        %1874 = vmatpush1.msra.mxu0 %v1809
        %1875 = vmatprep.subr.mxu0 0.0
        %1876 = vmatpush1.msra.mxu0 %v1810
        %1877 = vmatprep.subr.mxu0 0.0
        %1878 = vmatpush1.msra.mxu0 %v1811
        %1879 = vmatprep.subr.mxu0 0.0
        %1880 = vmatpush1.msra.mxu0 %v1812
        %1881 = vmatprep.subr.mxu0 0.0
        %1882 = vmatpush1.msra.mxu0 %v1813
        %1883 = vmatprep.subr.mxu0 0.0
        %1884 = vmatpush1.msra.mxu0 %v1814
        %1885 = vmatprep.subr.mxu0 0.0
        %1886 = vmatpush1.msra.mxu0 %v1815
        %1887 = vmatprep.subr.mxu0 0.0
        %1888 = vmatpush1.msra.mxu0 %v1816
        %1889 = vmatprep.subr.mxu0 0.0
        %1890 = vmatpush1.msra.mxu0 0.0
        %1891 = vmatprep.subr.mxu0 0.0
        %1892 = vmatpush1.msra.mxu0 0.0
        %1893 = vmatprep.subr.mxu0 0.0
        %1894 = vmatpush1.msra.mxu0 0.0
        %1895 = vmatprep.subr.mxu0 0.0
        %1896 = vmatpush1.msra.mxu0 0.0
        %1897 = vmatprep.mubr.f32.mxu0 %v1829
        %1898 = vmatmul.mubr.f32.gmra.mrb[0].mxu0 %v1823
        %v1899 = vpop.f32.mrb[0].mxu0
        %v1900 = vadd.f32 0.0, %v1899
        %v1901 = vpop.f32.mrb[0].mxu0
        %1902 = vmatprep.mubr.f32.mxu0 %v1831
        %1903 = vmatmul.mubr.f32.gmra.mrb[0].mxu0 %v1822
        %v1904 = vpop.f32.mrb[0].mxu0
        %v1905 = vadd.f32 0.0, %v1904
        %v1906 = vpop.f32.mrb[0].mxu0
        %1907 = vdwg.mxu0
        %v1908 = vadd.f32 %v1776, %v1900
        %v1909 = vadd.f32 %v1781, %v1905
        %v1910 = vld [vmem:[%s8] sm:$0x1]
        %v1912 = vlaneseq
        %v1913 = vshrl.u32 %v1912, 7
        %v1914 = vsub.s32 0, %v1913
        %v1915 = vrot.slane %v1910, %v1914
        %v1917 = vadd.f32 %v1908, %v1915
        %v1918 = vadd.f32 %v1909, %v1915
        %v1919 = vmax.f32 %v1917, 0.0
        %v1920 = vmax.f32 %v1918, 0.0
        %1921 = vst.msk [vmem:[#allocation5] sm:$0xff] %vm1542, %v1919
        %vm1922 = vcmask 781312
        %1923 = vst.msk [vmem:[#allocation5 + $0x8] sm:$0xf] %vm1922, %v1920
        %v1924 = vld [vmem:[#allocation5] sm:$0x1]
        %v1925 = vld [vmem:[%s9] sm:$0xff]
        %v1926 = vld [vmem:[%s9 + $0x8] sm:$0xff]
        %v1927 = vld [vmem:[%s9 + $0x10] sm:$0xff]
        %v1928 = vld [vmem:[%s9 + $0x18] sm:$0xff]
        %v1929 = vld [vmem:[%s9 + $0x20] sm:$0xff]
        %v1930 = vld [vmem:[%s9 + $0x28] sm:$0xff]
        %v1931 = vld [vmem:[%s9 + $0x30] sm:$0xff]
        %v1932 = vld [vmem:[%s9 + $0x38] sm:$0xff]
        %v1933 = vld [vmem:[%s9 + $0x40] sm:$0xff]
        %v1934 = vld [vmem:[%s9 + $0x48] sm:$0xff]
        %v1935 = vld [vmem:[%s9 + $0x50] sm:$0xff]
        %v1936 = vld [vmem:[%s9 + $0x58] sm:$0xff]
        %v1937 = vld [vmem:[#allocation5 + $0x1] sm:$0x1]
        %s1938 = scalar_lea.vmem %s9, 96
        %v1939 = vld [vmem:[%s1938] sm:$0xff]
        %v1940 = vld [vmem:[%s1938 + $0x8] sm:$0xff]
        %v1941 = vld [vmem:[%s1938 + $0x10] sm:$0xff]
        %v1942 = vld [vmem:[%s1938 + $0x18] sm:$0xff]
        %v1943 = vld [vmem:[%s1938 + $0x20] sm:$0xff]
        %v1944 = vld [vmem:[%s1938 + $0x28] sm:$0xff]
        %v1945 = vld [vmem:[%s1938 + $0x30] sm:$0xff]
        %v1946 = vld [vmem:[%s1938 + $0x38] sm:$0xff]
        %v1947 = vld [vmem:[%s1938 + $0x40] sm:$0xff]
        %v1948 = vld [vmem:[%s1938 + $0x48] sm:$0xff]
        %v1949 = vld [vmem:[%s1938 + $0x50] sm:$0xff]
        %v1950 = vld [vmem:[%s1938 + $0x58] sm:$0xff]
        %v1952 = vsel %vm1542, %v1937, 0
        %1954 = vmatprep.subr.mxu0 0.0
        %1955 = vmatpush1.msra.mxu0 %v1939
        %1956 = vmatprep.subr.mxu0 0.0
        %1957 = vmatpush1.msra.mxu0 %v1940
        %1958 = vmatprep.subr.mxu0 0.0
        %1959 = vmatpush1.msra.mxu0 %v1941
        %1960 = vmatprep.subr.mxu0 0.0
        %1961 = vmatpush1.msra.mxu0 %v1942
        %1962 = vmatprep.subr.mxu0 0.0
        %1963 = vmatpush1.msra.mxu0 %v1943
        %1964 = vmatprep.subr.mxu0 0.0
        %1965 = vmatpush1.msra.mxu0 %v1944
        %1966 = vmatprep.subr.mxu0 0.0
        %1967 = vmatpush1.msra.mxu0 %v1945
        %1968 = vmatprep.subr.mxu0 0.0
        %1969 = vmatpush1.msra.mxu0 %v1946
        %1970 = vmatprep.subr.mxu0 0.0
        %1971 = vmatpush1.msra.mxu0 %v1947
        %1972 = vmatprep.subr.mxu0 0.0
        %1973 = vmatpush1.msra.mxu0 %v1948
        %1974 = vmatprep.subr.mxu0 0.0
        %1975 = vmatpush1.msra.mxu0 %v1949
        %1976 = vmatprep.subr.mxu0 0.0
        %1977 = vmatpush1.msra.mxu0 %v1950
        %1978 = vmatprep.subr.mxu0 0.0
        %1979 = vmatpush1.msra.mxu0 0.0
        %1980 = vmatprep.subr.mxu0 0.0
        %1981 = vmatpush1.msra.mxu0 0.0
        %1982 = vmatprep.subr.mxu0 0.0
        %1983 = vmatpush1.msra.mxu0 0.0
        %1984 = vmatprep.subr.mxu0 0.0
        %1985 = vmatpush1.msra.mxu0 0.0
        %1986 = vmatprep.subr.mxu0 0.0
        %1987 = vmatpush1.msra.mxu0 0.0
        %1988 = vmatprep.subr.mxu0 0.0
        %1989 = vmatpush1.msra.mxu0 0.0
        %1990 = vmatprep.subr.mxu0 0.0
        %1991 = vmatpush1.msra.mxu0 0.0
        %1992 = vmatprep.subr.mxu0 0.0
        %1993 = vmatpush1.msra.mxu0 0.0
        %1994 = vmatprep.subr.mxu0 0.0
        %1995 = vmatpush1.msra.mxu0 0.0
        %1996 = vmatprep.subr.mxu0 0.0
        %1997 = vmatpush1.msra.mxu0 0.0
        %1998 = vmatprep.subr.mxu0 0.0
        %1999 = vmatpush1.msra.mxu0 0.0
        %2000 = vmatprep.subr.mxu0 0.0
        %2001 = vmatpush1.msra.mxu0 0.0
        %2002 = vmatprep.subr.mxu0 0.0
        %2003 = vmatpush1.msra.mxu0 0.0
        %2004 = vmatprep.subr.mxu0 0.0
        %2005 = vmatpush1.msra.mxu0 0.0
        %2006 = vmatprep.subr.mxu0 0.0
        %2007 = vmatpush1.msra.mxu0 0.0
        %2008 = vmatprep.subr.mxu0 0.0
        %2009 = vmatpush1.msra.mxu0 0.0
        %2010 = vmatprep.subr.mxu0 0.0
        %2011 = vmatpush1.msra.mxu0 0.0
        %2012 = vmatprep.subr.mxu0 0.0
        %2013 = vmatpush1.msra.mxu0 0.0
        %2014 = vmatprep.subr.mxu0 0.0
        %2015 = vmatpush1.msra.mxu0 0.0
        %2016 = vmatprep.subr.mxu0 0.0
        %2017 = vmatpush1.msra.mxu0 0.0
        %2018 = vmatprep.mubr.f32.mxu0 0.0
        %2019 = vmatmul.mubr.f32.gmra.mrb[0].mxu0 %v1952
        %v2020 = vpop.f32.mrb[0].mxu0
        %v2021 = vadd.f32 0.0, %v2020
        %v2022 = vpop.f32.mrb[0].mxu0
        %2023 = vdwg.mxu0
        %v2025 = vsel %vm1542, %v1924, 0
        %2027 = vmatprep.subr.mxu0 0.0
        %2028 = vmatpush1.msra.mxu0 %v1925
        %2029 = vmatprep.subr.mxu0 0.0
        %2030 = vmatpush1.msra.mxu0 %v1926
        %2031 = vmatprep.subr.mxu0 0.0
        %2032 = vmatpush1.msra.mxu0 %v1927
        %2033 = vmatprep.subr.mxu0 0.0
        %2034 = vmatpush1.msra.mxu0 %v1928
        %2035 = vmatprep.subr.mxu0 0.0
        %2036 = vmatpush1.msra.mxu0 %v1929
        %2037 = vmatprep.subr.mxu0 0.0
        %2038 = vmatpush1.msra.mxu0 %v1930
        %2039 = vmatprep.subr.mxu0 0.0
        %2040 = vmatpush1.msra.mxu0 %v1931
        %2041 = vmatprep.subr.mxu0 0.0
        %2042 = vmatpush1.msra.mxu0 %v1932
        %2043 = vmatprep.subr.mxu0 0.0
        %2044 = vmatpush1.msra.mxu0 %v1933
        %2045 = vmatprep.subr.mxu0 0.0
        %2046 = vmatpush1.msra.mxu0 %v1934
        %2047 = vmatprep.subr.mxu0 0.0
        %2048 = vmatpush1.msra.mxu0 %v1935
        %2049 = vmatprep.subr.mxu0 0.0
        %2050 = vmatpush1.msra.mxu0 %v1936
        %2051 = vmatprep.subr.mxu0 0.0
        %2052 = vmatpush1.msra.mxu0 0.0
        %2053 = vmatprep.subr.mxu0 0.0
        %2054 = vmatpush1.msra.mxu0 0.0
        %2055 = vmatprep.subr.mxu0 0.0
        %2056 = vmatpush1.msra.mxu0 0.0
        %2057 = vmatprep.subr.mxu0 0.0
        %2058 = vmatpush1.msra.mxu0 0.0
        %2059 = vmatprep.subr.mxu0 0.0
        %2060 = vmatpush1.msra.mxu0 0.0
        %2061 = vmatprep.subr.mxu0 0.0
        %2062 = vmatpush1.msra.mxu0 0.0
        %2063 = vmatprep.subr.mxu0 0.0
        %2064 = vmatpush1.msra.mxu0 0.0
        %2065 = vmatprep.subr.mxu0 0.0
        %2066 = vmatpush1.msra.mxu0 0.0
        %2067 = vmatprep.subr.mxu0 0.0
        %2068 = vmatpush1.msra.mxu0 0.0
        %2069 = vmatprep.subr.mxu0 0.0
        %2070 = vmatpush1.msra.mxu0 0.0
        %2071 = vmatprep.subr.mxu0 0.0
        %2072 = vmatpush1.msra.mxu0 0.0
        %2073 = vmatprep.subr.mxu0 0.0
        %2074 = vmatpush1.msra.mxu0 0.0
        %2075 = vmatprep.subr.mxu0 0.0
        %2076 = vmatpush1.msra.mxu0 0.0
        %2077 = vmatprep.subr.mxu0 0.0
        %2078 = vmatpush1.msra.mxu0 0.0
        %2079 = vmatprep.subr.mxu0 0.0
        %2080 = vmatpush1.msra.mxu0 0.0
        %2081 = vmatprep.subr.mxu0 0.0
        %2082 = vmatpush1.msra.mxu0 0.0
        %2083 = vmatprep.subr.mxu0 0.0
        %2084 = vmatpush1.msra.mxu0 0.0
        %2085 = vmatprep.subr.mxu0 0.0
        %2086 = vmatpush1.msra.mxu0 0.0
        %2087 = vmatprep.subr.mxu0 0.0
        %2088 = vmatpush1.msra.mxu0 0.0
        %2089 = vmatprep.subr.mxu0 0.0
        %2090 = vmatpush1.msra.mxu0 0.0
        %2091 = vmatprep.mubr.f32.mxu0 0.0
        %2092 = vmatmul.mubr.f32.gmra.mrb[0].mxu0 %v2025
        %v2093 = vpop.f32.mrb[0].mxu0
        %v2094 = vadd.f32 %v2021, %v2093
        %v2095 = vpop.f32.mrb[0].mxu0
        %2096 = vdwg.mxu0
        %v2097 = vld [vmem:[#allocation5 + $0x2] sm:$0x1]
        %s2098 = scalar_lea.vmem %s9, 192
        %v2099 = vld [vmem:[%s2098] sm:$0xff]
        %v2100 = vld [vmem:[%s2098 + $0x8] sm:$0xff]
        %v2101 = vld [vmem:[%s2098 + $0x10] sm:$0xff]
        %v2102 = vld [vmem:[%s2098 + $0x18] sm:$0xff]
        %v2103 = vld [vmem:[%s2098 + $0x20] sm:$0xff]
        %v2104 = vld [vmem:[%s2098 + $0x28] sm:$0xff]
        %v2105 = vld [vmem:[%s2098 + $0x30] sm:$0xff]
        %v2106 = vld [vmem:[%s2098 + $0x38] sm:$0xff]
        %v2107 = vld [vmem:[%s2098 + $0x40] sm:$0xff]
        %v2108 = vld [vmem:[%s2098 + $0x48] sm:$0xff]
        %v2109 = vld [vmem:[%s2098 + $0x50] sm:$0xff]
        %v2110 = vld [vmem:[%s2098 + $0x58] sm:$0xff]
        %v2112 = vsel %vm1542, %v2097, 0
        %2114 = vmatprep.subr.mxu0 0.0
        %2115 = vmatpush1.msra.mxu0 %v2099
        %2116 = vmatprep.subr.mxu0 0.0
        %2117 = vmatpush1.msra.mxu0 %v2100
        %2118 = vmatprep.subr.mxu0 0.0
        %2119 = vmatpush1.msra.mxu0 %v2101
        %2120 = vmatprep.subr.mxu0 0.0
        %2121 = vmatpush1.msra.mxu0 %v2102
        %2122 = vmatprep.subr.mxu0 0.0
        %2123 = vmatpush1.msra.mxu0 %v2103
        %2124 = vmatprep.subr.mxu0 0.0
        %2125 = vmatpush1.msra.mxu0 %v2104
        %2126 = vmatprep.subr.mxu0 0.0
        %2127 = vmatpush1.msra.mxu0 %v2105
        %2128 = vmatprep.subr.mxu0 0.0
        %2129 = vmatpush1.msra.mxu0 %v2106
        %2130 = vmatprep.subr.mxu0 0.0
        %2131 = vmatpush1.msra.mxu0 %v2107
        %2132 = vmatprep.subr.mxu0 0.0
        %2133 = vmatpush1.msra.mxu0 %v2108
        %2134 = vmatprep.subr.mxu0 0.0
        %2135 = vmatpush1.msra.mxu0 %v2109
        %2136 = vmatprep.subr.mxu0 0.0
        %2137 = vmatpush1.msra.mxu0 %v2110
        %2138 = vmatprep.subr.mxu0 0.0
        %2139 = vmatpush1.msra.mxu0 0.0
        %2140 = vmatprep.subr.mxu0 0.0
        %2141 = vmatpush1.msra.mxu0 0.0
        %2142 = vmatprep.subr.mxu0 0.0
        %2143 = vmatpush1.msra.mxu0 0.0
        %2144 = vmatprep.subr.mxu0 0.0
        %2145 = vmatpush1.msra.mxu0 0.0
        %2146 = vmatprep.subr.mxu0 0.0
        %2147 = vmatpush1.msra.mxu0 0.0
        %2148 = vmatprep.subr.mxu0 0.0
        %2149 = vmatpush1.msra.mxu0 0.0
        %2150 = vmatprep.subr.mxu0 0.0
        %2151 = vmatpush1.msra.mxu0 0.0
        %2152 = vmatprep.subr.mxu0 0.0
        %2153 = vmatpush1.msra.mxu0 0.0
        %2154 = vmatprep.subr.mxu0 0.0
        %2155 = vmatpush1.msra.mxu0 0.0
        %2156 = vmatprep.subr.mxu0 0.0
        %2157 = vmatpush1.msra.mxu0 0.0
        %2158 = vmatprep.subr.mxu0 0.0
        %2159 = vmatpush1.msra.mxu0 0.0
        %2160 = vmatprep.subr.mxu0 0.0
        %2161 = vmatpush1.msra.mxu0 0.0
        %2162 = vmatprep.subr.mxu0 0.0
        %2163 = vmatpush1.msra.mxu0 0.0
        %2164 = vmatprep.subr.mxu0 0.0
        %2165 = vmatpush1.msra.mxu0 0.0
        %2166 = vmatprep.subr.mxu0 0.0
        %2167 = vmatpush1.msra.mxu0 0.0
        %2168 = vmatprep.subr.mxu0 0.0
        %2169 = vmatpush1.msra.mxu0 0.0
        %2170 = vmatprep.subr.mxu0 0.0
        %2171 = vmatpush1.msra.mxu0 0.0
        %2172 = vmatprep.subr.mxu0 0.0
        %2173 = vmatpush1.msra.mxu0 0.0
        %2174 = vmatprep.subr.mxu0 0.0
        %2175 = vmatpush1.msra.mxu0 0.0
        %2176 = vmatprep.subr.mxu0 0.0
        %2177 = vmatpush1.msra.mxu0 0.0
        %2178 = vmatprep.mubr.f32.mxu0 0.0
        %2179 = vmatmul.mubr.f32.gmra.mrb[0].mxu0 %v2112
        %v2180 = vpop.f32.mrb[0].mxu0
        %v2181 = vadd.f32 0.0, %v2180
        %v2182 = vpop.f32.mrb[0].mxu0
        %2183 = vdwg.mxu0
        %v2184 = vadd.f32 %v2094, %v2181
        %v2185 = vld [vmem:[#allocation5 + $0x3] sm:$0x1]
        %s2186 = scalar_lea.vmem %s9, 288
        %v2187 = vld [vmem:[%s2186] sm:$0xff]
        %v2188 = vld [vmem:[%s2186 + $0x8] sm:$0xff]
        %v2189 = vld [vmem:[%s2186 + $0x10] sm:$0xff]
        %v2190 = vld [vmem:[%s2186 + $0x18] sm:$0xff]
        %v2191 = vld [vmem:[%s2186 + $0x20] sm:$0xff]
        %v2192 = vld [vmem:[%s2186 + $0x28] sm:$0xff]
        %v2193 = vld [vmem:[%s2186 + $0x30] sm:$0xff]
        %v2194 = vld [vmem:[%s2186 + $0x38] sm:$0xff]
        %v2195 = vld [vmem:[%s2186 + $0x40] sm:$0xff]
        %v2196 = vld [vmem:[%s2186 + $0x48] sm:$0xff]
        %v2197 = vld [vmem:[%s2186 + $0x50] sm:$0xff]
        %v2198 = vld [vmem:[%s2186 + $0x58] sm:$0xff]
        %v2200 = vsel %vm1542, %v2185, 0
        %2202 = vmatprep.subr.mxu0 0.0
        %2203 = vmatpush1.msra.mxu0 %v2187
        %2204 = vmatprep.subr.mxu0 0.0
        %2205 = vmatpush1.msra.mxu0 %v2188
        %2206 = vmatprep.subr.mxu0 0.0
        %2207 = vmatpush1.msra.mxu0 %v2189
        %2208 = vmatprep.subr.mxu0 0.0
        %2209 = vmatpush1.msra.mxu0 %v2190
        %2210 = vmatprep.subr.mxu0 0.0
        %2211 = vmatpush1.msra.mxu0 %v2191
        %2212 = vmatprep.subr.mxu0 0.0
        %2213 = vmatpush1.msra.mxu0 %v2192
        %2214 = vmatprep.subr.mxu0 0.0
        %2215 = vmatpush1.msra.mxu0 %v2193
        %2216 = vmatprep.subr.mxu0 0.0
        %2217 = vmatpush1.msra.mxu0 %v2194
        %2218 = vmatprep.subr.mxu0 0.0
        %2219 = vmatpush1.msra.mxu0 %v2195
        %2220 = vmatprep.subr.mxu0 0.0
        %2221 = vmatpush1.msra.mxu0 %v2196
        %2222 = vmatprep.subr.mxu0 0.0
        %2223 = vmatpush1.msra.mxu0 %v2197
        %2224 = vmatprep.subr.mxu0 0.0
        %2225 = vmatpush1.msra.mxu0 %v2198
        %2226 = vmatprep.subr.mxu0 0.0
        %2227 = vmatpush1.msra.mxu0 0.0
        %2228 = vmatprep.subr.mxu0 0.0
        %2229 = vmatpush1.msra.mxu0 0.0
        %2230 = vmatprep.subr.mxu0 0.0
        %2231 = vmatpush1.msra.mxu0 0.0
        %2232 = vmatprep.subr.mxu0 0.0
        %2233 = vmatpush1.msra.mxu0 0.0
        %2234 = vmatprep.subr.mxu0 0.0
        %2235 = vmatpush1.msra.mxu0 0.0
        %2236 = vmatprep.subr.mxu0 0.0
        %2237 = vmatpush1.msra.mxu0 0.0
        %2238 = vmatprep.subr.mxu0 0.0
        %2239 = vmatpush1.msra.mxu0 0.0
        %2240 = vmatprep.subr.mxu0 0.0
        %2241 = vmatpush1.msra.mxu0 0.0
        %2242 = vmatprep.subr.mxu0 0.0
        %2243 = vmatpush1.msra.mxu0 0.0
        %2244 = vmatprep.subr.mxu0 0.0
        %2245 = vmatpush1.msra.mxu0 0.0
        %2246 = vmatprep.subr.mxu0 0.0
        %2247 = vmatpush1.msra.mxu0 0.0
        %2248 = vmatprep.subr.mxu0 0.0
        %2249 = vmatpush1.msra.mxu0 0.0
        %2250 = vmatprep.subr.mxu0 0.0
        %2251 = vmatpush1.msra.mxu0 0.0
        %2252 = vmatprep.subr.mxu0 0.0
        %2253 = vmatpush1.msra.mxu0 0.0
        %2254 = vmatprep.subr.mxu0 0.0
        %2255 = vmatpush1.msra.mxu0 0.0
        %2256 = vmatprep.subr.mxu0 0.0
        %2257 = vmatpush1.msra.mxu0 0.0
        %2258 = vmatprep.subr.mxu0 0.0
        %2259 = vmatpush1.msra.mxu0 0.0
        %2260 = vmatprep.subr.mxu0 0.0
        %2261 = vmatpush1.msra.mxu0 0.0
        %2262 = vmatprep.subr.mxu0 0.0
        %2263 = vmatpush1.msra.mxu0 0.0
        %2264 = vmatprep.subr.mxu0 0.0
        %2265 = vmatpush1.msra.mxu0 0.0
        %2266 = vmatprep.mubr.f32.mxu0 0.0
        %2267 = vmatmul.mubr.f32.gmra.mrb[0].mxu0 %v2200
        %v2268 = vpop.f32.mrb[0].mxu0
        %v2269 = vadd.f32 0.0, %v2268
        %v2270 = vpop.f32.mrb[0].mxu0
        %2271 = vdwg.mxu0
        %v2272 = vadd.f32 %v2184, %v2269
        %v2273 = vld [vmem:[#allocation5 + $0x4] sm:$0x1]
        %s2274 = scalar_lea.vmem %s9, 384
        %v2275 = vld [vmem:[%s2274] sm:$0xff]
        %v2276 = vld [vmem:[%s2274 + $0x8] sm:$0xff]
        %v2277 = vld [vmem:[%s2274 + $0x10] sm:$0xff]
        %v2278 = vld [vmem:[%s2274 + $0x18] sm:$0xff]
        %v2279 = vld [vmem:[%s2274 + $0x20] sm:$0xff]
        %v2280 = vld [vmem:[%s2274 + $0x28] sm:$0xff]
        %v2281 = vld [vmem:[%s2274 + $0x30] sm:$0xff]
        %v2282 = vld [vmem:[%s2274 + $0x38] sm:$0xff]
        %v2283 = vld [vmem:[%s2274 + $0x40] sm:$0xff]
        %v2284 = vld [vmem:[%s2274 + $0x48] sm:$0xff]
        %v2285 = vld [vmem:[%s2274 + $0x50] sm:$0xff]
        %v2286 = vld [vmem:[%s2274 + $0x58] sm:$0xff]
        %v2288 = vsel %vm1542, %v2273, 0
        %2290 = vmatprep.subr.mxu0 0.0
        %2291 = vmatpush1.msra.mxu0 %v2275
        %2292 = vmatprep.subr.mxu0 0.0
        %2293 = vmatpush1.msra.mxu0 %v2276
        %2294 = vmatprep.subr.mxu0 0.0
        %2295 = vmatpush1.msra.mxu0 %v2277
        %2296 = vmatprep.subr.mxu0 0.0
        %2297 = vmatpush1.msra.mxu0 %v2278
        %2298 = vmatprep.subr.mxu0 0.0
        %2299 = vmatpush1.msra.mxu0 %v2279
        %2300 = vmatprep.subr.mxu0 0.0
        %2301 = vmatpush1.msra.mxu0 %v2280
        %2302 = vmatprep.subr.mxu0 0.0
        %2303 = vmatpush1.msra.mxu0 %v2281
        %2304 = vmatprep.subr.mxu0 0.0
        %2305 = vmatpush1.msra.mxu0 %v2282
        %2306 = vmatprep.subr.mxu0 0.0
        %2307 = vmatpush1.msra.mxu0 %v2283
        %2308 = vmatprep.subr.mxu0 0.0
        %2309 = vmatpush1.msra.mxu0 %v2284
        %2310 = vmatprep.subr.mxu0 0.0
        %2311 = vmatpush1.msra.mxu0 %v2285
        %2312 = vmatprep.subr.mxu0 0.0
        %2313 = vmatpush1.msra.mxu0 %v2286
        %2314 = vmatprep.subr.mxu0 0.0
        %2315 = vmatpush1.msra.mxu0 0.0
        %2316 = vmatprep.subr.mxu0 0.0
        %2317 = vmatpush1.msra.mxu0 0.0
        %2318 = vmatprep.subr.mxu0 0.0
        %2319 = vmatpush1.msra.mxu0 0.0
        %2320 = vmatprep.subr.mxu0 0.0
        %2321 = vmatpush1.msra.mxu0 0.0
        %2322 = vmatprep.subr.mxu0 0.0
        %2323 = vmatpush1.msra.mxu0 0.0
        %2324 = vmatprep.subr.mxu0 0.0
        %2325 = vmatpush1.msra.mxu0 0.0
        %2326 = vmatprep.subr.mxu0 0.0
        %2327 = vmatpush1.msra.mxu0 0.0
        %2328 = vmatprep.subr.mxu0 0.0
        %2329 = vmatpush1.msra.mxu0 0.0
        %2330 = vmatprep.subr.mxu0 0.0
        %2331 = vmatpush1.msra.mxu0 0.0
        %2332 = vmatprep.subr.mxu0 0.0
        %2333 = vmatpush1.msra.mxu0 0.0
        %2334 = vmatprep.subr.mxu0 0.0
        %2335 = vmatpush1.msra.mxu0 0.0
        %2336 = vmatprep.subr.mxu0 0.0
        %2337 = vmatpush1.msra.mxu0 0.0
        %2338 = vmatprep.subr.mxu0 0.0
        %2339 = vmatpush1.msra.mxu0 0.0
        %2340 = vmatprep.subr.mxu0 0.0
        %2341 = vmatpush1.msra.mxu0 0.0
        %2342 = vmatprep.subr.mxu0 0.0
        %2343 = vmatpush1.msra.mxu0 0.0
        %2344 = vmatprep.subr.mxu0 0.0
        %2345 = vmatpush1.msra.mxu0 0.0
        %2346 = vmatprep.subr.mxu0 0.0
        %2347 = vmatpush1.msra.mxu0 0.0
        %2348 = vmatprep.subr.mxu0 0.0
        %2349 = vmatpush1.msra.mxu0 0.0
        %2350 = vmatprep.subr.mxu0 0.0
        %2351 = vmatpush1.msra.mxu0 0.0
        %2352 = vmatprep.subr.mxu0 0.0
        %2353 = vmatpush1.msra.mxu0 0.0
        %2354 = vmatprep.mubr.f32.mxu0 0.0
        %2355 = vmatmul.mubr.f32.gmra.mrb[0].mxu0 %v2288
        %v2356 = vpop.f32.mrb[0].mxu0
        %v2357 = vadd.f32 0.0, %v2356
        %v2358 = vpop.f32.mrb[0].mxu0
        %2359 = vdwg.mxu0
        %v2360 = vadd.f32 %v2272, %v2357
        %v2361 = vld [vmem:[#allocation5 + $0x5] sm:$0x1]
        %s2362 = scalar_lea.vmem %s9, 480
        %v2363 = vld [vmem:[%s2362] sm:$0xff]
        %v2364 = vld [vmem:[%s2362 + $0x8] sm:$0xff]
        %v2365 = vld [vmem:[%s2362 + $0x10] sm:$0xff]
        %v2366 = vld [vmem:[%s2362 + $0x18] sm:$0xff]
        %v2367 = vld [vmem:[%s2362 + $0x20] sm:$0xff]
        %v2368 = vld [vmem:[%s2362 + $0x28] sm:$0xff]
        %v2369 = vld [vmem:[%s2362 + $0x30] sm:$0xff]
        %v2370 = vld [vmem:[%s2362 + $0x38] sm:$0xff]
        %v2371 = vld [vmem:[%s2362 + $0x40] sm:$0xff]
        %v2372 = vld [vmem:[%s2362 + $0x48] sm:$0xff]
        %v2373 = vld [vmem:[%s2362 + $0x50] sm:$0xff]
        %v2374 = vld [vmem:[%s2362 + $0x58] sm:$0xff]
        %v2376 = vsel %vm1542, %v2361, 0
        %2378 = vmatprep.subr.mxu0 0.0
        %2379 = vmatpush1.msra.mxu0 %v2363
        %2380 = vmatprep.subr.mxu0 0.0
        %2381 = vmatpush1.msra.mxu0 %v2364
        %2382 = vmatprep.subr.mxu0 0.0
        %2383 = vmatpush1.msra.mxu0 %v2365
        %2384 = vmatprep.subr.mxu0 0.0
        %2385 = vmatpush1.msra.mxu0 %v2366
        %2386 = vmatprep.subr.mxu0 0.0
        %2387 = vmatpush1.msra.mxu0 %v2367
        %2388 = vmatprep.subr.mxu0 0.0
        %2389 = vmatpush1.msra.mxu0 %v2368
        %2390 = vmatprep.subr.mxu0 0.0
        %2391 = vmatpush1.msra.mxu0 %v2369
        %2392 = vmatprep.subr.mxu0 0.0
        %2393 = vmatpush1.msra.mxu0 %v2370
        %2394 = vmatprep.subr.mxu0 0.0
        %2395 = vmatpush1.msra.mxu0 %v2371
        %2396 = vmatprep.subr.mxu0 0.0
        %2397 = vmatpush1.msra.mxu0 %v2372
        %2398 = vmatprep.subr.mxu0 0.0
        %2399 = vmatpush1.msra.mxu0 %v2373
        %2400 = vmatprep.subr.mxu0 0.0
        %2401 = vmatpush1.msra.mxu0 %v2374
        %2402 = vmatprep.subr.mxu0 0.0
        %2403 = vmatpush1.msra.mxu0 0.0
        %2404 = vmatprep.subr.mxu0 0.0
        %2405 = vmatpush1.msra.mxu0 0.0
        %2406 = vmatprep.subr.mxu0 0.0
        %2407 = vmatpush1.msra.mxu0 0.0
        %2408 = vmatprep.subr.mxu0 0.0
        %2409 = vmatpush1.msra.mxu0 0.0
        %2410 = vmatprep.subr.mxu0 0.0
        %2411 = vmatpush1.msra.mxu0 0.0
        %2412 = vmatprep.subr.mxu0 0.0
        %2413 = vmatpush1.msra.mxu0 0.0
        %2414 = vmatprep.subr.mxu0 0.0
        %2415 = vmatpush1.msra.mxu0 0.0
        %2416 = vmatprep.subr.mxu0 0.0
        %2417 = vmatpush1.msra.mxu0 0.0
        %2418 = vmatprep.subr.mxu0 0.0
        %2419 = vmatpush1.msra.mxu0 0.0
        %2420 = vmatprep.subr.mxu0 0.0
        %2421 = vmatpush1.msra.mxu0 0.0
        %2422 = vmatprep.subr.mxu0 0.0
        %2423 = vmatpush1.msra.mxu0 0.0
        %2424 = vmatprep.subr.mxu0 0.0
        %2425 = vmatpush1.msra.mxu0 0.0
        %2426 = vmatprep.subr.mxu0 0.0
        %2427 = vmatpush1.msra.mxu0 0.0
        %2428 = vmatprep.subr.mxu0 0.0
        %2429 = vmatpush1.msra.mxu0 0.0
        %2430 = vmatprep.subr.mxu0 0.0
        %2431 = vmatpush1.msra.mxu0 0.0
        %2432 = vmatprep.subr.mxu0 0.0
        %2433 = vmatpush1.msra.mxu0 0.0
        %2434 = vmatprep.subr.mxu0 0.0
        %2435 = vmatpush1.msra.mxu0 0.0
        %2436 = vmatprep.subr.mxu0 0.0
        %2437 = vmatpush1.msra.mxu0 0.0
        %2438 = vmatprep.subr.mxu0 0.0
        %2439 = vmatpush1.msra.mxu0 0.0
        %2440 = vmatprep.subr.mxu0 0.0
        %2441 = vmatpush1.msra.mxu0 0.0
        %2442 = vmatprep.mubr.f32.mxu0 0.0
        %2443 = vmatmul.mubr.f32.gmra.mrb[0].mxu0 %v2376
        %v2444 = vpop.f32.mrb[0].mxu0
        %v2445 = vadd.f32 0.0, %v2444
        %v2446 = vpop.f32.mrb[0].mxu0
        %2447 = vdwg.mxu0
        %v2448 = vadd.f32 %v2360, %v2445
        %v2449 = vld [vmem:[#allocation5 + $0x6] sm:$0x1]
        %s2450 = scalar_lea.vmem %s9, 576
        %v2451 = vld [vmem:[%s2450] sm:$0xff]
        %v2452 = vld [vmem:[%s2450 + $0x8] sm:$0xff]
        %v2453 = vld [vmem:[%s2450 + $0x10] sm:$0xff]
        %v2454 = vld [vmem:[%s2450 + $0x18] sm:$0xff]
        %v2455 = vld [vmem:[%s2450 + $0x20] sm:$0xff]
        %v2456 = vld [vmem:[%s2450 + $0x28] sm:$0xff]
        %v2457 = vld [vmem:[%s2450 + $0x30] sm:$0xff]
        %v2458 = vld [vmem:[%s2450 + $0x38] sm:$0xff]
        %v2459 = vld [vmem:[%s2450 + $0x40] sm:$0xff]
        %v2460 = vld [vmem:[%s2450 + $0x48] sm:$0xff]
        %v2461 = vld [vmem:[%s2450 + $0x50] sm:$0xff]
        %v2462 = vld [vmem:[%s2450 + $0x58] sm:$0xff]
        %v2464 = vsel %vm1542, %v2449, 0
        %2466 = vmatprep.subr.mxu0 0.0
        %2467 = vmatpush1.msra.mxu0 %v2451
        %2468 = vmatprep.subr.mxu0 0.0
        %2469 = vmatpush1.msra.mxu0 %v2452
        %2470 = vmatprep.subr.mxu0 0.0
        %2471 = vmatpush1.msra.mxu0 %v2453
        %2472 = vmatprep.subr.mxu0 0.0
        %2473 = vmatpush1.msra.mxu0 %v2454
        %2474 = vmatprep.subr.mxu0 0.0
        %2475 = vmatpush1.msra.mxu0 %v2455
        %2476 = vmatprep.subr.mxu0 0.0
        %2477 = vmatpush1.msra.mxu0 %v2456
        %2478 = vmatprep.subr.mxu0 0.0
        %2479 = vmatpush1.msra.mxu0 %v2457
        %2480 = vmatprep.subr.mxu0 0.0
        %2481 = vmatpush1.msra.mxu0 %v2458
        %2482 = vmatprep.subr.mxu0 0.0
        %2483 = vmatpush1.msra.mxu0 %v2459
        %2484 = vmatprep.subr.mxu0 0.0
        %2485 = vmatpush1.msra.mxu0 %v2460
        %2486 = vmatprep.subr.mxu0 0.0
        %2487 = vmatpush1.msra.mxu0 %v2461
        %2488 = vmatprep.subr.mxu0 0.0
        %2489 = vmatpush1.msra.mxu0 %v2462
        %2490 = vmatprep.subr.mxu0 0.0
        %2491 = vmatpush1.msra.mxu0 0.0
        %2492 = vmatprep.subr.mxu0 0.0
        %2493 = vmatpush1.msra.mxu0 0.0
        %2494 = vmatprep.subr.mxu0 0.0
        %2495 = vmatpush1.msra.mxu0 0.0
        %2496 = vmatprep.subr.mxu0 0.0
        %2497 = vmatpush1.msra.mxu0 0.0
        %2498 = vmatprep.subr.mxu0 0.0
        %2499 = vmatpush1.msra.mxu0 0.0
        %2500 = vmatprep.subr.mxu0 0.0
        %2501 = vmatpush1.msra.mxu0 0.0
        %2502 = vmatprep.subr.mxu0 0.0
        %2503 = vmatpush1.msra.mxu0 0.0
        %2504 = vmatprep.subr.mxu0 0.0
        %2505 = vmatpush1.msra.mxu0 0.0
        %2506 = vmatprep.subr.mxu0 0.0
        %2507 = vmatpush1.msra.mxu0 0.0
        %2508 = vmatprep.subr.mxu0 0.0
        %2509 = vmatpush1.msra.mxu0 0.0
        %2510 = vmatprep.subr.mxu0 0.0
        %2511 = vmatpush1.msra.mxu0 0.0
        %2512 = vmatprep.subr.mxu0 0.0
        %2513 = vmatpush1.msra.mxu0 0.0
        %2514 = vmatprep.subr.mxu0 0.0
        %2515 = vmatpush1.msra.mxu0 0.0
        %2516 = vmatprep.subr.mxu0 0.0
        %2517 = vmatpush1.msra.mxu0 0.0
        %2518 = vmatprep.subr.mxu0 0.0
        %2519 = vmatpush1.msra.mxu0 0.0
        %2520 = vmatprep.subr.mxu0 0.0
        %2521 = vmatpush1.msra.mxu0 0.0
        %2522 = vmatprep.subr.mxu0 0.0
        %2523 = vmatpush1.msra.mxu0 0.0
        %2524 = vmatprep.subr.mxu0 0.0
        %2525 = vmatpush1.msra.mxu0 0.0
        %2526 = vmatprep.subr.mxu0 0.0
        %2527 = vmatpush1.msra.mxu0 0.0
        %2528 = vmatprep.subr.mxu0 0.0
        %2529 = vmatpush1.msra.mxu0 0.0
        %2530 = vmatprep.mubr.f32.mxu0 0.0
        %2531 = vmatmul.mubr.f32.gmra.mrb[0].mxu0 %v2464
        %v2532 = vpop.f32.mrb[0].mxu0
        %v2533 = vadd.f32 0.0, %v2532
        %v2534 = vpop.f32.mrb[0].mxu0
        %2535 = vdwg.mxu0
        %v2536 = vadd.f32 %v2448, %v2533
        %v2537 = vld [vmem:[#allocation5 + $0x7] sm:$0x1]
        %s2538 = scalar_lea.vmem %s9, 672
        %v2539 = vld [vmem:[%s2538] sm:$0xff]
        %v2540 = vld [vmem:[%s2538 + $0x8] sm:$0xff]
        %v2541 = vld [vmem:[%s2538 + $0x10] sm:$0xff]
        %v2542 = vld [vmem:[%s2538 + $0x18] sm:$0xff]
        %v2543 = vld [vmem:[%s2538 + $0x20] sm:$0xff]
        %v2544 = vld [vmem:[%s2538 + $0x28] sm:$0xff]
        %v2545 = vld [vmem:[%s2538 + $0x30] sm:$0xff]
        %v2546 = vld [vmem:[%s2538 + $0x38] sm:$0xff]
        %v2547 = vld [vmem:[%s2538 + $0x40] sm:$0xff]
        %v2548 = vld [vmem:[%s2538 + $0x48] sm:$0xff]
        %v2549 = vld [vmem:[%s2538 + $0x50] sm:$0xff]
        %v2550 = vld [vmem:[%s2538 + $0x58] sm:$0xff]
        %v2552 = vsel %vm1542, %v2537, 0
        %2554 = vmatprep.subr.mxu0 0.0
        %2555 = vmatpush1.msra.mxu0 %v2539
        %2556 = vmatprep.subr.mxu0 0.0
        %2557 = vmatpush1.msra.mxu0 %v2540
        %2558 = vmatprep.subr.mxu0 0.0
        %2559 = vmatpush1.msra.mxu0 %v2541
        %2560 = vmatprep.subr.mxu0 0.0
        %2561 = vmatpush1.msra.mxu0 %v2542
        %2562 = vmatprep.subr.mxu0 0.0
        %2563 = vmatpush1.msra.mxu0 %v2543
        %2564 = vmatprep.subr.mxu0 0.0
        %2565 = vmatpush1.msra.mxu0 %v2544
        %2566 = vmatprep.subr.mxu0 0.0
        %2567 = vmatpush1.msra.mxu0 %v2545
        %2568 = vmatprep.subr.mxu0 0.0
        %2569 = vmatpush1.msra.mxu0 %v2546
        %2570 = vmatprep.subr.mxu0 0.0
        %2571 = vmatpush1.msra.mxu0 %v2547
        %2572 = vmatprep.subr.mxu0 0.0
        %2573 = vmatpush1.msra.mxu0 %v2548
        %2574 = vmatprep.subr.mxu0 0.0
        %2575 = vmatpush1.msra.mxu0 %v2549
        %2576 = vmatprep.subr.mxu0 0.0
        %2577 = vmatpush1.msra.mxu0 %v2550
        %2578 = vmatprep.subr.mxu0 0.0
        %2579 = vmatpush1.msra.mxu0 0.0
        %2580 = vmatprep.subr.mxu0 0.0
        %2581 = vmatpush1.msra.mxu0 0.0
        %2582 = vmatprep.subr.mxu0 0.0
        %2583 = vmatpush1.msra.mxu0 0.0
        %2584 = vmatprep.subr.mxu0 0.0
        %2585 = vmatpush1.msra.mxu0 0.0
        %2586 = vmatprep.subr.mxu0 0.0
        %2587 = vmatpush1.msra.mxu0 0.0
        %2588 = vmatprep.subr.mxu0 0.0
        %2589 = vmatpush1.msra.mxu0 0.0
        %2590 = vmatprep.subr.mxu0 0.0
        %2591 = vmatpush1.msra.mxu0 0.0
        %2592 = vmatprep.subr.mxu0 0.0
        %2593 = vmatpush1.msra.mxu0 0.0
        %2594 = vmatprep.subr.mxu0 0.0
        %2595 = vmatpush1.msra.mxu0 0.0
        %2596 = vmatprep.subr.mxu0 0.0
        %2597 = vmatpush1.msra.mxu0 0.0
        %2598 = vmatprep.subr.mxu0 0.0
        %2599 = vmatpush1.msra.mxu0 0.0
        %2600 = vmatprep.subr.mxu0 0.0
        %2601 = vmatpush1.msra.mxu0 0.0
        %2602 = vmatprep.subr.mxu0 0.0
        %2603 = vmatpush1.msra.mxu0 0.0
        %2604 = vmatprep.subr.mxu0 0.0
        %2605 = vmatpush1.msra.mxu0 0.0
        %2606 = vmatprep.subr.mxu0 0.0
        %2607 = vmatpush1.msra.mxu0 0.0
        %2608 = vmatprep.subr.mxu0 0.0
        %2609 = vmatpush1.msra.mxu0 0.0
        %2610 = vmatprep.subr.mxu0 0.0
        %2611 = vmatpush1.msra.mxu0 0.0
        %2612 = vmatprep.subr.mxu0 0.0
        %2613 = vmatpush1.msra.mxu0 0.0
        %2614 = vmatprep.subr.mxu0 0.0
        %2615 = vmatpush1.msra.mxu0 0.0
        %2616 = vmatprep.subr.mxu0 0.0
        %2617 = vmatpush1.msra.mxu0 0.0
        %2618 = vmatprep.mubr.f32.mxu0 0.0
        %2619 = vmatmul.mubr.f32.gmra.mrb[0].mxu0 %v2552
        %v2620 = vpop.f32.mrb[0].mxu0
        %v2621 = vadd.f32 0.0, %v2620
        %v2622 = vpop.f32.mrb[0].mxu0
        %2623 = vdwg.mxu0
        %v2624 = vadd.f32 %v2536, %v2621
        %v2625 = vld [vmem:[#allocation5 + $0x8] sm:$0x1]
        %s2626 = scalar_lea.vmem %s9, 768
        %v2627 = vld [vmem:[%s2626] sm:$0xff]
        %v2628 = vld [vmem:[%s2626 + $0x8] sm:$0xff]
        %v2629 = vld [vmem:[%s2626 + $0x10] sm:$0xff]
        %v2630 = vld [vmem:[%s2626 + $0x18] sm:$0xff]
        %v2631 = vld [vmem:[%s2626 + $0x20] sm:$0xff]
        %v2632 = vld [vmem:[%s2626 + $0x28] sm:$0xff]
        %v2633 = vld [vmem:[%s2626 + $0x30] sm:$0xff]
        %v2634 = vld [vmem:[%s2626 + $0x38] sm:$0xff]
        %v2635 = vld [vmem:[%s2626 + $0x40] sm:$0xff]
        %v2636 = vld [vmem:[%s2626 + $0x48] sm:$0xff]
        %v2637 = vld [vmem:[%s2626 + $0x50] sm:$0xff]
        %v2638 = vld [vmem:[%s2626 + $0x58] sm:$0xff]
        %v2640 = vsel %vm1542, %v2625, 0
        %2642 = vmatprep.subr.mxu0 0.0
        %2643 = vmatpush1.msra.mxu0 %v2627
        %2644 = vmatprep.subr.mxu0 0.0
        %2645 = vmatpush1.msra.mxu0 %v2628
        %2646 = vmatprep.subr.mxu0 0.0
        %2647 = vmatpush1.msra.mxu0 %v2629
        %2648 = vmatprep.subr.mxu0 0.0
        %2649 = vmatpush1.msra.mxu0 %v2630
        %2650 = vmatprep.subr.mxu0 0.0
        %2651 = vmatpush1.msra.mxu0 %v2631
        %2652 = vmatprep.subr.mxu0 0.0
        %2653 = vmatpush1.msra.mxu0 %v2632
        %2654 = vmatprep.subr.mxu0 0.0
        %2655 = vmatpush1.msra.mxu0 %v2633
        %2656 = vmatprep.subr.mxu0 0.0
        %2657 = vmatpush1.msra.mxu0 %v2634
        %2658 = vmatprep.subr.mxu0 0.0
        %2659 = vmatpush1.msra.mxu0 %v2635
        %2660 = vmatprep.subr.mxu0 0.0
        %2661 = vmatpush1.msra.mxu0 %v2636
        %2662 = vmatprep.subr.mxu0 0.0
        %2663 = vmatpush1.msra.mxu0 %v2637
        %2664 = vmatprep.subr.mxu0 0.0
        %2665 = vmatpush1.msra.mxu0 %v2638
        %2666 = vmatprep.subr.mxu0 0.0
        %2667 = vmatpush1.msra.mxu0 0.0
        %2668 = vmatprep.subr.mxu0 0.0
        %2669 = vmatpush1.msra.mxu0 0.0
        %2670 = vmatprep.subr.mxu0 0.0
        %2671 = vmatpush1.msra.mxu0 0.0
        %2672 = vmatprep.subr.mxu0 0.0
        %2673 = vmatpush1.msra.mxu0 0.0
        %2674 = vmatprep.subr.mxu0 0.0
        %2675 = vmatpush1.msra.mxu0 0.0
        %2676 = vmatprep.subr.mxu0 0.0
        %2677 = vmatpush1.msra.mxu0 0.0
        %2678 = vmatprep.subr.mxu0 0.0
        %2679 = vmatpush1.msra.mxu0 0.0
        %2680 = vmatprep.subr.mxu0 0.0
        %2681 = vmatpush1.msra.mxu0 0.0
        %2682 = vmatprep.subr.mxu0 0.0
        %2683 = vmatpush1.msra.mxu0 0.0
        %2684 = vmatprep.subr.mxu0 0.0
        %2685 = vmatpush1.msra.mxu0 0.0
        %2686 = vmatprep.subr.mxu0 0.0
        %2687 = vmatpush1.msra.mxu0 0.0
        %2688 = vmatprep.subr.mxu0 0.0
        %2689 = vmatpush1.msra.mxu0 0.0
        %2690 = vmatprep.subr.mxu0 0.0
        %2691 = vmatpush1.msra.mxu0 0.0
        %2692 = vmatprep.subr.mxu0 0.0
        %2693 = vmatpush1.msra.mxu0 0.0
        %2694 = vmatprep.subr.mxu0 0.0
        %2695 = vmatpush1.msra.mxu0 0.0
        %2696 = vmatprep.subr.mxu0 0.0
        %2697 = vmatpush1.msra.mxu0 0.0
        %2698 = vmatprep.subr.mxu0 0.0
        %2699 = vmatpush1.msra.mxu0 0.0
        %2700 = vmatprep.subr.mxu0 0.0
        %2701 = vmatpush1.msra.mxu0 0.0
        %2702 = vmatprep.subr.mxu0 0.0
        %2703 = vmatpush1.msra.mxu0 0.0
        %2704 = vmatprep.subr.mxu0 0.0
        %2705 = vmatpush1.msra.mxu0 0.0
        %2706 = vmatprep.mubr.f32.mxu0 0.0
        %2707 = vmatmul.mubr.f32.gmra.mrb[0].mxu0 %v2640
        %v2708 = vpop.f32.mrb[0].mxu0
        %v2709 = vadd.f32 0.0, %v2708
        %v2710 = vpop.f32.mrb[0].mxu0
        %2711 = vdwg.mxu0
        %v2712 = vadd.f32 %v2624, %v2709
        %v2713 = vld [vmem:[#allocation5 + $0x9] sm:$0x1]
        %s2714 = scalar_lea.vmem %s9, 864
        %v2715 = vld [vmem:[%s2714] sm:$0xff]
        %v2716 = vld [vmem:[%s2714 + $0x8] sm:$0xff]
        %v2717 = vld [vmem:[%s2714 + $0x10] sm:$0xff]
        %v2718 = vld [vmem:[%s2714 + $0x18] sm:$0xff]
        %v2719 = vld [vmem:[%s2714 + $0x20] sm:$0xff]
        %v2720 = vld [vmem:[%s2714 + $0x28] sm:$0xff]
        %v2721 = vld [vmem:[%s2714 + $0x30] sm:$0xff]
        %v2722 = vld [vmem:[%s2714 + $0x38] sm:$0xff]
        %v2723 = vld [vmem:[%s2714 + $0x40] sm:$0xff]
        %v2724 = vld [vmem:[%s2714 + $0x48] sm:$0xff]
        %v2725 = vld [vmem:[%s2714 + $0x50] sm:$0xff]
        %v2726 = vld [vmem:[%s2714 + $0x58] sm:$0xff]
        %v2728 = vsel %vm1542, %v2713, 0
        %2730 = vmatprep.subr.mxu0 0.0
        %2731 = vmatpush1.msra.mxu0 %v2715
        %2732 = vmatprep.subr.mxu0 0.0
        %2733 = vmatpush1.msra.mxu0 %v2716
        %2734 = vmatprep.subr.mxu0 0.0
        %2735 = vmatpush1.msra.mxu0 %v2717
        %2736 = vmatprep.subr.mxu0 0.0
        %2737 = vmatpush1.msra.mxu0 %v2718
        %2738 = vmatprep.subr.mxu0 0.0
        %2739 = vmatpush1.msra.mxu0 %v2719
        %2740 = vmatprep.subr.mxu0 0.0
        %2741 = vmatpush1.msra.mxu0 %v2720
        %2742 = vmatprep.subr.mxu0 0.0
        %2743 = vmatpush1.msra.mxu0 %v2721
        %2744 = vmatprep.subr.mxu0 0.0
        %2745 = vmatpush1.msra.mxu0 %v2722
        %2746 = vmatprep.subr.mxu0 0.0
        %2747 = vmatpush1.msra.mxu0 %v2723
        %2748 = vmatprep.subr.mxu0 0.0
        %2749 = vmatpush1.msra.mxu0 %v2724
        %2750 = vmatprep.subr.mxu0 0.0
        %2751 = vmatpush1.msra.mxu0 %v2725
        %2752 = vmatprep.subr.mxu0 0.0
        %2753 = vmatpush1.msra.mxu0 %v2726
        %2754 = vmatprep.subr.mxu0 0.0
        %2755 = vmatpush1.msra.mxu0 0.0
        %2756 = vmatprep.subr.mxu0 0.0
        %2757 = vmatpush1.msra.mxu0 0.0
        %2758 = vmatprep.subr.mxu0 0.0
        %2759 = vmatpush1.msra.mxu0 0.0
        %2760 = vmatprep.subr.mxu0 0.0
        %2761 = vmatpush1.msra.mxu0 0.0
        %2762 = vmatprep.subr.mxu0 0.0
        %2763 = vmatpush1.msra.mxu0 0.0
        %2764 = vmatprep.subr.mxu0 0.0
        %2765 = vmatpush1.msra.mxu0 0.0
        %2766 = vmatprep.subr.mxu0 0.0
        %2767 = vmatpush1.msra.mxu0 0.0
        %2768 = vmatprep.subr.mxu0 0.0
        %2769 = vmatpush1.msra.mxu0 0.0
        %2770 = vmatprep.subr.mxu0 0.0
        %2771 = vmatpush1.msra.mxu0 0.0
        %2772 = vmatprep.subr.mxu0 0.0
        %2773 = vmatpush1.msra.mxu0 0.0
        %2774 = vmatprep.subr.mxu0 0.0
        %2775 = vmatpush1.msra.mxu0 0.0
        %2776 = vmatprep.subr.mxu0 0.0
        %2777 = vmatpush1.msra.mxu0 0.0
        %2778 = vmatprep.subr.mxu0 0.0
        %2779 = vmatpush1.msra.mxu0 0.0
        %2780 = vmatprep.subr.mxu0 0.0
        %2781 = vmatpush1.msra.mxu0 0.0
        %2782 = vmatprep.subr.mxu0 0.0
        %2783 = vmatpush1.msra.mxu0 0.0
        %2784 = vmatprep.subr.mxu0 0.0
        %2785 = vmatpush1.msra.mxu0 0.0
        %2786 = vmatprep.subr.mxu0 0.0
        %2787 = vmatpush1.msra.mxu0 0.0
        %2788 = vmatprep.subr.mxu0 0.0
        %2789 = vmatpush1.msra.mxu0 0.0
        %2790 = vmatprep.subr.mxu0 0.0
        %2791 = vmatpush1.msra.mxu0 0.0
        %2792 = vmatprep.subr.mxu0 0.0
        %2793 = vmatpush1.msra.mxu0 0.0
        %2794 = vmatprep.mubr.f32.mxu0 0.0
        %2795 = vmatmul.mubr.f32.gmra.mrb[0].mxu0 %v2728
        %v2796 = vpop.f32.mrb[0].mxu0
        %v2797 = vadd.f32 0.0, %v2796
        %v2798 = vpop.f32.mrb[0].mxu0
        %2799 = vdwg.mxu0
        %v2800 = vadd.f32 %v2712, %v2797
        %v2801 = vld [vmem:[#allocation5 + $0xa] sm:$0x1]
        %s2802 = scalar_lea.vmem %s9, 960
        %v2803 = vld [vmem:[%s2802] sm:$0xff]
        %v2804 = vld [vmem:[%s2802 + $0x8] sm:$0xff]
        %v2805 = vld [vmem:[%s2802 + $0x10] sm:$0xff]
        %v2806 = vld [vmem:[%s2802 + $0x18] sm:$0xff]
        %v2807 = vld [vmem:[%s2802 + $0x20] sm:$0xff]
        %v2808 = vld [vmem:[%s2802 + $0x28] sm:$0xff]
        %v2809 = vld [vmem:[%s2802 + $0x30] sm:$0xff]
        %v2810 = vld [vmem:[%s2802 + $0x38] sm:$0xff]
        %v2811 = vld [vmem:[%s2802 + $0x40] sm:$0xff]
        %v2812 = vld [vmem:[%s2802 + $0x48] sm:$0xff]
        %v2813 = vld [vmem:[%s2802 + $0x50] sm:$0xff]
        %v2814 = vld [vmem:[%s2802 + $0x58] sm:$0xff]
        %v2816 = vsel %vm1542, %v2801, 0
        %2818 = vmatprep.subr.mxu0 0.0
        %2819 = vmatpush1.msra.mxu0 %v2803
        %2820 = vmatprep.subr.mxu0 0.0
        %2821 = vmatpush1.msra.mxu0 %v2804
        %2822 = vmatprep.subr.mxu0 0.0
        %2823 = vmatpush1.msra.mxu0 %v2805
        %2824 = vmatprep.subr.mxu0 0.0
        %2825 = vmatpush1.msra.mxu0 %v2806
        %2826 = vmatprep.subr.mxu0 0.0
        %2827 = vmatpush1.msra.mxu0 %v2807
        %2828 = vmatprep.subr.mxu0 0.0
        %2829 = vmatpush1.msra.mxu0 %v2808
        %2830 = vmatprep.subr.mxu0 0.0
        %2831 = vmatpush1.msra.mxu0 %v2809
        %2832 = vmatprep.subr.mxu0 0.0
        %2833 = vmatpush1.msra.mxu0 %v2810
        %2834 = vmatprep.subr.mxu0 0.0
        %2835 = vmatpush1.msra.mxu0 %v2811
        %2836 = vmatprep.subr.mxu0 0.0
        %2837 = vmatpush1.msra.mxu0 %v2812
        %2838 = vmatprep.subr.mxu0 0.0
        %2839 = vmatpush1.msra.mxu0 %v2813
        %2840 = vmatprep.subr.mxu0 0.0
        %2841 = vmatpush1.msra.mxu0 %v2814
        %2842 = vmatprep.subr.mxu0 0.0
        %2843 = vmatpush1.msra.mxu0 0.0
        %2844 = vmatprep.subr.mxu0 0.0
        %2845 = vmatpush1.msra.mxu0 0.0
        %2846 = vmatprep.subr.mxu0 0.0
        %2847 = vmatpush1.msra.mxu0 0.0
        %2848 = vmatprep.subr.mxu0 0.0
        %2849 = vmatpush1.msra.mxu0 0.0
        %2850 = vmatprep.subr.mxu0 0.0
        %2851 = vmatpush1.msra.mxu0 0.0
        %2852 = vmatprep.subr.mxu0 0.0
        %2853 = vmatpush1.msra.mxu0 0.0
        %2854 = vmatprep.subr.mxu0 0.0
        %2855 = vmatpush1.msra.mxu0 0.0
        %2856 = vmatprep.subr.mxu0 0.0
        %2857 = vmatpush1.msra.mxu0 0.0
        %2858 = vmatprep.subr.mxu0 0.0
        %2859 = vmatpush1.msra.mxu0 0.0
        %2860 = vmatprep.subr.mxu0 0.0
        %2861 = vmatpush1.msra.mxu0 0.0
        %2862 = vmatprep.subr.mxu0 0.0
        %2863 = vmatpush1.msra.mxu0 0.0
        %2864 = vmatprep.subr.mxu0 0.0
        %2865 = vmatpush1.msra.mxu0 0.0
        %2866 = vmatprep.subr.mxu0 0.0
        %2867 = vmatpush1.msra.mxu0 0.0
        %2868 = vmatprep.subr.mxu0 0.0
        %2869 = vmatpush1.msra.mxu0 0.0
        %2870 = vmatprep.subr.mxu0 0.0
        %2871 = vmatpush1.msra.mxu0 0.0
        %2872 = vmatprep.subr.mxu0 0.0
        %2873 = vmatpush1.msra.mxu0 0.0
        %2874 = vmatprep.subr.mxu0 0.0
        %2875 = vmatpush1.msra.mxu0 0.0
        %2876 = vmatprep.subr.mxu0 0.0
        %2877 = vmatpush1.msra.mxu0 0.0
        %2878 = vmatprep.subr.mxu0 0.0
        %2879 = vmatpush1.msra.mxu0 0.0
        %2880 = vmatprep.subr.mxu0 0.0
        %2881 = vmatpush1.msra.mxu0 0.0
        %2882 = vmatprep.mubr.f32.mxu0 0.0
        %2883 = vmatmul.mubr.f32.gmra.mrb[0].mxu0 %v2816
        %v2884 = vpop.f32.mrb[0].mxu0
        %v2885 = vadd.f32 0.0, %v2884
        %v2886 = vpop.f32.mrb[0].mxu0
        %2887 = vdwg.mxu0
        %v2888 = vadd.f32 %v2800, %v2885
        %v2889 = vld [vmem:[#allocation5 + $0xb] sm:$0x1]
        %s2890 = scalar_lea.vmem %s9, 1056
        %v2891 = vld [vmem:[%s2890] sm:$0xff]
        %v2892 = vld [vmem:[%s2890 + $0x8] sm:$0xff]
        %v2893 = vld [vmem:[%s2890 + $0x10] sm:$0xff]
        %v2894 = vld [vmem:[%s2890 + $0x18] sm:$0xff]
        %v2895 = vld [vmem:[%s2890 + $0x20] sm:$0xff]
        %v2896 = vld [vmem:[%s2890 + $0x28] sm:$0xff]
        %v2897 = vld [vmem:[%s2890 + $0x30] sm:$0xff]
        %v2898 = vld [vmem:[%s2890 + $0x38] sm:$0xff]
        %v2899 = vld [vmem:[%s2890 + $0x40] sm:$0xff]
        %v2900 = vld [vmem:[%s2890 + $0x48] sm:$0xff]
        %v2901 = vld [vmem:[%s2890 + $0x50] sm:$0xff]
        %v2902 = vld [vmem:[%s2890 + $0x58] sm:$0xff]
        %v2904 = vsel %vm1542, %v2889, 0
        %2906 = vmatprep.subr.mxu0 0.0
        %2907 = vmatpush1.msra.mxu0 %v2891
        %2908 = vmatprep.subr.mxu0 0.0
        %2909 = vmatpush1.msra.mxu0 %v2892
        %2910 = vmatprep.subr.mxu0 0.0
        %2911 = vmatpush1.msra.mxu0 %v2893
        %2912 = vmatprep.subr.mxu0 0.0
        %2913 = vmatpush1.msra.mxu0 %v2894
        %2914 = vmatprep.subr.mxu0 0.0
        %2915 = vmatpush1.msra.mxu0 %v2895
        %2916 = vmatprep.subr.mxu0 0.0
        %2917 = vmatpush1.msra.mxu0 %v2896
        %2918 = vmatprep.subr.mxu0 0.0
        %2919 = vmatpush1.msra.mxu0 %v2897
        %2920 = vmatprep.subr.mxu0 0.0
        %2921 = vmatpush1.msra.mxu0 %v2898
        %2922 = vmatprep.subr.mxu0 0.0
        %2923 = vmatpush1.msra.mxu0 %v2899
        %2924 = vmatprep.subr.mxu0 0.0
        %2925 = vmatpush1.msra.mxu0 %v2900
        %2926 = vmatprep.subr.mxu0 0.0
        %2927 = vmatpush1.msra.mxu0 %v2901
        %2928 = vmatprep.subr.mxu0 0.0
        %2929 = vmatpush1.msra.mxu0 %v2902
        %2930 = vmatprep.subr.mxu0 0.0
        %2931 = vmatpush1.msra.mxu0 0.0
        %2932 = vmatprep.subr.mxu0 0.0
        %2933 = vmatpush1.msra.mxu0 0.0
        %2934 = vmatprep.subr.mxu0 0.0
        %2935 = vmatpush1.msra.mxu0 0.0
        %2936 = vmatprep.subr.mxu0 0.0
        %2937 = vmatpush1.msra.mxu0 0.0
        %2938 = vmatprep.subr.mxu0 0.0
        %2939 = vmatpush1.msra.mxu0 0.0
        %2940 = vmatprep.subr.mxu0 0.0
        %2941 = vmatpush1.msra.mxu0 0.0
        %2942 = vmatprep.subr.mxu0 0.0
        %2943 = vmatpush1.msra.mxu0 0.0
        %2944 = vmatprep.subr.mxu0 0.0
        %2945 = vmatpush1.msra.mxu0 0.0
        %2946 = vmatprep.subr.mxu0 0.0
        %2947 = vmatpush1.msra.mxu0 0.0
        %2948 = vmatprep.subr.mxu0 0.0
        %2949 = vmatpush1.msra.mxu0 0.0
        %2950 = vmatprep.subr.mxu0 0.0
        %2951 = vmatpush1.msra.mxu0 0.0
        %2952 = vmatprep.subr.mxu0 0.0
        %2953 = vmatpush1.msra.mxu0 0.0
        %2954 = vmatprep.subr.mxu0 0.0
        %2955 = vmatpush1.msra.mxu0 0.0
        %2956 = vmatprep.subr.mxu0 0.0
        %2957 = vmatpush1.msra.mxu0 0.0
        %2958 = vmatprep.subr.mxu0 0.0
        %2959 = vmatpush1.msra.mxu0 0.0
        %2960 = vmatprep.subr.mxu0 0.0
        %2961 = vmatpush1.msra.mxu0 0.0
        %2962 = vmatprep.subr.mxu0 0.0
        %2963 = vmatpush1.msra.mxu0 0.0
        %2964 = vmatprep.subr.mxu0 0.0
        %2965 = vmatpush1.msra.mxu0 0.0
        %2966 = vmatprep.subr.mxu0 0.0
        %2967 = vmatpush1.msra.mxu0 0.0
        %2968 = vmatprep.subr.mxu0 0.0
        %2969 = vmatpush1.msra.mxu0 0.0
        %2970 = vmatprep.mubr.f32.mxu0 0.0
        %2971 = vmatmul.mubr.f32.gmra.mrb[0].mxu0 %v2904
        %v2972 = vpop.f32.mrb[0].mxu0
        %v2973 = vadd.f32 0.0, %v2972
        %v2974 = vpop.f32.mrb[0].mxu0
        %2975 = vdwg.mxu0
        %v2976 = vadd.f32 %v2888, %v2973
        %v2977 = vld [vmem:[%s10] sm:$0x1]
        %v2978 = vadd.f32 %v2976, %v2977
        %v2979 = vmax.f32 %v2978, 0.0
        %v2980 = vld [vmem:[%s11] sm:$0xff]
        %v2981 = vld [vmem:[%s11 + $0x8] sm:$0xff]
        %v2982 = vld [vmem:[%s11 + $0x10] sm:$0xff]
        %v2983 = vld [vmem:[%s11 + $0x18] sm:$0xff]
        %v2984 = vld [vmem:[%s11 + $0x20] sm:$0xff]
        %v2985 = vld [vmem:[%s11 + $0x28] sm:$0xff]
        %v2986 = vld [vmem:[%s11 + $0x30] sm:$0xff]
        %v2987 = vld [vmem:[%s11 + $0x38] sm:$0xff]
        %v2988 = vld [vmem:[%s11 + $0x40] sm:$0xff]
        %v2989 = vld [vmem:[%s11 + $0x48] sm:$0xff]
        %v2990 = vld [vmem:[%s11 + $0x50] sm:$0xff]
        %v2991 = vld [vmem:[%s11 + $0x58] sm:$0xff]
        %v2992 = vld [vmem:[%s11 + $0x60] sm:$0xff]
        %v2993 = vld [vmem:[%s11 + $0x68] sm:$0xff]
        %v2994 = vld [vmem:[%s11 + $0x70] sm:$0xff]
        %v2995 = vld [vmem:[%s11 + $0x78] sm:$0xff]
        %v2996 = vld [vmem:[%s12] sm:$0x1]
        %2997 = vmatprep.subr.mxu0 0.0
        %2998 = vmatpush1.msra.mxu0 %v2980
        %2999 = vmatprep.subr.mxu0 0.0
        %3000 = vmatpush1.msra.mxu0 %v2981
        %3001 = vmatprep.subr.mxu0 0.0
        %3002 = vmatpush1.msra.mxu0 %v2982
        %3003 = vmatprep.subr.mxu0 0.0
        %3004 = vmatpush1.msra.mxu0 %v2983
        %3005 = vmatprep.subr.mxu0 0.0
        %3006 = vmatpush1.msra.mxu0 %v2984
        %3007 = vmatprep.subr.mxu0 0.0
        %3008 = vmatpush1.msra.mxu0 %v2985
        %3009 = vmatprep.subr.mxu0 0.0
        %3010 = vmatpush1.msra.mxu0 %v2986
        %3011 = vmatprep.subr.mxu0 0.0
        %3012 = vmatpush1.msra.mxu0 %v2987
        %3013 = vmatprep.subr.mxu0 0.0
        %3014 = vmatpush1.msra.mxu0 %v2988
        %3015 = vmatprep.subr.mxu0 0.0
        %3016 = vmatpush1.msra.mxu0 %v2989
        %3017 = vmatprep.subr.mxu0 0.0
        %3018 = vmatpush1.msra.mxu0 %v2990
        %3019 = vmatprep.subr.mxu0 0.0
        %3020 = vmatpush1.msra.mxu0 %v2991
        %3021 = vmatprep.subr.mxu0 0.0
        %3022 = vmatpush1.msra.mxu0 %v2992
        %3023 = vmatprep.subr.mxu0 0.0
        %3024 = vmatpush1.msra.mxu0 %v2993
        %3025 = vmatprep.subr.mxu0 0.0
        %3026 = vmatpush1.msra.mxu0 %v2994
        %3027 = vmatprep.subr.mxu0 0.0
        %3028 = vmatpush1.msra.mxu0 %v2995
        %3029 = vmatprep.subr.mxu0 0.0
        %3030 = vmatpush1.msra.mxu0 0.0
        %3031 = vmatprep.subr.mxu0 0.0
        %3032 = vmatpush1.msra.mxu0 0.0
        %3033 = vmatprep.subr.mxu0 0.0
        %3034 = vmatpush1.msra.mxu0 0.0
        %3035 = vmatprep.subr.mxu0 0.0
        %3036 = vmatpush1.msra.mxu0 0.0
        %3037 = vmatprep.subr.mxu0 0.0
        %3038 = vmatpush1.msra.mxu0 0.0
        %3039 = vmatprep.subr.mxu0 0.0
        %3040 = vmatpush1.msra.mxu0 0.0
        %3041 = vmatprep.subr.mxu0 0.0
        %3042 = vmatpush1.msra.mxu0 0.0
        %3043 = vmatprep.subr.mxu0 0.0
        %3044 = vmatpush1.msra.mxu0 0.0
        %3045 = vmatprep.subr.mxu0 0.0
        %3046 = vmatpush1.msra.mxu0 0.0
        %3047 = vmatprep.subr.mxu0 0.0
        %3048 = vmatpush1.msra.mxu0 0.0
        %3049 = vmatprep.subr.mxu0 0.0
        %3050 = vmatpush1.msra.mxu0 0.0
        %3051 = vmatprep.subr.mxu0 0.0
        %3052 = vmatpush1.msra.mxu0 0.0
        %3053 = vmatprep.subr.mxu0 0.0
        %3054 = vmatpush1.msra.mxu0 0.0
        %3055 = vmatprep.subr.mxu0 0.0
        %3056 = vmatpush1.msra.mxu0 0.0
        %3057 = vmatprep.subr.mxu0 0.0
        %3058 = vmatpush1.msra.mxu0 0.0
        %3059 = vmatprep.subr.mxu0 0.0
        %3060 = vmatpush1.msra.mxu0 0.0
        %3061 = vmatprep.mubr.f32.mxu0 0.0
        %3062 = vmatmul.mubr.f32.gmra.mrb[0].mxu0 %v2979
        %v3063 = vpop.f32.mrb[0].mxu0
        %v3064 = vadd.f32 %v2996, %v3063
        %v3065 = vpop.f32.mrb[0].mxu0
        %3066 = vdwg.mxu0
        %3067 = vst [vmem:[%s432] sm:$0x1] %v3064
        %s3068 = sand.u32 %s313, 1
        %s3069 = scalar_lea.sflag [#allocation7], %s3068
        %s3070 = sand.u32 %s313, 1
        %s3071 = scalar_lea.vmem [#allocation6], %s3070
        // Predicated region
        $region73: #{view_embedder2_forward.1} parent=71 // pred_check
          %p3072 = pneg %p323
        $region74: #{view_embedder2_forward.1} parent=71 // pred_check_branch
          %3074 = sbr.rel (%p3072) target = $region76
        $region75: #{view_embedder2_forward.1} parent=71 // pred_region
          %s3076 = ssub.s32 16, 16
          %3077 = vsyncadd %s3069, %s3076
          %s3078 = smul.addr %s27, 16
          %s3079 = scalar_lea.hbm %s13, %s3078
          %s3081 = sshll.u32 %s3071, 4
          %s3082 = int_to_ptr.vmem [resolvable:$true] %s3081
          %3084 = dma.vmem_to_hbm [thread:$0]  %s3082, 16, %s3079, %s3069
        $region76: #{view_embedder2_forward.1} parent=71 // pred_fallthru
          _
      $region72: #{view_embedder2_forward.1} parent=5 // pred_fallthru
        _
      %p3085 = scmp.le.s32.totalorder 2, %s22
      // Predicated region
      $region77: #{view_embedder2_forward.1} parent=5 // pred_check
        %p3086 = pneg %p3085
      $region78: #{view_embedder2_forward.1} parent=5 // pred_check_branch
        %3088 = sbr.rel (%p3086) target = $region80
      $region79: #{view_embedder2_forward.1} parent=5 // pred_region
        %s3089 = ssub.s32 %s22, 2
        // Predicated region
        $region81: #{view_embedder2_forward.1} parent=79 // pred_check
          %p3090 = pneg %p329
        $region82: #{view_embedder2_forward.1} parent=79 // pred_check_branch
          %3092 = sbr.rel (%p3090) target = $region84
        $region83: #{view_embedder2_forward.1} parent=79 // pred_region
          %s3093 = sand.u32 %s314, 1
          %s3094 = scalar_lea.sflag [#allocation7], %s3093
          %s3095 = sand.u32 %s314, 1
          %s3096 = scalar_lea.vmem [#allocation6], %s3095
          %3097 = dma.done %s3094, 16
        $region84: #{view_embedder2_forward.1} parent=79 // pred_fallthru
          _
      $region80: #{view_embedder2_forward.1} parent=5 // pred_fallthru
        _
    $region6: #{view_embedder2_forward.1} parent=1 // loop_footer
      %s26 = sadd.s32 1, %s22
    $region7: #{view_embedder2_forward.1} parent=1 // loop_footer_branch
      %21 = sbr.rel target = $region3
    $region8: #{view_embedder2_forward.1} parent=1 // loop_exit
      _
    %3098 = vsyncpa [#allocation7], 1
    %s3099 = scalar_lea.sflag [#allocation7], 1
    %3100 = vsyncpa %s3099, 1

</llo_original>
